<compile_context>
chip_gen: v6e
topology: v6e:2x2x1
jax: 0.10.0
libtpu: 0.0.40
codegen_flags: <defaults>
</compile_context>

<pallas_src>
import math

import jax
import jax.numpy as jnp
from jax.experimental import pallas as pl
from jax.experimental.pallas import tpu as pltpu


# ----------------------------------------------------------------------------
# align_corners=True linear interpolation helpers (host-side, tiny).
# ----------------------------------------------------------------------------
def _interp_matrix(n_in, n_out):
    """(n_out, n_in) align_corners=True 1-D linear interpolation matrix."""
    if n_in == 1:
        return jnp.ones((n_out, 1), jnp.float32)
    src = jnp.arange(n_out, dtype=jnp.float32) * (n_in - 1) / (n_out - 1)
    lo = jnp.floor(src).astype(jnp.int32)
    hi = jnp.minimum(lo + 1, n_in - 1)
    frac = src - lo.astype(jnp.float32)
    A = jnp.zeros((n_out, n_in), jnp.float32)
    A = A.at[jnp.arange(n_out), lo].add(1.0 - frac)
    A = A.at[jnp.arange(n_out), hi].add(frac)
    return A


def _height_taps(n_in, n_out):
    """Static per-output-row (lo, hi, frac) taps, align_corners=True."""
    if n_in == 1:
        return [(0, 0, 0.0)] * n_out
    taps = []
    for y in range(n_out):
        src = y * (n_in - 1) / (n_out - 1)
        lo = min(int(math.floor(src)), n_in - 1)
        hi = min(lo + 1, n_in - 1)
        taps.append((lo, hi, float(src - lo)))
    return taps


# ----------------------------------------------------------------------------
# NM forward: f1 (N,c1,H,W), f2 (N,c2,H/2,W/2) -> (N,c,H,W)
# ----------------------------------------------------------------------------
def nm_forward(params, f1, f2):
    N, c1, H, W = f1.shape
    N2, c2, H2, W2 = f2.shape
    assert N2 == N and H == 2 * H2 and W == 2 * W2
    c = params["w1_f1"].shape[0]
    cp1 = c + 1
    HW = H * W
    H2W2 = H2 * W2

    # NCHW -> (N, C, H*W) is a free reshape (already contiguous).
    f1_flat = f1.reshape(N, c1, HW)
    f2_flat = f2.reshape(N, c2, H2W2)

    # ---- host-side exact parameter folds ----------------------------------
    # 1) mask 1x1 conv folded into the f2 1x1 conv (extra output channel).
    w_mask, b_mask = params["w_mask"], params["b_mask"]
    w1f2e = jnp.concatenate([params["w1_f2"], w_mask @ params["w1_f2"]], axis=0)
    b1f2e = jnp.concatenate(
        [params["b1_f2"], w_mask @ params["b1_f2"] + b_mask], axis=0)
    # 2) eval-mode BN scale folded into the 3x3 conv weights.
    wcat = params["w_cat"] * params["bn_scale"].reshape(1, 1, c, 1)
    shift = params["bn_shift"]

    # Separable upsample operators (small: (W2,W) matrix + H python taps).
    awT = _interp_matrix(W2, W).T            # (W2, W)
    h_taps = _height_taps(H2, H)

    # Padded flat-scratch geometry (halo padding done inside the kernel).
    off5 = 2 * W + 2
    L5 = (H + 4) * W + 4                     # 5x5 edge filter, pad=2
    off3 = W + 1
    L3 = (H + 2) * W + 2                     # 3x3 cat conv, pad=1

    def kernel(f1_ref, f2_ref, awT_ref, w1f1_ref, b1f1_ref, w1f2e_ref,
               b1f2e_ref, wcat_ref, sh_ref, o_ref,
               f2up_ref, pad5_ref, pad3_ref):
        f32 = jnp.float32

        # ---- 1x1 convs (channel mixing): (Cout,Cin) @ (Cin,HW) on the MXU --
        f1_c = jnp.dot(w1f1_ref[...], f1_ref[0],
                       preferred_element_type=f32) + b1f1_ref[...]
        # f2 1x1 conv; row c is the folded mask channel.
        f2s = jnp.dot(w1f2e_ref[...], f2_ref[0],
                      preferred_element_type=f32) + b1f2e_ref[...]

        # ---- separable bilinear 2x upsample (align_corners=True) -----------
        # width: one (cp1,W2)@(W2,W) matmul per low-res row
        awTv = awT_ref[...]
        mid = [jnp.dot(f2s[:, r * W2:(r + 1) * W2], awTv,
                       preferred_element_type=f32) for r in range(H2)]
        # height: each output row is a static 2-tap blend of mid rows
        for y in range(H):
            lo, hi, fr = h_taps[y]
            if fr == 0.0 or lo == hi:
                row = mid[lo]
            else:
                row = (1.0 - fr) * mid[lo] + fr * mid[hi]
            f2up_ref[:, y * W:(y + 1) * W] = row
        f2_c = f2up_ref[0:c, :]                 # (c, HW)
        f2_mask = f2up_ref[c:c + 1, :]          # (1, HW)

        # Lane-validity masks for horizontal (dx) shifts of the flat spatial.
        xx = jax.lax.broadcasted_iota(jnp.int32, (1, HW), 1) % W
        m_l1 = xx >= 1
        m_l2 = xx >= 2
        m_r1 = xx < (W - 1)
        m_r2 = xx < (W - 2)

        # ---- Extract_edges: fixed 5x5 (ones, center -24) == box5 - 25*x ----
        # Separable box filter; "same" zero padding via the scratch halo.
        # Only the small halos are zeroed (interior is fully overwritten);
        # zeroed every step so a megacore split of the batch axis (per-core
        # scratch) stays correct.
        pad5_ref[:, 0:off5] = jnp.zeros((c, off5), f32)
        pad5_ref[:, off5 + HW:L5] = jnp.zeros((c, L5 - off5 - HW), f32)

        pad5_ref[:, off5:off5 + HW] = f1_c          # pass 1 input
        hsum = (f1_c
                + jnp.where(m_l2, pad5_ref[:, off5 - 2:off5 - 2 + HW], 0.0)
                + jnp.where(m_l1, pad5_ref[:, off5 - 1:off5 - 1 + HW], 0.0)
                + jnp.where(m_r1, pad5_ref[:, off5 + 1:off5 + 1 + HW], 0.0)
                + jnp.where(m_r2, pad5_ref[:, off5 + 2:off5 + 2 + HW], 0.0))
        pad5_ref[:, off5:off5 + HW] = hsum          # pass 2 input (reuse)
        box = (hsum
               + pad5_ref[:, off5 - 2 * W:off5 - 2 * W + HW]
               + pad5_ref[:, off5 - W:off5 - W + HW]
               + pad5_ref[:, off5 + W:off5 + W + HW]
               + pad5_ref[:, off5 + 2 * W:off5 + 2 * W + HW])

        f1_edge = (box - 25.0 * f1_c) * f2_mask     # (1,HW) mask broadcast
        f_enh = f1_edge + f2_c                      # fused residual add

        # ---- cbl_cat: 3x3 conv over concat([f_enh, f1_c, f2_c]) + BN + LReLU
        # Concat fused: channel-stack straight into the padded VMEM scratch.
        pad3_ref[:, 0:off3] = jnp.zeros((3 * c, off3), f32)
        pad3_ref[:, off3 + HW:L3] = jnp.zeros((3 * c, L3 - off3 - HW), f32)
        pad3_ref[0 * c:1 * c, off3:off3 + HW] = f_enh
        pad3_ref[1 * c:2 * c, off3:off3 + HW] = f1_c
        pad3_ref[2 * c:3 * c, off3:off3 + HW] = f2_c

        acc = jnp.zeros((c, HW), f32)
        for ky in range(3):
            for kx in range(3):
                dy, dx = ky - 1, kx - 1
                d = off3 + dy * W + dx
                patch = pad3_ref[:, d:d + HW]       # (3c, HW) shifted tap
                if dx == -1:
                    patch = jnp.where(m_l1, patch, 0.0)
                elif dx == 1:
                    patch = jnp.where(m_r1, patch, 0.0)
                acc = acc + jnp.dot(wcat_ref[ky, kx], patch,
                                    preferred_element_type=f32)
        y_out = acc + sh_ref[...]                   # BN scale folded into wcat
        y_out = jnp.where(y_out >= 0.0, y_out, 0.01 * y_out)   # LeakyReLU
        o_ref[0] = y_out.astype(o_ref.dtype)        # lane-dense store

    out = pl.pallas_call(
        kernel,
        out_shape=jax.ShapeDtypeStruct((N, c, HW), jnp.float32),
        grid=(N,),
        in_specs=[
            pl.BlockSpec((1, c1, HW), lambda n: (n, 0, 0)),
            pl.BlockSpec((1, c2, H2W2), lambda n: (n, 0, 0)),
            pl.BlockSpec((W2, W), lambda n: (0, 0)),
            pl.BlockSpec((c, c1), lambda n: (0, 0)),
            pl.BlockSpec((c, 1), lambda n: (0, 0)),
            pl.BlockSpec((cp1, c2), lambda n: (0, 0)),
            pl.BlockSpec((cp1, 1), lambda n: (0, 0)),
            pl.BlockSpec((3, 3, c, 3 * c), lambda n: (0, 0, 0, 0)),
            pl.BlockSpec((c, 1), lambda n: (0, 0)),
        ],
        out_specs=pl.BlockSpec((1, c, HW), lambda n: (n, 0, 0)),
        scratch_shapes=[
            pltpu.VMEM((cp1, HW), jnp.float32),     # upsampled f2 (+ mask row)
            pltpu.VMEM((c, L5), jnp.float32),       # 5x5 box halo scratch
            pltpu.VMEM((3 * c, L3), jnp.float32),   # 3x3 cat-conv halo scratch
        ],
        compiler_params=pltpu.CompilerParams(
            dimension_semantics=("parallel",)),
    )(f1_flat, f2_flat, awT, params["w1_f1"], params["b1_f1"],
      w1f2e, b1f2e, wcat, shift)
    return out.reshape(N, c, H, W)


# ----------------------------------------------------------------------------
# Deterministic synthetic parameters (BN folded for eval mode).
# ----------------------------------------------------------------------------
def init_nm_params(key, c1, c2, c):
    ks = jax.random.split(key, 12)

    def rnd(k, shape):
        return 0.1 * jax.random.normal(k, shape, jnp.float32)

    eps = 1e-5
    gamma = 1.0 + 0.1 * jax.random.normal(ks[7], (c,), jnp.float32)
    beta = rnd(ks[8], (c,))
    mean = rnd(ks[9], (c,))
    var = 1.0 + 0.1 * jnp.abs(jax.random.normal(ks[10], (c,), jnp.float32))
    scale = gamma / jnp.sqrt(var + eps)
    shift = beta - mean * scale
    return {
        # nn.Conv2d(c1, c, 1): weight (Cout, Cin), bias (Cout, 1)
        "w1_f1": rnd(ks[0], (c, c1)),
        "b1_f1": rnd(ks[1], (c, 1)),
        # nn.Conv2d(c2, c, 1)
        "w1_f2": rnd(ks[2], (c, c2)),
        "b1_f2": rnd(ks[3], (c, 1)),
        # nn.Conv2d(c, 1, 1)
        "w_mask": rnd(ks[4], (1, c)),
        "b_mask": rnd(ks[5], (1, 1)),
        # ConvBNReLU(3c, c, 3): conv weight stored as (K, K, Cout, Cin)
        # (== PyTorch (Cout, Cin, K, K).transpose(2, 3, 0, 1)); bias-free, BN folded.
        "w_cat": rnd(ks[6], (3, 3, c, 3 * c)),
        "bn_scale": scale.reshape(c, 1),
        "bn_shift": shift.reshape(c, 1),
        # NOTE: cbl_add / cbl_mul exist in the PyTorch module but are unused in
        # NM.forward(), so no parameters are created for them.
    }


# ----------------------------------------------------------------------------
if __name__ == "__main__":
    key = jax.random.PRNGKey(0)
    c1, c2, c = 4, 8, 8
    N, H, W = 2, 16, 16          # f1 spatial; f2 is at half resolution

    kp, k1, k2 = jax.random.split(key, 3)
    params = init_nm_params(kp, c1, c2, c)
    f1 = jax.random.normal(k1, (N, c1, H, W), jnp.float32)
    f2 = jax.random.normal(k2, (N, c2, H // 2, W // 2), jnp.float32)

    out = nm_forward(params, f1, f2)
    out = jax.block_until_ready(out)
    assert out.shape == (N, c, H, W), out.shape
    print("KERNEL_OK")
</pallas_src>

<mosaic_0001>
module attributes {stable_mosaic.version = 11 : i64} {
  func.func @kernel(%arg0: i32, %arg1: memref<1x4x256xf32, #tpu.memory_space<vmem>>, %arg2: memref<1x8x64xf32, #tpu.memory_space<vmem>>, %arg3: memref<8x16xf32, #tpu.memory_space<vmem>>, %arg4: memref<8x4xf32, #tpu.memory_space<vmem>>, %arg5: memref<8x1xf32, #tpu.memory_space<vmem>>, %arg6: memref<9x8xf32, #tpu.memory_space<vmem>>, %arg7: memref<9x1xf32, #tpu.memory_space<vmem>>, %arg8: memref<3x3x8x24xf32, #tpu.memory_space<vmem>>, %arg9: memref<8x1xf32, #tpu.memory_space<vmem>>, %arg10: memref<1x8x256xf32, #tpu.memory_space<vmem>>, %arg11: memref<9x256xf32, #tpu.memory_space<vmem>>, %arg12: memref<8x324xf32, #tpu.memory_space<vmem>>, %arg13: memref<24x290xf32, #tpu.memory_space<vmem>>) attributes {dimension_semantics = [#tpu.dimension_semantics<parallel>], iteration_bounds = array<i64: 2>, scalar_prefetch = 0 : i64, scratch_operands = 3 : i64, tpu.core_type = #tpu.core_type<tc>, window_params = [{transform_indices = @transform_0, window_bounds = array<i64: 1, 4, 256>}, {transform_indices = @transform_1, window_bounds = array<i64: 1, 8, 64>}, {pipeline_mode = #tpu.pipeline_mode<synchronous>, transform_indices = @transform_2, window_bounds = array<i64: 8, 16>}, {pipeline_mode = #tpu.pipeline_mode<synchronous>, transform_indices = @transform_3, window_bounds = array<i64: 8, 4>}, {pipeline_mode = #tpu.pipeline_mode<synchronous>, transform_indices = @transform_4, window_bounds = array<i64: 8, 1>}, {pipeline_mode = #tpu.pipeline_mode<synchronous>, transform_indices = @transform_5, window_bounds = array<i64: 9, 8>}, {pipeline_mode = #tpu.pipeline_mode<synchronous>, transform_indices = @transform_6, window_bounds = array<i64: 9, 1>}, {pipeline_mode = #tpu.pipeline_mode<synchronous>, transform_indices = @transform_7, window_bounds = array<i64: 3, 3, 8, 24>}, {pipeline_mode = #tpu.pipeline_mode<synchronous>, transform_indices = @transform_8, window_bounds = array<i64: 8, 1>}, {transform_indices = @transform_9, window_bounds = array<i64: 1, 8, 256>}]} {
    %c0 = arith.constant 0 : index
    %c0_0 = arith.constant 0 : index
    %0 = vector.load %arg4[%c0, %c0_0] : memref<8x4xf32, #tpu.memory_space<vmem>>, vector<8x4xf32>
    %c0_1 = arith.constant 0 : index
    %c0_2 = arith.constant 0 : index
    %c0_3 = arith.constant 0 : index
    %1 = vector.load %arg1[%c0_1, %c0_2, %c0_3] : memref<1x4x256xf32, #tpu.memory_space<vmem>>, vector<1x4x256xf32>
    %2 = vector.shape_cast %1 : vector<1x4x256xf32> to vector<4x256xf32>
    %cst = arith.constant dense<0.000000e+00> : vector<8x256xf32>
    %3 = tpu.matmul %0, %2, %cst {dimension_numbers = #tpu.dot_dimension_numbers<[1], [0], [0], [1], [0, 0, 1, 1], [], []>} : vector<8x4xf32>, vector<4x256xf32>, vector<8x256xf32> -> vector<8x256xf32>
    %c0_4 = arith.constant 0 : index
    %c0_5 = arith.constant 0 : index
    %4 = vector.load %arg5[%c0_4, %c0_5] : memref<8x1xf32, #tpu.memory_space<vmem>>, vector<8x1xf32>
    %5 = vector.broadcast %4 : vector<8x1xf32> to vector<8x256xf32>
    %6 = arith.addf %3, %5 : vector<8x256xf32>
    %c0_6 = arith.constant 0 : index
    %c0_7 = arith.constant 0 : index
    %7 = vector.load %arg6[%c0_6, %c0_7] : memref<9x8xf32, #tpu.memory_space<vmem>>, vector<9x8xf32>
    %c0_8 = arith.constant 0 : index
    %c0_9 = arith.constant 0 : index
    %c0_10 = arith.constant 0 : index
    %8 = vector.load %arg2[%c0_8, %c0_9, %c0_10] : memref<1x8x64xf32, #tpu.memory_space<vmem>>, vector<1x8x64xf32>
    %9 = vector.shape_cast %8 : vector<1x8x64xf32> to vector<8x64xf32>
    %cst_11 = arith.constant dense<0.000000e+00> : vector<9x64xf32>
    %10 = tpu.matmul %7, %9, %cst_11 {dimension_numbers = #tpu.dot_dimension_numbers<[1], [0], [0], [1], [0, 0, 1, 1], [], []>} : vector<9x8xf32>, vector<8x64xf32>, vector<9x64xf32> -> vector<9x64xf32>
    %c0_12 = arith.constant 0 : index
    %c0_13 = arith.constant 0 : index
    %11 = vector.load %arg7[%c0_12, %c0_13] : memref<9x1xf32, #tpu.memory_space<vmem>>, vector<9x1xf32>
    %12 = vector.broadcast %11 : vector<9x1xf32> to vector<9x64xf32>
    %13 = arith.addf %10, %12 : vector<9x64xf32>
    %c0_14 = arith.constant 0 : index
    %c0_15 = arith.constant 0 : index
    %14 = vector.load %arg3[%c0_14, %c0_15] : memref<8x16xf32, #tpu.memory_space<vmem>>, vector<8x16xf32>
    %15 = vector.extract_strided_slice %13 {offsets = [0, 0], sizes = [9, 8], strides = [1, 1]} : vector<9x64xf32> to vector<9x8xf32>
    %cst_16 = arith.constant dense<0.000000e+00> : vector<9x16xf32>
    %16 = tpu.matmul %15, %14, %cst_16 {dimension_numbers = #tpu.dot_dimension_numbers<[1], [0], [0], [1], [0, 0, 1, 1], [], []>} : vector<9x8xf32>, vector<8x16xf32>, vector<9x16xf32> -> vector<9x16xf32>
    %17 = vector.extract_strided_slice %13 {offsets = [0, 8], sizes = [9, 8], strides = [1, 1]} : vector<9x64xf32> to vector<9x8xf32>
    %cst_17 = arith.constant dense<0.000000e+00> : vector<9x16xf32>
    %18 = tpu.matmul %17, %14, %cst_17 {dimension_numbers = #tpu.dot_dimension_numbers<[1], [0], [0], [1], [0, 0, 1, 1], [], []>} : vector<9x8xf32>, vector<8x16xf32>, vector<9x16xf32> -> vector<9x16xf32>
    %19 = vector.extract_strided_slice %13 {offsets = [0, 16], sizes = [9, 8], strides = [1, 1]} : vector<9x64xf32> to vector<9x8xf32>
    %cst_18 = arith.constant dense<0.000000e+00> : vector<9x16xf32>
    %20 = tpu.matmul %19, %14, %cst_18 {dimension_numbers = #tpu.dot_dimension_numbers<[1], [0], [0], [1], [0, 0, 1, 1], [], []>} : vector<9x8xf32>, vector<8x16xf32>, vector<9x16xf32> -> vector<9x16xf32>
    %21 = vector.extract_strided_slice %13 {offsets = [0, 24], sizes = [9, 8], strides = [1, 1]} : vector<9x64xf32> to vector<9x8xf32>
    %cst_19 = arith.constant dense<0.000000e+00> : vector<9x16xf32>
    %22 = tpu.matmul %21, %14, %cst_19 {dimension_numbers = #tpu.dot_dimension_numbers<[1], [0], [0], [1], [0, 0, 1, 1], [], []>} : vector<9x8xf32>, vector<8x16xf32>, vector<9x16xf32> -> vector<9x16xf32>
    %23 = vector.extract_strided_slice %13 {offsets = [0, 32], sizes = [9, 8], strides = [1, 1]} : vector<9x64xf32> to vector<9x8xf32>
    %cst_20 = arith.constant dense<0.000000e+00> : vector<9x16xf32>
    %24 = tpu.matmul %23, %14, %cst_20 {dimension_numbers = #tpu.dot_dimension_numbers<[1], [0], [0], [1], [0, 0, 1, 1], [], []>} : vector<9x8xf32>, vector<8x16xf32>, vector<9x16xf32> -> vector<9x16xf32>
    %25 = vector.extract_strided_slice %13 {offsets = [0, 40], sizes = [9, 8], strides = [1, 1]} : vector<9x64xf32> to vector<9x8xf32>
    %cst_21 = arith.constant dense<0.000000e+00> : vector<9x16xf32>
    %26 = tpu.matmul %25, %14, %cst_21 {dimension_numbers = #tpu.dot_dimension_numbers<[1], [0], [0], [1], [0, 0, 1, 1], [], []>} : vector<9x8xf32>, vector<8x16xf32>, vector<9x16xf32> -> vector<9x16xf32>
    %27 = vector.extract_strided_slice %13 {offsets = [0, 48], sizes = [9, 8], strides = [1, 1]} : vector<9x64xf32> to vector<9x8xf32>
    %cst_22 = arith.constant dense<0.000000e+00> : vector<9x16xf32>
    %28 = tpu.matmul %27, %14, %cst_22 {dimension_numbers = #tpu.dot_dimension_numbers<[1], [0], [0], [1], [0, 0, 1, 1], [], []>} : vector<9x8xf32>, vector<8x16xf32>, vector<9x16xf32> -> vector<9x16xf32>
    %29 = vector.extract_strided_slice %13 {offsets = [0, 56], sizes = [9, 8], strides = [1, 1]} : vector<9x64xf32> to vector<9x8xf32>
    %cst_23 = arith.constant dense<0.000000e+00> : vector<9x16xf32>
    %30 = tpu.matmul %29, %14, %cst_23 {dimension_numbers = #tpu.dot_dimension_numbers<[1], [0], [0], [1], [0, 0, 1, 1], [], []>} : vector<9x8xf32>, vector<8x16xf32>, vector<9x16xf32> -> vector<9x16xf32>
    %c0_24 = arith.constant 0 : index
    %c0_25 = arith.constant 0 : index
    %31 = vector.load %arg11[%c0_24, %c0_25] : memref<9x256xf32, #tpu.memory_space<vmem>>, vector<9x16xf32>
    tpu.vector_store %arg11[%c0_24, %c0_25], %16 {strides = array<i32>} : memref<9x256xf32, #tpu.memory_space<vmem>>, vector<9x16xf32>,
    %cst_26 = arith.constant 0.533333361 : f32
    %32 = vector.broadcast %cst_26 : f32 to vector<9x16xf32>
    %33 = arith.mulf %32, %16 : vector<9x16xf32>
    %cst_27 = arith.constant 0.466666669 : f32
    %34 = vector.broadcast %cst_27 : f32 to vector<9x16xf32>
    %35 = arith.mulf %34, %18 : vector<9x16xf32>
    %36 = arith.addf %33, %35 : vector<9x16xf32>
    %c0_28 = arith.constant 0 : index
    %c16 = arith.constant 16 : index
    %37 = vector.load %arg11[%c0_28, %c16] : memref<9x256xf32, #tpu.memory_space<vmem>>, vector<9x16xf32>
    tpu.vector_store %arg11[%c0_28, %c16], %36 {strides = array<i32>} : memref<9x256xf32, #tpu.memory_space<vmem>>, vector<9x16xf32>,
    %cst_29 = arith.constant 0.0666666701 : f32
    %38 = vector.broadcast %cst_29 : f32 to vector<9x16xf32>
    %39 = arith.mulf %38, %16 : vector<9x16xf32>
    %cst_30 = arith.constant 0.933333337 : f32
    %40 = vector.broadcast %cst_30 : f32 to vector<9x16xf32>
    %41 = arith.mulf %40, %18 : vector<9x16xf32>
    %42 = arith.addf %39, %41 : vector<9x16xf32>
    %c0_31 = arith.constant 0 : index
    %c32 = arith.constant 32 : index
    %43 = vector.load %arg11[%c0_31, %c32] : memref<9x256xf32, #tpu.memory_space<vmem>>, vector<9x16xf32>
    tpu.vector_store %arg11[%c0_31, %c32], %42 {strides = array<i32>} : memref<9x256xf32, #tpu.memory_space<vmem>>, vector<9x16xf32>,
    %cst_32 = arith.constant 6.000000e-01 : f32
    %44 = vector.broadcast %cst_32 : f32 to vector<9x16xf32>
    %45 = arith.mulf %44, %18 : vector<9x16xf32>
    %cst_33 = arith.constant 4.000000e-01 : f32
    %46 = vector.broadcast %cst_33 : f32 to vector<9x16xf32>
    %47 = arith.mulf %46, %20 : vector<9x16xf32>
    %48 = arith.addf %45, %47 : vector<9x16xf32>
    %c0_34 = arith.constant 0 : index
    %c48 = arith.constant 48 : index
    %49 = vector.load %arg11[%c0_34, %c48] : memref<9x256xf32, #tpu.memory_space<vmem>>, vector<9x16xf32>
    tpu.vector_store %arg11[%c0_34, %c48], %48 {strides = array<i32>} : memref<9x256xf32, #tpu.memory_space<vmem>>, vector<9x16xf32>,
    %cst_35 = arith.constant 0.13333334 : f32
    %50 = vector.broadcast %cst_35 : f32 to vector<9x16xf32>
    %51 = arith.mulf %50, %18 : vector<9x16xf32>
    %cst_36 = arith.constant 0.866666674 : f32
    %52 = vector.broadcast %cst_36 : f32 to vector<9x16xf32>
    %53 = arith.mulf %52, %20 : vector<9x16xf32>
    %54 = arith.addf %51, %53 : vector<9x16xf32>
    %c0_37 = arith.constant 0 : index
    %c64 = arith.constant 64 : index
    %55 = vector.load %arg11[%c0_37, %c64] : memref<9x256xf32, #tpu.memory_space<vmem>>, vector<9x16xf32>
    tpu.vector_store %arg11[%c0_37, %c64], %54 {strides = array<i32>} : memref<9x256xf32, #tpu.memory_space<vmem>>, vector<9x16xf32>,
    %cst_38 = arith.constant 0.666666686 : f32
    %56 = vector.broadcast %cst_38 : f32 to vector<9x16xf32>
    %57 = arith.mulf %56, %20 : vector<9x16xf32>
    %cst_39 = arith.constant 0.333333343 : f32
    %58 = vector.broadcast %cst_39 : f32 to vector<9x16xf32>
    %59 = arith.mulf %58, %22 : vector<9x16xf32>
    %60 = arith.addf %57, %59 : vector<9x16xf32>
    %c0_40 = arith.constant 0 : index
    %c80 = arith.constant 80 : index
    %61 = vector.load %arg11[%c0_40, %c80] : memref<9x256xf32, #tpu.memory_space<vmem>>, vector<9x16xf32>
    tpu.vector_store %arg11[%c0_40, %c80], %60 {strides = array<i32>} : memref<9x256xf32, #tpu.memory_space<vmem>>, vector<9x16xf32>,
    %cst_41 = arith.constant 2.000000e-01 : f32
    %62 = vector.broadcast %cst_41 : f32 to vector<9x16xf32>
    %63 = arith.mulf %62, %20 : vector<9x16xf32>
    %cst_42 = arith.constant 8.000000e-01 : f32
    %64 = vector.broadcast %cst_42 : f32 to vector<9x16xf32>
    %65 = arith.mulf %64, %22 : vector<9x16xf32>
    %66 = arith.addf %63, %65 : vector<9x16xf32>
    %c0_43 = arith.constant 0 : index
    %c96 = arith.constant 96 : index
    %67 = vector.load %arg11[%c0_43, %c96] : memref<9x256xf32, #tpu.memory_space<vmem>>, vector<9x16xf32>
    tpu.vector_store %arg11[%c0_43, %c96], %66 {strides = array<i32>} : memref<9x256xf32, #tpu.memory_space<vmem>>, vector<9x16xf32>,
    %cst_44 = arith.constant 0.733333349 : f32
    %68 = vector.broadcast %cst_44 : f32 to vector<9x16xf32>
    %69 = arith.mulf %68, %22 : vector<9x16xf32>
    %cst_45 = arith.constant 0.266666681 : f32
    %70 = vector.broadcast %cst_45 : f32 to vector<9x16xf32>
    %71 = arith.mulf %70, %24 : vector<9x16xf32>
    %72 = arith.addf %69, %71 : vector<9x16xf32>
    %c0_46 = arith.constant 0 : index
    %c112 = arith.constant 112 : index
    %73 = vector.load %arg11[%c0_46, %c112] : memref<9x256xf32, #tpu.memory_space<vmem>>, vector<9x16xf32>
    tpu.vector_store %arg11[%c0_46, %c112], %72 {strides = array<i32>} : memref<9x256xf32, #tpu.memory_space<vmem>>, vector<9x16xf32>,
    %cst_47 = arith.constant 0.266666681 : f32
    %74 = vector.broadcast %cst_47 : f32 to vector<9x16xf32>
    %75 = arith.mulf %74, %22 : vector<9x16xf32>
    %cst_48 = arith.constant 0.733333349 : f32
    %76 = vector.broadcast %cst_48 : f32 to vector<9x16xf32>
    %77 = arith.mulf %76, %24 : vector<9x16xf32>
    %78 = arith.addf %75, %77 : vector<9x16xf32>
    %c0_49 = arith.constant 0 : index
    %c128 = arith.constant 128 : index
    %79 = vector.load %arg11[%c0_49, %c128] : memref<9x256xf32, #tpu.memory_space<vmem>>, vector<9x16xf32>
    tpu.vector_store %arg11[%c0_49, %c128], %78 {strides = array<i32>} : memref<9x256xf32, #tpu.memory_space<vmem>>, vector<9x16xf32>,
    %cst_50 = arith.constant 8.000000e-01 : f32
    %80 = vector.broadcast %cst_50 : f32 to vector<9x16xf32>
    %81 = arith.mulf %80, %24 : vector<9x16xf32>
    %cst_51 = arith.constant 2.000000e-01 : f32
    %82 = vector.broadcast %cst_51 : f32 to vector<9x16xf32>
    %83 = arith.mulf %82, %26 : vector<9x16xf32>
    %84 = arith.addf %81, %83 : vector<9x16xf32>
    %c0_52 = arith.constant 0 : index
    %c144 = arith.constant 144 : index
    %85 = vector.load %arg11[%c0_52, %c144] : memref<9x256xf32, #tpu.memory_space<vmem>>, vector<9x16xf32>
    tpu.vector_store %arg11[%c0_52, %c144], %84 {strides = array<i32>} : memref<9x256xf32, #tpu.memory_space<vmem>>, vector<9x16xf32>,
    %cst_53 = arith.constant 0.333333343 : f32
    %86 = vector.broadcast %cst_53 : f32 to vector<9x16xf32>
    %87 = arith.mulf %86, %24 : vector<9x16xf32>
    %cst_54 = arith.constant 0.666666686 : f32
    %88 = vector.broadcast %cst_54 : f32 to vector<9x16xf32>
    %89 = arith.mulf %88, %26 : vector<9x16xf32>
    %90 = arith.addf %87, %89 : vector<9x16xf32>
    %c0_55 = arith.constant 0 : index
    %c160 = arith.constant 160 : index
    %91 = vector.load %arg11[%c0_55, %c160] : memref<9x256xf32, #tpu.memory_space<vmem>>, vector<9x16xf32>
    tpu.vector_store %arg11[%c0_55, %c160], %90 {strides = array<i32>} : memref<9x256xf32, #tpu.memory_space<vmem>>, vector<9x16xf32>,
    %cst_56 = arith.constant 0.866666674 : f32
    %92 = vector.broadcast %cst_56 : f32 to vector<9x16xf32>
    %93 = arith.mulf %92, %26 : vector<9x16xf32>
    %cst_57 = arith.constant 0.13333334 : f32
    %94 = vector.broadcast %cst_57 : f32 to vector<9x16xf32>
    %95 = arith.mulf %94, %28 : vector<9x16xf32>
    %96 = arith.addf %93, %95 : vector<9x16xf32>
    %c0_58 = arith.constant 0 : index
    %c176 = arith.constant 176 : index
    %97 = vector.load %arg11[%c0_58, %c176] : memref<9x256xf32, #tpu.memory_space<vmem>>, vector<9x16xf32>
    tpu.vector_store %arg11[%c0_58, %c176], %96 {strides = array<i32>} : memref<9x256xf32, #tpu.memory_space<vmem>>, vector<9x16xf32>,
    %cst_59 = arith.constant 4.000000e-01 : f32
    %98 = vector.broadcast %cst_59 : f32 to vector<9x16xf32>
    %99 = arith.mulf %98, %26 : vector<9x16xf32>
    %cst_60 = arith.constant 6.000000e-01 : f32
    %100 = vector.broadcast %cst_60 : f32 to vector<9x16xf32>
    %101 = arith.mulf %100, %28 : vector<9x16xf32>
    %102 = arith.addf %99, %101 : vector<9x16xf32>
    %c0_61 = arith.constant 0 : index
    %c192 = arith.constant 192 : index
    %103 = vector.load %arg11[%c0_61, %c192] : memref<9x256xf32, #tpu.memory_space<vmem>>, vector<9x16xf32>
    tpu.vector_store %arg11[%c0_61, %c192], %102 {strides = array<i32>} : memref<9x256xf32, #tpu.memory_space<vmem>>, vector<9x16xf32>,
    %cst_62 = arith.constant 0.933333337 : f32
    %104 = vector.broadcast %cst_62 : f32 to vector<9x16xf32>
    %105 = arith.mulf %104, %28 : vector<9x16xf32>
    %cst_63 = arith.constant 0.0666666701 : f32
    %106 = vector.broadcast %cst_63 : f32 to vector<9x16xf32>
    %107 = arith.mulf %106, %30 : vector<9x16xf32>
    %108 = arith.addf %105, %107 : vector<9x16xf32>
    %c0_64 = arith.constant 0 : index
    %c208 = arith.constant 208 : index
    %109 = vector.load %arg11[%c0_64, %c208] : memref<9x256xf32, #tpu.memory_space<vmem>>, vector<9x16xf32>
    tpu.vector_store %arg11[%c0_64, %c208], %108 {strides = array<i32>} : memref<9x256xf32, #tpu.memory_space<vmem>>, vector<9x16xf32>,
    %cst_65 = arith.constant 0.466666669 : f32
    %110 = vector.broadcast %cst_65 : f32 to vector<9x16xf32>
    %111 = arith.mulf %110, %28 : vector<9x16xf32>
    %cst_66 = arith.constant 0.533333361 : f32
    %112 = vector.broadcast %cst_66 : f32 to vector<9x16xf32>
    %113 = arith.mulf %112, %30 : vector<9x16xf32>
    %114 = arith.addf %111, %113 : vector<9x16xf32>
    %c0_67 = arith.constant 0 : index
    %c224 = arith.constant 224 : index
    %115 = vector.load %arg11[%c0_67, %c224] : memref<9x256xf32, #tpu.memory_space<vmem>>, vector<9x16xf32>
    tpu.vector_store %arg11[%c0_67, %c224], %114 {strides = array<i32>} : memref<9x256xf32, #tpu.memory_space<vmem>>, vector<9x16xf32>,
    %c0_68 = arith.constant 0 : index
    %c240 = arith.constant 240 : index
    %116 = vector.load %arg11[%c0_68, %c240] : memref<9x256xf32, #tpu.memory_space<vmem>>, vector<9x16xf32>
    tpu.vector_store %arg11[%c0_68, %c240], %30 {strides = array<i32>} : memref<9x256xf32, #tpu.memory_space<vmem>>, vector<9x16xf32>,
    %c0_69 = arith.constant 0 : index
    %c0_70 = arith.constant 0 : index
    %117 = vector.load %arg11[%c0_69, %c0_70] : memref<9x256xf32, #tpu.memory_space<vmem>>, vector<8x256xf32>
    %c8 = arith.constant 8 : index
    %c0_71 = arith.constant 0 : index
    %118 = vector.load %arg11[%c8, %c0_71] : memref<9x256xf32, #tpu.memory_space<vmem>>, vector<1x256xf32>
    %119 = tpu.iota {dimensions = array<i32: 1>} : vector<1x256xi32>
    %c16_i32 = arith.constant 16 : i32
    %c0_i32 = arith.constant 0 : i32
    %120 = arith.cmpi eq, %c16_i32, %c0_i32 : i32
    %c1_i32 = arith.constant 1 : i32
    %121 = arith.select %120, %c1_i32, %c16_i32 : i32
    %122 = vector.broadcast %121 : i32 to vector<1x256xi32>
    %123 = arith.remsi %119, %122 : vector<1x256xi32>
    %c0_i32_72 = arith.constant 0 : i32
    %124 = vector.broadcast %c0_i32_72 : i32 to vector<1x256xi32>
    %125 = arith.cmpi ne, %123, %124 : vector<1x256xi32>
    %c0_i32_73 = arith.constant 0 : i32
    %126 = vector.broadcast %c0_i32_73 : i32 to vector<1x256xi32>
    %127 = arith.cmpi slt, %123, %126 : vector<1x256xi32>
    %c0_i32_74 = arith.constant 0 : i32
    %128 = arith.cmpi slt, %121, %c0_i32_74 : i32
    %129 = vector.broadcast %128 : i1 to vector<1x256xi1>
    %130 = vector.broadcast %129 : vector<1x256xi1> to vector<1x256xi1>
    %131 = arith.xori %127, %130 : vector<1x256xi1>
    %132 = arith.andi %131, %125 : vector<1x256xi1>
    %133 = vector.broadcast %121 : i32 to vector<1x256xi32>
    %134 = arith.addi %123, %133 : vector<1x256xi32>
    %135 = arith.select %132, %134, %123 : vector<1x256xi1>, vector<1x256xi32>
    %c1_i32_75 = arith.constant 1 : i32
    %136 = vector.broadcast %c1_i32_75 : i32 to vector<1x256xi32>
    %137 = arith.cmpi sge, %135, %136 : vector<1x256xi32>
    %c2_i32 = arith.constant 2 : i32
    %138 = vector.broadcast %c2_i32 : i32 to vector<1x256xi32>
    %139 = arith.cmpi sge, %135, %138 : vector<1x256xi32>
    %c15_i32 = arith.constant 15 : i32
    %140 = vector.broadcast %c15_i32 : i32 to vector<1x256xi32>
    %141 = arith.cmpi slt, %135, %140 : vector<1x256xi32>
    %c14_i32 = arith.constant 14 : i32
    %142 = vector.broadcast %c14_i32 : i32 to vector<1x256xi32>
    %143 = arith.cmpi slt, %135, %142 : vector<1x256xi32>
    %cst_76 = arith.constant 0.000000e+00 : f32
    %144 = vector.broadcast %cst_76 : f32 to vector<8x34xf32>
    %c0_77 = arith.constant 0 : index
    %c0_78 = arith.constant 0 : index
    %145 = vector.load %arg12[%c0_77, %c0_78] : memref<8x324xf32, #tpu.memory_space<vmem>>, vector<8x34xf32>
    tpu.vector_store %arg12[%c0_77, %c0_78], %144 {strides = array<i32>} : memref<8x324xf32, #tpu.memory_space<vmem>>, vector<8x34xf32>,
    %cst_79 = arith.constant 0.000000e+00 : f32
    %146 = vector.broadcast %cst_79 : f32 to vector<8x34xf32>
    %c0_80 = arith.constant 0 : index
    %c290 = arith.constant 290 : index
    %147 = vector.load %arg12[%c0_80, %c290] : memref<8x324xf32, #tpu.memory_space<vmem>>, vector<8x34xf32>
    tpu.vector_store %arg12[%c0_80, %c290], %146 {strides = array<i32>} : memref<8x324xf32, #tpu.memory_space<vmem>>, vector<8x34xf32>,
    %c0_81 = arith.constant 0 : index
    %c34 = arith.constant 34 : index
    %148 = vector.load %arg12[%c0_81, %c34] : memref<8x324xf32, #tpu.memory_space<vmem>>, vector<8x256xf32>
    tpu.vector_store %arg12[%c0_81, %c34], %6 {strides = array<i32>} : memref<8x324xf32, #tpu.memory_space<vmem>>, vector<8x256xf32>,
    %c0_82 = arith.constant 0 : index
    %c32_83 = arith.constant 32 : index
    %149 = vector.load %arg12[%c0_82, %c32_83] : memref<8x324xf32, #tpu.memory_space<vmem>>, vector<8x256xf32>
    %cst_84 = arith.constant 0.000000e+00 : f32
    %150 = vector.shape_cast %139 : vector<1x256xi1> to vector<1x256xi1>
    %151 = vector.broadcast %150 : vector<1x256xi1> to vector<8x256xi1>
    %152 = vector.broadcast %cst_84 : f32 to vector<8x256xf32>
    %153 = arith.select %151, %149, %152 : vector<8x256xi1>, vector<8x256xf32>
    %154 = arith.addf %6, %153 : vector<8x256xf32>
    %c0_85 = arith.constant 0 : index
    %c33 = arith.constant 33 : index
    %155 = vector.load %arg12[%c0_85, %c33] : memref<8x324xf32, #tpu.memory_space<vmem>>, vector<8x256xf32>
    %cst_86 = arith.constant 0.000000e+00 : f32
    %156 = vector.shape_cast %137 : vector<1x256xi1> to vector<1x256xi1>
    %157 = vector.broadcast %156 : vector<1x256xi1> to vector<8x256xi1>
    %158 = vector.broadcast %cst_86 : f32 to vector<8x256xf32>
    %159 = arith.select %157, %155, %158 : vector<8x256xi1>, vector<8x256xf32>
    %160 = arith.addf %154, %159 : vector<8x256xf32>
    %c0_87 = arith.constant 0 : index
    %c35 = arith.constant 35 : index
    %161 = vector.load %arg12[%c0_87, %c35] : memref<8x324xf32, #tpu.memory_space<vmem>>, vector<8x256xf32>
    %cst_88 = arith.constant 0.000000e+00 : f32
    %162 = vector.shape_cast %141 : vector<1x256xi1> to vector<1x256xi1>
    %163 = vector.broadcast %162 : vector<1x256xi1> to vector<8x256xi1>
    %164 = vector.broadcast %cst_88 : f32 to vector<8x256xf32>
    %165 = arith.select %163, %161, %164 : vector<8x256xi1>, vector<8x256xf32>
    %166 = arith.addf %160, %165 : vector<8x256xf32>
    %c0_89 = arith.constant 0 : index
    %c36 = arith.constant 36 : index
    %167 = vector.load %arg12[%c0_89, %c36] : memref<8x324xf32, #tpu.memory_space<vmem>>, vector<8x256xf32>
    %cst_90 = arith.constant 0.000000e+00 : f32
    %168 = vector.shape_cast %143 : vector<1x256xi1> to vector<1x256xi1>
    %169 = vector.broadcast %168 : vector<1x256xi1> to vector<8x256xi1>
    %170 = vector.broadcast %cst_90 : f32 to vector<8x256xf32>
    %171 = arith.select %169, %167, %170 : vector<8x256xi1>, vector<8x256xf32>
    %172 = arith.addf %166, %171 : vector<8x256xf32>
    %c0_91 = arith.constant 0 : index
    %c34_92 = arith.constant 34 : index
    %173 = vector.load %arg12[%c0_91, %c34_92] : memref<8x324xf32, #tpu.memory_space<vmem>>, vector<8x256xf32>
    tpu.vector_store %arg12[%c0_91, %c34_92], %172 {strides = array<i32>} : memref<8x324xf32, #tpu.memory_space<vmem>>, vector<8x256xf32>,
    %c0_93 = arith.constant 0 : index
    %c2 = arith.constant 2 : index
    %174 = vector.load %arg12[%c0_93, %c2] : memref<8x324xf32, #tpu.memory_space<vmem>>, vector<8x256xf32>
    %175 = arith.addf %172, %174 : vector<8x256xf32>
    %c0_94 = arith.constant 0 : index
    %c18 = arith.constant 18 : index
    %176 = vector.load %arg12[%c0_94, %c18] : memref<8x324xf32, #tpu.memory_space<vmem>>, vector<8x256xf32>
    %177 = arith.addf %175, %176 : vector<8x256xf32>
    %c0_95 = arith.constant 0 : index
    %c50 = arith.constant 50 : index
    %178 = vector.load %arg12[%c0_95, %c50] : memref<8x324xf32, #tpu.memory_space<vmem>>, vector<8x256xf32>
    %179 = arith.addf %177, %178 : vector<8x256xf32>
    %c0_96 = arith.constant 0 : index
    %c66 = arith.constant 66 : index
    %180 = vector.load %arg12[%c0_96, %c66] : memref<8x324xf32, #tpu.memory_space<vmem>>, vector<8x256xf32>
    %181 = arith.addf %179, %180 : vector<8x256xf32>
    %cst_97 = arith.constant 2.500000e+01 : f32
    %182 = vector.broadcast %cst_97 : f32 to vector<8x256xf32>
    %183 = arith.mulf %182, %6 : vector<8x256xf32>
    %184 = arith.subf %181, %183 : vector<8x256xf32>
    %185 = vector.broadcast %118 : vector<1x256xf32> to vector<8x256xf32>
    %186 = arith.mulf %184, %185 : vector<8x256xf32>
    %187 = arith.addf %186, %117 : vector<8x256xf32>
    %cst_98 = arith.constant 0.000000e+00 : f32
    %188 = vector.broadcast %cst_98 : f32 to vector<24x17xf32>
    %c0_99 = arith.constant 0 : index
    %c0_100 = arith.constant 0 : index
    %189 = vector.load %arg13[%c0_99, %c0_100] : memref<24x290xf32, #tpu.memory_space<vmem>>, vector<24x17xf32>
    tpu.vector_store %arg13[%c0_99, %c0_100], %188 {strides = array<i32>} : memref<24x290xf32, #tpu.memory_space<vmem>>, vector<24x17xf32>,
    %cst_101 = arith.constant 0.000000e+00 : f32
    %190 = vector.broadcast %cst_101 : f32 to vector<24x17xf32>
    %c0_102 = arith.constant 0 : index
    %c273 = arith.constant 273 : index
    %191 = vector.load %arg13[%c0_102, %c273] : memref<24x290xf32, #tpu.memory_space<vmem>>, vector<24x17xf32>
    tpu.vector_store %arg13[%c0_102, %c273], %190 {strides = array<i32>} : memref<24x290xf32, #tpu.memory_space<vmem>>, vector<24x17xf32>,
    %c0_103 = arith.constant 0 : index
    %c17 = arith.constant 17 : index
    %192 = vector.load %arg13[%c0_103, %c17] : memref<24x290xf32, #tpu.memory_space<vmem>>, vector<8x256xf32>
    tpu.vector_store %arg13[%c0_103, %c17], %187 {strides = array<i32>} : memref<24x290xf32, #tpu.memory_space<vmem>>, vector<8x256xf32>,
    %c8_104 = arith.constant 8 : index
    %c17_105 = arith.constant 17 : index
    %193 = vector.load %arg13[%c8_104, %c17_105] : memref<24x290xf32, #tpu.memory_space<vmem>>, vector<8x256xf32>
    tpu.vector_store %arg13[%c8_104, %c17_105], %6 {strides = array<i32>} : memref<24x290xf32, #tpu.memory_space<vmem>>, vector<8x256xf32>,
    %c16_106 = arith.constant 16 : index
    %c17_107 = arith.constant 17 : index
    %194 = vector.load %arg13[%c16_106, %c17_107] : memref<24x290xf32, #tpu.memory_space<vmem>>, vector<8x256xf32>
    tpu.vector_store %arg13[%c16_106, %c17_107], %117 {strides = array<i32>} : memref<24x290xf32, #tpu.memory_space<vmem>>, vector<8x256xf32>,
    %cst_108 = arith.constant 0.000000e+00 : f32
    %195 = vector.broadcast %cst_108 : f32 to vector<8x256xf32>
    %c0_109 = arith.constant 0 : index
    %c0_110 = arith.constant 0 : index
    %196 = vector.load %arg13[%c0_109, %c0_110] : memref<24x290xf32, #tpu.memory_space<vmem>>, vector<24x256xf32>
    %cst_111 = arith.constant 0.000000e+00 : f32
    %197 = vector.shape_cast %137 : vector<1x256xi1> to vector<1x256xi1>
    %198 = vector.broadcast %197 : vector<1x256xi1> to vector<24x256xi1>
    %199 = vector.broadcast %cst_111 : f32 to vector<24x256xf32>
    %200 = arith.select %198, %196, %199 : vector<24x256xi1>, vector<24x256xf32>
    %c0_112 = arith.constant 0 : index
    %c0_113 = arith.constant 0 : index
    %c0_114 = arith.constant 0 : index
    %c0_115 = arith.constant 0 : index
    %201 = vector.load %arg8[%c0_112, %c0_113, %c0_114, %c0_115] : memref<3x3x8x24xf32, #tpu.memory_space<vmem>>, vector<1x1x8x24xf32>
    %202 = vector.shape_cast %201 : vector<1x1x8x24xf32> to vector<8x24xf32>
    %cst_116 = arith.constant dense<0.000000e+00> : vector<8x256xf32>
    %203 = tpu.matmul %202, %200, %cst_116 {dimension_numbers = #tpu.dot_dimension_numbers<[1], [0], [0], [1], [0, 0, 1, 1], [], []>} : vector<8x24xf32>, vector<24x256xf32>, vector<8x256xf32> -> vector<8x256xf32>
    %204 = arith.addf %195, %203 : vector<8x256xf32>
    %c0_117 = arith.constant 0 : index
    %c1 = arith.constant 1 : index
    %205 = vector.load %arg13[%c0_117, %c1] : memref<24x290xf32, #tpu.memory_space<vmem>>, vector<24x256xf32>
    %c0_118 = arith.constant 0 : index
    %c1_119 = arith.constant 1 : index
    %c0_120 = arith.constant 0 : index
    %c0_121 = arith.constant 0 : index
    %206 = vector.load %arg8[%c0_118, %c1_119, %c0_120, %c0_121] : memref<3x3x8x24xf32, #tpu.memory_space<vmem>>, vector<1x1x8x24xf32>
    %207 = vector.shape_cast %206 : vector<1x1x8x24xf32> to vector<8x24xf32>
    %cst_122 = arith.constant dense<0.000000e+00> : vector<8x256xf32>
    %208 = tpu.matmul %207, %205, %cst_122 {dimension_numbers = #tpu.dot_dimension_numbers<[1], [0], [0], [1], [0, 0, 1, 1], [], []>} : vector<8x24xf32>, vector<24x256xf32>, vector<8x256xf32> -> vector<8x256xf32>
    %209 = arith.addf %204, %208 : vector<8x256xf32>
    %c0_123 = arith.constant 0 : index
    %c2_124 = arith.constant 2 : index
    %210 = vector.load %arg13[%c0_123, %c2_124] : memref<24x290xf32, #tpu.memory_space<vmem>>, vector<24x256xf32>
    %cst_125 = arith.constant 0.000000e+00 : f32
    %211 = vector.shape_cast %141 : vector<1x256xi1> to vector<1x256xi1>
    %212 = vector.broadcast %211 : vector<1x256xi1> to vector<24x256xi1>
    %213 = vector.broadcast %cst_125 : f32 to vector<24x256xf32>
    %214 = arith.select %212, %210, %213 : vector<24x256xi1>, vector<24x256xf32>
    %c0_126 = arith.constant 0 : index
    %c2_127 = arith.constant 2 : index
    %c0_128 = arith.constant 0 : index
    %c0_129 = arith.constant 0 : index
    %215 = vector.load %arg8[%c0_126, %c2_127, %c0_128, %c0_129] : memref<3x3x8x24xf32, #tpu.memory_space<vmem>>, vector<1x1x8x24xf32>
    %216 = vector.shape_cast %215 : vector<1x1x8x24xf32> to vector<8x24xf32>
    %cst_130 = arith.constant dense<0.000000e+00> : vector<8x256xf32>
    %217 = tpu.matmul %216, %214, %cst_130 {dimension_numbers = #tpu.dot_dimension_numbers<[1], [0], [0], [1], [0, 0, 1, 1], [], []>} : vector<8x24xf32>, vector<24x256xf32>, vector<8x256xf32> -> vector<8x256xf32>
    %218 = arith.addf %209, %217 : vector<8x256xf32>
    %c0_131 = arith.constant 0 : index
    %c16_132 = arith.constant 16 : index
    %219 = vector.load %arg13[%c0_131, %c16_132] : memref<24x290xf32, #tpu.memory_space<vmem>>, vector<24x256xf32>
    %cst_133 = arith.constant 0.000000e+00 : f32
    %220 = vector.shape_cast %137 : vector<1x256xi1> to vector<1x256xi1>
    %221 = vector.broadcast %220 : vector<1x256xi1> to vector<24x256xi1>
    %222 = vector.broadcast %cst_133 : f32 to vector<24x256xf32>
    %223 = arith.select %221, %219, %222 : vector<24x256xi1>, vector<24x256xf32>
    %c1_134 = arith.constant 1 : index
    %c0_135 = arith.constant 0 : index
    %c0_136 = arith.constant 0 : index
    %c0_137 = arith.constant 0 : index
    %224 = vector.load %arg8[%c1_134, %c0_135, %c0_136, %c0_137] : memref<3x3x8x24xf32, #tpu.memory_space<vmem>>, vector<1x1x8x24xf32>
    %225 = vector.shape_cast %224 : vector<1x1x8x24xf32> to vector<8x24xf32>
    %cst_138 = arith.constant dense<0.000000e+00> : vector<8x256xf32>
    %226 = tpu.matmul %225, %223, %cst_138 {dimension_numbers = #tpu.dot_dimension_numbers<[1], [0], [0], [1], [0, 0, 1, 1], [], []>} : vector<8x24xf32>, vector<24x256xf32>, vector<8x256xf32> -> vector<8x256xf32>
    %227 = arith.addf %218, %226 : vector<8x256xf32>
    %c0_139 = arith.constant 0 : index
    %c17_140 = arith.constant 17 : index
    %228 = vector.load %arg13[%c0_139, %c17_140] : memref<24x290xf32, #tpu.memory_space<vmem>>, vector<24x256xf32>
    %c1_141 = arith.constant 1 : index
    %c1_142 = arith.constant 1 : index
    %c0_143 = arith.constant 0 : index
    %c0_144 = arith.constant 0 : index
    %229 = vector.load %arg8[%c1_141, %c1_142, %c0_143, %c0_144] : memref<3x3x8x24xf32, #tpu.memory_space<vmem>>, vector<1x1x8x24xf32>
    %230 = vector.shape_cast %229 : vector<1x1x8x24xf32> to vector<8x24xf32>
    %cst_145 = arith.constant dense<0.000000e+00> : vector<8x256xf32>
    %231 = tpu.matmul %230, %228, %cst_145 {dimension_numbers = #tpu.dot_dimension_numbers<[1], [0], [0], [1], [0, 0, 1, 1], [], []>} : vector<8x24xf32>, vector<24x256xf32>, vector<8x256xf32> -> vector<8x256xf32>
    %232 = arith.addf %227, %231 : vector<8x256xf32>
    %c0_146 = arith.constant 0 : index
    %c18_147 = arith.constant 18 : index
    %233 = vector.load %arg13[%c0_146, %c18_147] : memref<24x290xf32, #tpu.memory_space<vmem>>, vector<24x256xf32>
    %cst_148 = arith.constant 0.000000e+00 : f32
    %234 = vector.shape_cast %141 : vector<1x256xi1> to vector<1x256xi1>
    %235 = vector.broadcast %234 : vector<1x256xi1> to vector<24x256xi1>
    %236 = vector.broadcast %cst_148 : f32 to vector<24x256xf32>
    %237 = arith.select %235, %233, %236 : vector<24x256xi1>, vector<24x256xf32>
    %c1_149 = arith.constant 1 : index
    %c2_150 = arith.constant 2 : index
    %c0_151 = arith.constant 0 : index
    %c0_152 = arith.constant 0 : index
    %238 = vector.load %arg8[%c1_149, %c2_150, %c0_151, %c0_152] : memref<3x3x8x24xf32, #tpu.memory_space<vmem>>, vector<1x1x8x24xf32>
    %239 = vector.shape_cast %238 : vector<1x1x8x24xf32> to vector<8x24xf32>
    %cst_153 = arith.constant dense<0.000000e+00> : vector<8x256xf32>
    %240 = tpu.matmul %239, %237, %cst_153 {dimension_numbers = #tpu.dot_dimension_numbers<[1], [0], [0], [1], [0, 0, 1, 1], [], []>} : vector<8x24xf32>, vector<24x256xf32>, vector<8x256xf32> -> vector<8x256xf32>
    %241 = arith.addf %232, %240 : vector<8x256xf32>
    %c0_154 = arith.constant 0 : index
    %c32_155 = arith.constant 32 : index
    %242 = vector.load %arg13[%c0_154, %c32_155] : memref<24x290xf32, #tpu.memory_space<vmem>>, vector<24x256xf32>
    %cst_156 = arith.constant 0.000000e+00 : f32
    %243 = vector.shape_cast %137 : vector<1x256xi1> to vector<1x256xi1>
    %244 = vector.broadcast %243 : vector<1x256xi1> to vector<24x256xi1>
    %245 = vector.broadcast %cst_156 : f32 to vector<24x256xf32>
    %246 = arith.select %244, %242, %245 : vector<24x256xi1>, vector<24x256xf32>
    %c2_157 = arith.constant 2 : index
    %c0_158 = arith.constant 0 : index
    %c0_159 = arith.constant 0 : index
    %c0_160 = arith.constant 0 : index
    %247 = vector.load %arg8[%c2_157, %c0_158, %c0_159, %c0_160] : memref<3x3x8x24xf32, #tpu.memory_space<vmem>>, vector<1x1x8x24xf32>
    %248 = vector.shape_cast %247 : vector<1x1x8x24xf32> to vector<8x24xf32>
    %cst_161 = arith.constant dense<0.000000e+00> : vector<8x256xf32>
    %249 = tpu.matmul %248, %246, %cst_161 {dimension_numbers = #tpu.dot_dimension_numbers<[1], [0], [0], [1], [0, 0, 1, 1], [], []>} : vector<8x24xf32>, vector<24x256xf32>, vector<8x256xf32> -> vector<8x256xf32>
    %250 = arith.addf %241, %249 : vector<8x256xf32>
    %c0_162 = arith.constant 0 : index
    %c33_163 = arith.constant 33 : index
    %251 = vector.load %arg13[%c0_162, %c33_163] : memref<24x290xf32, #tpu.memory_space<vmem>>, vector<24x256xf32>
    %c2_164 = arith.constant 2 : index
    %c1_165 = arith.constant 1 : index
    %c0_166 = arith.constant 0 : index
    %c0_167 = arith.constant 0 : index
    %252 = vector.load %arg8[%c2_164, %c1_165, %c0_166, %c0_167] : memref<3x3x8x24xf32, #tpu.memory_space<vmem>>, vector<1x1x8x24xf32>
    %253 = vector.shape_cast %252 : vector<1x1x8x24xf32> to vector<8x24xf32>
    %cst_168 = arith.constant dense<0.000000e+00> : vector<8x256xf32>
    %254 = tpu.matmul %253, %251, %cst_168 {dimension_numbers = #tpu.dot_dimension_numbers<[1], [0], [0], [1], [0, 0, 1, 1], [], []>} : vector<8x24xf32>, vector<24x256xf32>, vector<8x256xf32> -> vector<8x256xf32>
    %255 = arith.addf %250, %254 : vector<8x256xf32>
    %c0_169 = arith.constant 0 : index
    %c34_170 = arith.constant 34 : index
    %256 = vector.load %arg13[%c0_169, %c34_170] : memref<24x290xf32, #tpu.memory_space<vmem>>, vector<24x256xf32>
    %cst_171 = arith.constant 0.000000e+00 : f32
    %257 = vector.shape_cast %141 : vector<1x256xi1> to vector<1x256xi1>
    %258 = vector.broadcast %257 : vector<1x256xi1> to vector<24x256xi1>
    %259 = vector.broadcast %cst_171 : f32 to vector<24x256xf32>
    %260 = arith.select %258, %256, %259 : vector<24x256xi1>, vector<24x256xf32>
    %c2_172 = arith.constant 2 : index
    %c2_173 = arith.constant 2 : index
    %c0_174 = arith.constant 0 : index
    %c0_175 = arith.constant 0 : index
    %261 = vector.load %arg8[%c2_172, %c2_173, %c0_174, %c0_175] : memref<3x3x8x24xf32, #tpu.memory_space<vmem>>, vector<1x1x8x24xf32>
    %262 = vector.shape_cast %261 : vector<1x1x8x24xf32> to vector<8x24xf32>
    %cst_176 = arith.constant dense<0.000000e+00> : vector<8x256xf32>
    %263 = tpu.matmul %262, %260, %cst_176 {dimension_numbers = #tpu.dot_dimension_numbers<[1], [0], [0], [1], [0, 0, 1, 1], [], []>} : vector<8x24xf32>, vector<24x256xf32>, vector<8x256xf32> -> vector<8x256xf32>
    %264 = arith.addf %255, %263 : vector<8x256xf32>
    %c0_177 = arith.constant 0 : index
    %c0_178 = arith.constant 0 : index
    %265 = vector.load %arg9[%c0_177, %c0_178] : memref<8x1xf32, #tpu.memory_space<vmem>>, vector<8x1xf32>
    %266 = vector.broadcast %265 : vector<8x1xf32> to vector<8x256xf32>
    %267 = arith.addf %264, %266 : vector<8x256xf32>
    %cst_179 = arith.constant 0.000000e+00 : f32
    %268 = vector.broadcast %cst_179 : f32 to vector<8x256xf32>
    %269 = arith.cmpf oge, %267, %268 : vector<8x256xf32>
    %cst_180 = arith.constant 0.00999999977 : f32
    %270 = vector.broadcast %cst_180 : f32 to vector<8x256xf32>
    %271 = arith.mulf %270, %267 : vector<8x256xf32>
    %272 = arith.select %269, %267, %271 : vector<8x256xi1>, vector<8x256xf32>
    %c0_181 = arith.constant 0 : index
    %c0_182 = arith.constant 0 : index
    %c0_183 = arith.constant 0 : index
    %273 = vector.load %arg10[%c0_181, %c0_182, %c0_183] : memref<1x8x256xf32, #tpu.memory_space<vmem>>, vector<1x8x256xf32>
    %274 = vector.shape_cast %273 : vector<1x8x256xf32> to vector<8x256xf32>
    %275 = vector.shape_cast %272 : vector<8x256xf32> to vector<1x8x256xf32>
    tpu.vector_store %arg10[%c0_181, %c0_182, %c0_183], %275 {strides = array<i32>} : memref<1x8x256xf32, #tpu.memory_space<vmem>>, vector<1x8x256xf32>,
    return
  }
  func.func @transform_0(%arg0: i32) -> (i32, i32, i32) {
    %c0_i32 = arith.constant 0 : i32
    %c0_i32_0 = arith.constant 0 : i32
    %c0_i32_1 = arith.constant 0 : i32
    return %arg0, %c0_i32, %c0_i32_0 : i32, i32, i32
  }
  func.func @transform_1(%arg0: i32) -> (i32, i32, i32) {
    %c0_i32 = arith.constant 0 : i32
    %c0_i32_0 = arith.constant 0 : i32
    %c0_i32_1 = arith.constant 0 : i32
    return %arg0, %c0_i32, %c0_i32_0 : i32, i32, i32
  }
  func.func @transform_2(%arg0: i32) -> (i32, i32) {
    %c0_i32 = arith.constant 0 : i32
    %c0_i32_0 = arith.constant 0 : i32
    %c0_i32_1 = arith.constant 0 : i32
    return %c0_i32, %c0_i32_0 : i32, i32
  }
  func.func @transform_3(%arg0: i32) -> (i32, i32) {
    %c0_i32 = arith.constant 0 : i32
    %c0_i32_0 = arith.constant 0 : i32
    %c0_i32_1 = arith.constant 0 : i32
    return %c0_i32, %c0_i32_0 : i32, i32
  }
  func.func @transform_4(%arg0: i32) -> (i32, i32) {
    %c0_i32 = arith.constant 0 : i32
    %c0_i32_0 = arith.constant 0 : i32
    %c0_i32_1 = arith.constant 0 : i32
    return %c0_i32, %c0_i32_0 : i32, i32
  }
  func.func @transform_5(%arg0: i32) -> (i32, i32) {
    %c0_i32 = arith.constant 0 : i32
    %c0_i32_0 = arith.constant 0 : i32
    %c0_i32_1 = arith.constant 0 : i32
    return %c0_i32, %c0_i32_0 : i32, i32
  }
  func.func @transform_6(%arg0: i32) -> (i32, i32) {
    %c0_i32 = arith.constant 0 : i32
    %c0_i32_0 = arith.constant 0 : i32
    %c0_i32_1 = arith.constant 0 : i32
    return %c0_i32, %c0_i32_0 : i32, i32
  }
  func.func @transform_7(%arg0: i32) -> (i32, i32, i32, i32) {
    %c0_i32 = arith.constant 0 : i32
    %c0_i32_0 = arith.constant 0 : i32
    %c0_i32_1 = arith.constant 0 : i32
    %c0_i32_2 = arith.constant 0 : i32
    %c0_i32_3 = arith.constant 0 : i32
    return %c0_i32, %c0_i32_0, %c0_i32_1, %c0_i32_2 : i32, i32, i32, i32
  }
  func.func @transform_8(%arg0: i32) -> (i32, i32) {
    %c0_i32 = arith.constant 0 : i32
    %c0_i32_0 = arith.constant 0 : i32
    %c0_i32_1 = arith.constant 0 : i32
    return %c0_i32, %c0_i32_0 : i32, i32
  }
  func.func @transform_9(%arg0: i32) -> (i32, i32, i32) {
    %c0_i32 = arith.constant 0 : i32
    %c0_i32_0 = arith.constant 0 : i32
    %c0_i32_1 = arith.constant 0 : i32
    return %arg0, %c0_i32, %c0_i32_0 : i32, i32, i32
  }
}

</mosaic_0001>

<llo_original>
// kernel: tpu_custom_call.1
$region0: #{tpu_custom_call.1}
  #allocation0 [shape = 'u32[]', space=smem, size = 0x4, offset = 0x4, fixed_abs, tag = 'smem constant byte address 0x4 - core index']
  #allocation1 [shape = 'u32[144,128]{1,0:T(1,128)}', space=vmem, size = 0x12000, scoped, tag = 'internal scratch']
  #allocation2 [shape = 'f32[9,256]{1,0:T(8,128)}', space=vmem, size = 0x4000, scoped, tag = 'scratch operand']
  #allocation3 [shape = 'f32[8,324]{1,0:T(8,128)}', space=vmem, size = 0x3000, scoped, tag = 'scratch operand']
  #allocation4 [shape = 'f32[24,290]{1,0:T(8,128)}', space=vmem, size = 0x9000, scoped, tag = 'scratch operand']
  %s0 = inlined_call_operand.hbm [shape: f32[2,4,256], index: 0, kind: input, shape index: {}]
  %s1 = inlined_call_operand.hbm [shape: f32[2,8,64], index: 1, kind: input, shape index: {}]
  %s2 = inlined_call_operand.vmem [shape: f32[8,16], index: 2, kind: input, shape index: {}]
  %s3 = inlined_call_operand.vmem [shape: f32[8,4], index: 3, kind: input, shape index: {}]
  %s4 = inlined_call_operand.vmem [shape: f32[8,1], index: 4, kind: input, shape index: {}]
  %s5 = inlined_call_operand.vmem [shape: f32[9,8], index: 5, kind: input, shape index: {}]
  %s6 = inlined_call_operand.vmem [shape: f32[9,1], index: 6, kind: input, shape index: {}]
  %s7 = inlined_call_operand.vmem [shape: f32[3,3,8,24], index: 7, kind: input, shape index: {}]
  %s8 = inlined_call_operand.vmem [shape: f32[8,1], index: 8, kind: input, shape index: {}]
  %s9 = inlined_call_operand.hbm [shape: f32[2,8,256], index: 9, kind: output, shape index: {}]
  %s10 = sld [smem:[#allocation0]]
  $region77: #{tpu_custom_call.1} parent=0
    _
  %s12 = ssub.s32 1, %s10
  %s13 = scalar_select 0, %s12, %s10
  $region1: #{tpu_custom_call.1} parent=0
    #allocation5 [shape = 'u8[8192]{0}', space=vmem, size = 0x2000, scoped, tag = 'input window, operand 0']
    #allocation6 [shape = 's32[2]{0}', space=sflag, size = 0x8, scoped, tag = 'scoped memory for tpu_custom_call.1']
    #allocation7 [shape = 's32[2]{0}', space=sflag, size = 0x8, scoped, tag = 'scoped memory for tpu_custom_call.1']
    #allocation8 [shape = 'u8[8192]{0}', space=vmem, size = 0x2000, scoped, tag = 'input window, operand 1']
    #allocation9 [shape = 's32[2]{0}', space=sflag, size = 0x8, scoped, tag = 'scoped memory for tpu_custom_call.1']
    #allocation10 [shape = 'u8[16384]{0}', space=vmem, size = 0x4000, scoped, tag = 'output window, operand 0']
    %14 = vsyncpa [#allocation6], 0
    %s15 = scalar_lea.sflag [#allocation6], 1
    %16 = vsyncpa %s15, 0
    %17 = vsyncpa [#allocation9], 0
    %s18 = scalar_lea.sflag [#allocation9], 1
    %19 = vsyncpa %s18, 0
    %20 = vsyncpa [#allocation7], 0
    %s21 = scalar_lea.sflag [#allocation7], 1
    %22 = vsyncpa %s21, 0
    loop: start=0, step=1, limit=4
    $region2: #{tpu_custom_call.1} parent=1 // loop_pre_header
      _
    $region3: #{tpu_custom_call.1} parent=1 // loop_header
      %s24 = sphi 0, %s28
      %p25 = scmp.ge.s32.totalorder %s24, 4
      %s34 = sphi 0, %s36
      %s37 = sphi 0, %s34
      %s38 = sphi 0, %s37
      %s54 = sphi 0, %s38
      %s60 = sphi 0, %s62
      %s63 = sphi 0, %s60
      %s64 = sphi 0, %s63
      %s80 = sphi 0, %s64
      %s84 = sphi 0, %s84
      %s86 = sphi 0, %s84
      %s87 = sphi 0, %s86
      %s101 = sphi 0, %s87
      %s105 = sphi 0, %s105
      %s107 = sphi 0, %s105
      %s108 = sphi 0, %s107
      %s122 = sphi 0, %s108
      %s126 = sphi 0, %s126
      %s128 = sphi 0, %s126
      %s129 = sphi 0, %s128
      %s143 = sphi 0, %s129
      %s147 = sphi 0, %s147
      %s149 = sphi 0, %s147
      %s150 = sphi 0, %s149
      %s164 = sphi 0, %s150
      %s168 = sphi 0, %s168
      %s170 = sphi 0, %s168
      %s171 = sphi 0, %s170
      %s185 = sphi 0, %s171
      %s189 = sphi 0, %s189
      %s191 = sphi 0, %s189
      %s192 = sphi 0, %s191
      %s206 = sphi 0, %s192
      %s210 = sphi 0, %s210
      %s212 = sphi 0, %s210
      %s213 = sphi 0, %s212
      %s227 = sphi 0, %s213
      %s233 = sphi 0, %s235
      %s236 = sphi 0, %s233
      %s237 = sphi 0, %s236
      %s253 = sphi 0, %s237
    $region4: #{tpu_custom_call.1} parent=1 // loop_header_branch
      %27 = sbr.rel (%p25) target = $region8
    $region5: #{tpu_custom_call.1} parent=1 // loop_body
      %s29 = ssub.s32 %s24, 1
      %s30 = ssub.s32 %s24, 2
      %s31 = sadd.s32 %s24, 1
      %s32 = ssub.s32 %s24, %s31
      %p33 = scmp.eq.s32.totalorder %s32, 0
      %s35 = sadd.s32 %s34, 1
      %s36 = scalar_select %p33, %s34, %s35
      %p39 = pneg %p33
      %p40 = scmp.eq.s32.totalorder %s24, 1
      %p41 = por %p39, %p40
      %p42 = scmp.ne.s32.totalorder %s34, %s37
      %p43 = scmp.eq.s32.totalorder %s24, 0
      %p44 = por %p42, %p43
      %p45 = scmp.ne.s32.totalorder %s34, %s37
      %p46 = scmp.eq.s32.totalorder %s29, 1
      %p47 = por %p45, %p46
      %p48 = scmp.ne.s32.totalorder %s37, %s38
      %p49 = scmp.eq.s32.totalorder %s29, 0
      %p50 = por %p48, %p49
      %p51 = scmp.ne.s32.totalorder %s37, %s38
      %p52 = scmp.eq.s32.totalorder %s30, 1
      %p53 = por %p51, %p52
      %p55 = scmp.ne.s32.totalorder %s38, %s54
      %p56 = scmp.eq.s32.totalorder %s30, 0
      %p57 = por %p55, %p56
      %s58 = ssub.s32 %s24, %s31
      %p59 = scmp.eq.s32.totalorder %s58, 0
      %s61 = sadd.s32 %s60, 1
      %s62 = scalar_select %p59, %s60, %s61
      %p65 = pneg %p59
      %p66 = scmp.eq.s32.totalorder %s24, 1
      %p67 = por %p65, %p66
      %p68 = scmp.ne.s32.totalorder %s60, %s63
      %p69 = scmp.eq.s32.totalorder %s24, 0
      %p70 = por %p68, %p69
      %p71 = scmp.ne.s32.totalorder %s60, %s63
      %p72 = scmp.eq.s32.totalorder %s29, 1
      %p73 = por %p71, %p72
      %p74 = scmp.ne.s32.totalorder %s63, %s64
      %p75 = scmp.eq.s32.totalorder %s29, 0
      %p76 = por %p74, %p75
      %p77 = scmp.ne.s32.totalorder %s63, %s64
      %p78 = scmp.eq.s32.totalorder %s30, 1
      %p79 = por %p77, %p78
      %p81 = scmp.ne.s32.totalorder %s64, %s80
      %p82 = scmp.eq.s32.totalorder %s30, 0
      %p83 = por %p81, %p82
      %s85 = sadd.s32 %s84, 1
      %p88 = scmp.eq.s32.totalorder %s24, 1
      %p89 = scmp.ne.s32.totalorder %s84, %s86
      %p90 = scmp.eq.s32.totalorder %s24, 0
      %p91 = por %p89, %p90
      %p92 = scmp.ne.s32.totalorder %s84, %s86
      %p93 = scmp.eq.s32.totalorder %s29, 1
      %p94 = por %p92, %p93
      %p95 = scmp.ne.s32.totalorder %s86, %s87
      %p96 = scmp.eq.s32.totalorder %s29, 0
      %p97 = por %p95, %p96
      %p98 = scmp.ne.s32.totalorder %s86, %s87
      %p99 = scmp.eq.s32.totalorder %s30, 1
      %p100 = por %p98, %p99
      %p102 = scmp.ne.s32.totalorder %s87, %s101
      %p103 = scmp.eq.s32.totalorder %s30, 0
      %p104 = por %p102, %p103
      %s106 = sadd.s32 %s105, 1
      %p109 = scmp.eq.s32.totalorder %s24, 1
      %p110 = scmp.ne.s32.totalorder %s105, %s107
      %p111 = scmp.eq.s32.totalorder %s24, 0
      %p112 = por %p110, %p111
      %p113 = scmp.ne.s32.totalorder %s105, %s107
      %p114 = scmp.eq.s32.totalorder %s29, 1
      %p115 = por %p113, %p114
      %p116 = scmp.ne.s32.totalorder %s107, %s108
      %p117 = scmp.eq.s32.totalorder %s29, 0
      %p118 = por %p116, %p117
      %p119 = scmp.ne.s32.totalorder %s107, %s108
      %p120 = scmp.eq.s32.totalorder %s30, 1
      %p121 = por %p119, %p120
      %p123 = scmp.ne.s32.totalorder %s108, %s122
      %p124 = scmp.eq.s32.totalorder %s30, 0
      %p125 = por %p123, %p124
      %s127 = sadd.s32 %s126, 1
      %p130 = scmp.eq.s32.totalorder %s24, 1
      %p131 = scmp.ne.s32.totalorder %s126, %s128
      %p132 = scmp.eq.s32.totalorder %s24, 0
      %p133 = por %p131, %p132
      %p134 = scmp.ne.s32.totalorder %s126, %s128
      %p135 = scmp.eq.s32.totalorder %s29, 1
      %p136 = por %p134, %p135
      %p137 = scmp.ne.s32.totalorder %s128, %s129
      %p138 = scmp.eq.s32.totalorder %s29, 0
      %p139 = por %p137, %p138
      %p140 = scmp.ne.s32.totalorder %s128, %s129
      %p141 = scmp.eq.s32.totalorder %s30, 1
      %p142 = por %p140, %p141
      %p144 = scmp.ne.s32.totalorder %s129, %s143
      %p145 = scmp.eq.s32.totalorder %s30, 0
      %p146 = por %p144, %p145
      %s148 = sadd.s32 %s147, 1
      %p151 = scmp.eq.s32.totalorder %s24, 1
      %p152 = scmp.ne.s32.totalorder %s147, %s149
      %p153 = scmp.eq.s32.totalorder %s24, 0
      %p154 = por %p152, %p153
      %p155 = scmp.ne.s32.totalorder %s147, %s149
      %p156 = scmp.eq.s32.totalorder %s29, 1
      %p157 = por %p155, %p156
      %p158 = scmp.ne.s32.totalorder %s149, %s150
      %p159 = scmp.eq.s32.totalorder %s29, 0
      %p160 = por %p158, %p159
      %p161 = scmp.ne.s32.totalorder %s149, %s150
      %p162 = scmp.eq.s32.totalorder %s30, 1
      %p163 = por %p161, %p162
      %p165 = scmp.ne.s32.totalorder %s150, %s164
      %p166 = scmp.eq.s32.totalorder %s30, 0
      %p167 = por %p165, %p166
      %s169 = sadd.s32 %s168, 1
      %p172 = scmp.eq.s32.totalorder %s24, 1
      %p173 = scmp.ne.s32.totalorder %s168, %s170
      %p174 = scmp.eq.s32.totalorder %s24, 0
      %p175 = por %p173, %p174
      %p176 = scmp.ne.s32.totalorder %s168, %s170
      %p177 = scmp.eq.s32.totalorder %s29, 1
      %p178 = por %p176, %p177
      %p179 = scmp.ne.s32.totalorder %s170, %s171
      %p180 = scmp.eq.s32.totalorder %s29, 0
      %p181 = por %p179, %p180
      %p182 = scmp.ne.s32.totalorder %s170, %s171
      %p183 = scmp.eq.s32.totalorder %s30, 1
      %p184 = por %p182, %p183
      %p186 = scmp.ne.s32.totalorder %s171, %s185
      %p187 = scmp.eq.s32.totalorder %s30, 0
      %p188 = por %p186, %p187
      %s190 = sadd.s32 %s189, 1
      %p193 = scmp.eq.s32.totalorder %s24, 1
      %p194 = scmp.ne.s32.totalorder %s189, %s191
      %p195 = scmp.eq.s32.totalorder %s24, 0
      %p196 = por %p194, %p195
      %p197 = scmp.ne.s32.totalorder %s189, %s191
      %p198 = scmp.eq.s32.totalorder %s29, 1
      %p199 = por %p197, %p198
      %p200 = scmp.ne.s32.totalorder %s191, %s192
      %p201 = scmp.eq.s32.totalorder %s29, 0
      %p202 = por %p200, %p201
      %p203 = scmp.ne.s32.totalorder %s191, %s192
      %p204 = scmp.eq.s32.totalorder %s30, 1
      %p205 = por %p203, %p204
      %p207 = scmp.ne.s32.totalorder %s192, %s206
      %p208 = scmp.eq.s32.totalorder %s30, 0
      %p209 = por %p207, %p208
      %s211 = sadd.s32 %s210, 1
      %p214 = scmp.eq.s32.totalorder %s24, 1
      %p215 = scmp.ne.s32.totalorder %s210, %s212
      %p216 = scmp.eq.s32.totalorder %s24, 0
      %p217 = por %p215, %p216
      %p218 = scmp.ne.s32.totalorder %s210, %s212
      %p219 = scmp.eq.s32.totalorder %s29, 1
      %p220 = por %p218, %p219
      %p221 = scmp.ne.s32.totalorder %s212, %s213
      %p222 = scmp.eq.s32.totalorder %s29, 0
      %p223 = por %p221, %p222
      %p224 = scmp.ne.s32.totalorder %s212, %s213
      %p225 = scmp.eq.s32.totalorder %s30, 1
      %p226 = por %p224, %p225
      %p228 = scmp.ne.s32.totalorder %s213, %s227
      %p229 = scmp.eq.s32.totalorder %s30, 0
      %p230 = por %p228, %p229
      %s231 = ssub.s32 %s24, %s31
      %p232 = scmp.eq.s32.totalorder %s231, 0
      %s234 = sadd.s32 %s233, 1
      %s235 = scalar_select %p232, %s233, %s234
      %p238 = pneg %p232
      %p239 = scmp.eq.s32.totalorder %s24, 1
      %p240 = por %p238, %p239
      %p241 = scmp.ne.s32.totalorder %s233, %s236
      %p242 = scmp.eq.s32.totalorder %s24, 0
      %p243 = por %p241, %p242
      %p244 = scmp.ne.s32.totalorder %s233, %s236
      %p245 = scmp.eq.s32.totalorder %s29, 1
      %p246 = por %p244, %p245
      %p247 = scmp.ne.s32.totalorder %s236, %s237
      %p248 = scmp.eq.s32.totalorder %s29, 0
      %p249 = por %p247, %p248
      %p250 = scmp.ne.s32.totalorder %s236, %s237
      %p251 = scmp.eq.s32.totalorder %s30, 1
      %p252 = por %p250, %p251
      %p254 = scmp.ne.s32.totalorder %s237, %s253
      %p255 = scmp.eq.s32.totalorder %s30, 0
      %p256 = por %p254, %p255
      %p257 = scmp.le.s32.totalorder 1, %s24
      %p258 = scmp.lt.s32.totalorder %s24, 3
      %p259 = pnand %p257, %p258
      %p260 = pneg %p259
      // Predicated region
      $region9: #{tpu_custom_call.1} parent=5 // pred_check
        _
      $region10: #{tpu_custom_call.1} parent=5 // pred_check_branch
        %262 = sbr.rel (%p259) target = $region12
      $region11: #{tpu_custom_call.1} parent=5 // pred_region
        %s263 = ssub.s32 %s24, 1
        // Predicated region
        $region13: #{tpu_custom_call.1} parent=11 // pred_check
          %p264 = pneg %p97
        $region14: #{tpu_custom_call.1} parent=11 // pred_check_branch
          %266 = sbr.rel (%p264) target = $region16
        $region15: #{tpu_custom_call.1} parent=11 // pred_region
          _
        $region16: #{tpu_custom_call.1} parent=11 // pred_fallthru
          _
        // Predicated region
        $region17: #{tpu_custom_call.1} parent=11 // pred_check
          %p267 = pneg %p118
        $region18: #{tpu_custom_call.1} parent=11 // pred_check_branch
          %269 = sbr.rel (%p267) target = $region20
        $region19: #{tpu_custom_call.1} parent=11 // pred_region
          _
        $region20: #{tpu_custom_call.1} parent=11 // pred_fallthru
          _
        // Predicated region
        $region21: #{tpu_custom_call.1} parent=11 // pred_check
          %p270 = pneg %p139
        $region22: #{tpu_custom_call.1} parent=11 // pred_check_branch
          %272 = sbr.rel (%p270) target = $region24
        $region23: #{tpu_custom_call.1} parent=11 // pred_region
          _
        $region24: #{tpu_custom_call.1} parent=11 // pred_fallthru
          _
        // Predicated region
        $region25: #{tpu_custom_call.1} parent=11 // pred_check
          %p273 = pneg %p160
        $region26: #{tpu_custom_call.1} parent=11 // pred_check_branch
          %275 = sbr.rel (%p273) target = $region28
        $region27: #{tpu_custom_call.1} parent=11 // pred_region
          _
        $region28: #{tpu_custom_call.1} parent=11 // pred_fallthru
          _
        // Predicated region
        $region29: #{tpu_custom_call.1} parent=11 // pred_check
          %p276 = pneg %p181
        $region30: #{tpu_custom_call.1} parent=11 // pred_check_branch
          %278 = sbr.rel (%p276) target = $region32
        $region31: #{tpu_custom_call.1} parent=11 // pred_region
          _
        $region32: #{tpu_custom_call.1} parent=11 // pred_fallthru
          _
        // Predicated region
        $region33: #{tpu_custom_call.1} parent=11 // pred_check
          %p279 = pneg %p202
        $region34: #{tpu_custom_call.1} parent=11 // pred_check_branch
          %281 = sbr.rel (%p279) target = $region36
        $region35: #{tpu_custom_call.1} parent=11 // pred_region
          _
        $region36: #{tpu_custom_call.1} parent=11 // pred_fallthru
          _
        // Predicated region
        $region37: #{tpu_custom_call.1} parent=11 // pred_check
          %p282 = pneg %p223
        $region38: #{tpu_custom_call.1} parent=11 // pred_check_branch
          %284 = sbr.rel (%p282) target = $region40
        $region39: #{tpu_custom_call.1} parent=11 // pred_region
          _
        $region40: #{tpu_custom_call.1} parent=11 // pred_fallthru
          _
      $region12: #{tpu_custom_call.1} parent=5 // pred_fallthru
        _
      %p285 = scmp.lt.s32.totalorder %s24, 2
      // Predicated region
      $region41: #{tpu_custom_call.1} parent=5 // pred_check
        %p286 = pneg %p285
      $region42: #{tpu_custom_call.1} parent=5 // pred_check_branch
        %288 = sbr.rel (%p286) target = $region44
      $region43: #{tpu_custom_call.1} parent=5 // pred_region
        // Predicated region
        $region45: #{tpu_custom_call.1} parent=43 // pred_check
          %p289 = pneg %p44
        $region46: #{tpu_custom_call.1} parent=43 // pred_check_branch
          %291 = sbr.rel (%p289) target = $region48
        $region47: #{tpu_custom_call.1} parent=43 // pred_region
          %s292 = sand.u32 %s34, 1
          %s293 = scalar_lea.sflag [#allocation6], %s292
          %s294 = sand.u32 %s34, 1
          %s295 = smul.addr %s294, 8
          %s296 = scalar_lea.vmem [#allocation5], %s295
          %s298 = ssub.s32 128, 128
          %299 = vsyncadd %s293, %s298
          %s300 = smul.addr %s24, 2
          %s301 = smul.addr %s300, 64
          %s302 = scalar_lea.hbm %s0, %s301
          %s304 = sshll.u32 %s296, 4
          %s305 = int_to_ptr.vmem [resolvable:$true] %s304
          %307 = dma.hbm_to_vmem [thread:$0]  %s302, 128, %s305, %s293
        $region48: #{tpu_custom_call.1} parent=43 // pred_fallthru
          _
        // Predicated region
        $region49: #{tpu_custom_call.1} parent=43 // pred_check
          %p308 = pneg %p70
        $region50: #{tpu_custom_call.1} parent=43 // pred_check_branch
          %310 = sbr.rel (%p308) target = $region52
        $region51: #{tpu_custom_call.1} parent=43 // pred_region
          %s311 = sand.u32 %s60, 1
          %s312 = scalar_lea.sflag [#allocation9], %s311
          %s313 = sand.u32 %s60, 1
          %s314 = smul.addr %s313, 8
          %s315 = scalar_lea.vmem [#allocation8], %s314
          %s317 = ssub.s32 128, 128
          %318 = vsyncadd %s312, %s317
          %s319 = smul.addr %s24, 128
          %s320 = scalar_lea.hbm %s1, %s319
          %s322 = sshll.u32 %s315, 4
          %s323 = int_to_ptr.vmem [resolvable:$true] %s322
          %325 = dma.hbm_to_vmem [thread:$0]  %s320, 128, %s323, %s312
        $region52: #{tpu_custom_call.1} parent=43 // pred_fallthru
          _
      $region44: #{tpu_custom_call.1} parent=5 // pred_fallthru
        _
      %p326 = scmp.le.s32.totalorder 1, %s24
      %p327 = scmp.lt.s32.totalorder %s24, 3
      %p328 = pnand %p326, %p327
      %p329 = pneg %p328
      // Predicated region
      $region53: #{tpu_custom_call.1} parent=5 // pred_check
        _
      $region54: #{tpu_custom_call.1} parent=5 // pred_check_branch
        %331 = sbr.rel (%p328) target = $region56
      $region55: #{tpu_custom_call.1} parent=5 // pred_region
        %s332 = ssub.s32 %s24, 1
        %s333 = sand.u32 %s37, 1
        %s334 = scalar_lea.sflag [#allocation6], %s333
        %s335 = sand.u32 %s37, 1
        %s336 = smul.addr %s335, 8
        %s337 = scalar_lea.vmem [#allocation5], %s336
        // Predicated region
        $region57: #{tpu_custom_call.1} parent=55 // pred_check
          %p338 = pneg %p50
        $region58: #{tpu_custom_call.1} parent=55 // pred_check_branch
          %340 = sbr.rel (%p338) target = $region60
        $region59: #{tpu_custom_call.1} parent=55 // pred_region
          %341 = dma.done %s334, 128
        $region60: #{tpu_custom_call.1} parent=55 // pred_fallthru
          _
        %s342 = sand.u32 %s63, 1
        %s343 = scalar_lea.sflag [#allocation9], %s342
        %s344 = sand.u32 %s63, 1
        %s345 = smul.addr %s344, 8
        %s346 = scalar_lea.vmem [#allocation8], %s345
        // Predicated region
        $region61: #{tpu_custom_call.1} parent=55 // pred_check
          %p347 = pneg %p76
        $region62: #{tpu_custom_call.1} parent=55 // pred_check_branch
          %349 = sbr.rel (%p347) target = $region64
        $region63: #{tpu_custom_call.1} parent=55 // pred_region
          %350 = dma.done %s343, 128
        $region64: #{tpu_custom_call.1} parent=55 // pred_fallthru
          _
        %s351 = sand.u32 %s37, 1
        %s352 = scalar_lea.sflag [#allocation6], %s351
        %s353 = sand.u32 %s37, 1
        %s354 = smul.addr %s353, 8
        %s355 = scalar_lea.vmem [#allocation5], %s354
        %p356 = pneg %p50
        %p357 = pneg %p47
        %s358 = sand.u32 %s63, 1
        %s359 = scalar_lea.sflag [#allocation9], %s358
        %s360 = sand.u32 %s63, 1
        %s361 = smul.addr %s360, 8
        %s362 = scalar_lea.vmem [#allocation8], %s361
        %p363 = pneg %p76
        %p364 = pneg %p73
        %p365 = pneg %p97
        %p366 = pneg %p94
        %p367 = pneg %p118
        %p368 = pneg %p115
        %p369 = pneg %p139
        %p370 = pneg %p136
        %p371 = pneg %p160
        %p372 = pneg %p157
        %p373 = pneg %p181
        %p374 = pneg %p178
        %p375 = pneg %p202
        %p376 = pneg %p199
        %p377 = pneg %p223
        %p378 = pneg %p220
        %p379 = pneg %p249
        %p380 = pneg %p246
        %s381 = sand.u32 %s236, 1
        %s382 = scalar_lea.sflag [#allocation7], %s381
        %s383 = sand.u32 %s236, 1
        %s384 = smul.addr %s383, 16
        %s385 = scalar_lea.vmem [#allocation10], %s384
        %v386 = vld [vmem:[%s3] sm:$0xff]
        %v387 = vld [vmem:[%s337] sm:$0xff]
        %v388 = vld [vmem:[%s4] sm:$0xff]
        %390 = vset.pattern.permute.xlu0 0
        %391 = vperm.xlu0 %390, %v388
        %v392 = vpop.permute.xlu0 %391
        %v395 = vcombine.high %v387, %v387
        %vm396 = vcmask 31744
        %v398 = vsel %vm396, %v386, 0
        %vm400 = vcmask 1043456
        %v401 = vsel %vm400, %v387, 0
        %v403 = vsel %vm400, %v395, 0
        %405 = vmatprep.subr.mxu0 0.0
        %406 = vmatpush1.msra.mxu0 0.0
        %407 = vmatprep.subr.mxu0 0.0
        %408 = vmatpush1.msra.mxu0 0.0
        %409 = vmatprep.subr.mxu0 0.0
        %410 = vmatpush1.msra.mxu0 0.0
        %411 = vmatprep.subr.mxu0 0.0
        %412 = vmatpush1.msra.mxu0 0.0
        %413 = vmatprep.subr.mxu0 0.0
        %414 = vmatpush1.msra.mxu0 0.0
        %415 = vmatprep.subr.mxu0 0.0
        %416 = vmatpush1.msra.mxu0 0.0
        %417 = vmatprep.subr.mxu0 0.0
        %418 = vmatpush1.msra.mxu0 0.0
        %419 = vmatprep.subr.mxu0 0.0
        %420 = vmatpush1.msra.mxu0 0.0
        %421 = vmatprep.subr.mxu0 0.0
        %422 = vmatpush1.msra.mxu0 0.0
        %423 = vmatprep.subr.mxu0 0.0
        %424 = vmatpush1.msra.mxu0 0.0
        %425 = vmatprep.subr.mxu0 0.0
        %426 = vmatpush1.msra.mxu0 0.0
        %427 = vmatprep.subr.mxu0 0.0
        %428 = vmatpush1.msra.mxu0 0.0
        %429 = vmatprep.subr.mxu0 0.0
        %430 = vmatpush1.msra.mxu0 0.0
        %431 = vmatprep.subr.mxu0 0.0
        %432 = vmatpush1.msra.mxu0 0.0
        %433 = vmatprep.subr.mxu0 0.0
        %434 = vmatpush1.msra.mxu0 0.0
        %435 = vmatprep.subr.mxu0 %v403
        %436 = vmatpush1.msra.mxu0 %v401
        %437 = vmatprep.subr.mxu0 0.0
        %438 = vmatpush2.msra.mxu0 0.0
        %439 = vmatprep.subr.mxu0 0.0
        %440 = vmatpush2.msra.mxu0 0.0
        %441 = vmatprep.subr.mxu0 0.0
        %442 = vmatpush2.msra.mxu0 0.0
        %443 = vmatprep.subr.mxu0 0.0
        %444 = vmatpush2.msra.mxu0 0.0
        %445 = vmatprep.subr.mxu0 0.0
        %446 = vmatpush2.msra.mxu0 0.0
        %447 = vmatprep.subr.mxu0 0.0
        %448 = vmatpush2.msra.mxu0 0.0
        %449 = vmatprep.subr.mxu0 0.0
        %450 = vmatpush2.msra.mxu0 0.0
        %451 = vmatprep.subr.mxu0 0.0
        %452 = vmatpush2.msra.mxu0 0.0
        %453 = vmatprep.subr.mxu0 0.0
        %454 = vmatpush2.msra.mxu0 0.0
        %455 = vmatprep.subr.mxu0 0.0
        %456 = vmatpush2.msra.mxu0 0.0
        %457 = vmatprep.subr.mxu0 0.0
        %458 = vmatpush2.msra.mxu0 0.0
        %459 = vmatprep.subr.mxu0 0.0
        %460 = vmatpush2.msra.mxu0 0.0
        %461 = vmatprep.subr.mxu0 0.0
        %462 = vmatpush2.msra.mxu0 0.0
        %463 = vmatprep.subr.mxu0 0.0
        %464 = vmatpush2.msra.mxu0 0.0
        %465 = vmatprep.subr.mxu0 0.0
        %466 = vmatpush2.msra.mxu0 0.0
        %467 = vmatprep.subr.mxu0 0.0
        %468 = vmatpush2.msra.mxu0 0.0
        %469 = vmatprep.mubr.f32.mxu0 0.0
        %470 = vmatmul.mubr.f32.gmra.mxu0 %v398
        %v471 = vpop.f32.mrf.mxu0
        %v472 = vadd.f32 %v392, %v471
        %v473 = vpop.f32.mrf.mxu0
        %v474 = vadd.f32 %v392, %v473
        %475 = vdwg.mxu0
        %v476 = vld [vmem:[%s5] sm:$0xff]
        %v477 = vld [vmem:[%s5 + $0x8] sm:$0x1]
        %v478 = vld [vmem:[%s346] sm:$0xff]
        %v479 = vld [vmem:[%s6] sm:$0xff]
        %v480 = vld [vmem:[%s6 + $0x8] sm:$0x1]
        %482 = vset.pattern.permute.xlu0 0
        %483 = vperm.xlu0 %482, %v479
        %v484 = vpop.permute.xlu0 %483
        %487 = vset.pattern.permute.xlu0 0
        %488 = vperm.xlu0 %487, %v480
        %v489 = vpop.permute.xlu0 %488
        %vm491 = vcmask 64512
        %v493 = vsel %vm491, %v476, 0
        %v496 = vsel %vm491, %v477, 0
        %498 = vmatprep.subr.mxu0 0.0
        %499 = vmatpush1.msra.mxu0 0.0
        %500 = vmatprep.subr.mxu0 0.0
        %501 = vmatpush1.msra.mxu0 0.0
        %502 = vmatprep.subr.mxu0 0.0
        %503 = vmatpush1.msra.mxu0 0.0
        %504 = vmatprep.subr.mxu0 0.0
        %505 = vmatpush1.msra.mxu0 0.0
        %506 = vmatprep.subr.mxu0 0.0
        %507 = vmatpush1.msra.mxu0 0.0
        %508 = vmatprep.subr.mxu0 0.0
        %509 = vmatpush1.msra.mxu0 0.0
        %510 = vmatprep.subr.mxu0 0.0
        %511 = vmatpush1.msra.mxu0 0.0
        %512 = vmatprep.subr.mxu0 0.0
        %513 = vmatpush1.msra.mxu0 0.0
        %514 = vmatprep.subr.mxu0 0.0
        %515 = vmatpush1.msra.mxu0 0.0
        %516 = vmatprep.subr.mxu0 0.0
        %517 = vmatpush1.msra.mxu0 0.0
        %518 = vmatprep.subr.mxu0 0.0
        %519 = vmatpush1.msra.mxu0 0.0
        %520 = vmatprep.subr.mxu0 0.0
        %521 = vmatpush1.msra.mxu0 0.0
        %522 = vmatprep.subr.mxu0 0.0
        %523 = vmatpush1.msra.mxu0 0.0
        %524 = vmatprep.subr.mxu0 0.0
        %525 = vmatpush1.msra.mxu0 0.0
        %526 = vmatprep.subr.mxu0 0.0
        %527 = vmatpush1.msra.mxu0 0.0
        %528 = vmatprep.subr.mxu0 0.0
        %529 = vmatpush1.msra.mxu0 %v478
        %530 = vmatprep.subr.mxu0 0.0
        %531 = vmatpush2.msra.mxu0 0.0
        %532 = vmatprep.subr.mxu0 0.0
        %533 = vmatpush2.msra.mxu0 0.0
        %534 = vmatprep.subr.mxu0 0.0
        %535 = vmatpush2.msra.mxu0 0.0
        %536 = vmatprep.subr.mxu0 0.0
        %537 = vmatpush2.msra.mxu0 0.0
        %538 = vmatprep.subr.mxu0 0.0
        %539 = vmatpush2.msra.mxu0 0.0
        %540 = vmatprep.subr.mxu0 0.0
        %541 = vmatpush2.msra.mxu0 0.0
        %542 = vmatprep.subr.mxu0 0.0
        %543 = vmatpush2.msra.mxu0 0.0
        %544 = vmatprep.subr.mxu0 0.0
        %545 = vmatpush2.msra.mxu0 0.0
        %546 = vmatprep.subr.mxu0 0.0
        %547 = vmatpush2.msra.mxu0 0.0
        %548 = vmatprep.subr.mxu0 0.0
        %549 = vmatpush2.msra.mxu0 0.0
        %550 = vmatprep.subr.mxu0 0.0
        %551 = vmatpush2.msra.mxu0 0.0
        %552 = vmatprep.subr.mxu0 0.0
        %553 = vmatpush2.msra.mxu0 0.0
        %554 = vmatprep.subr.mxu0 0.0
        %555 = vmatpush2.msra.mxu0 0.0
        %556 = vmatprep.subr.mxu0 0.0
        %557 = vmatpush2.msra.mxu0 0.0
        %558 = vmatprep.subr.mxu0 0.0
        %559 = vmatpush2.msra.mxu0 0.0
        %560 = vmatprep.subr.mxu0 0.0
        %561 = vmatpush2.msra.mxu0 0.0
        %562 = vmatprep.mubr.f32.mxu0 0.0
        %563 = vmatmul.mubr.f32.gmra.mxu0 %v493
        %v564 = vpop.f32.mrf.mxu0
        %v565 = vadd.f32 %v484, %v564
        %v566 = vpop.f32.mrf.mxu0
        %567 = vmatprep.mubr.f32.mxu0 0.0
        %568 = vmatmul.mubr.f32.gmra.mxu0 %v496
        %v569 = vpop.f32.mrf.mxu0
        %v570 = vadd.f32 %v489, %v569
        %v571 = vpop.f32.mrf.mxu0
        %572 = vdwg.mxu0
        %v573 = vld [vmem:[%s2] sm:$0xff]
        %v575 = vsel %vm491, %v565, 0
        %v578 = vsel %vm491, %v570, 0
        %580 = vmatprep.subr.mxu0 0.0
        %581 = vmatpush1.msra.mxu0 0.0
        %582 = vmatprep.subr.mxu0 0.0
        %583 = vmatpush1.msra.mxu0 0.0
        %584 = vmatprep.subr.mxu0 0.0
        %585 = vmatpush1.msra.mxu0 0.0
        %586 = vmatprep.subr.mxu0 0.0
        %587 = vmatpush1.msra.mxu0 0.0
        %588 = vmatprep.subr.mxu0 0.0
        %589 = vmatpush1.msra.mxu0 0.0
        %590 = vmatprep.subr.mxu0 0.0
        %591 = vmatpush1.msra.mxu0 0.0
        %592 = vmatprep.subr.mxu0 0.0
        %593 = vmatpush1.msra.mxu0 0.0
        %594 = vmatprep.subr.mxu0 0.0
        %595 = vmatpush1.msra.mxu0 0.0
        %596 = vmatprep.subr.mxu0 0.0
        %597 = vmatpush1.msra.mxu0 0.0
        %598 = vmatprep.subr.mxu0 0.0
        %599 = vmatpush1.msra.mxu0 0.0
        %600 = vmatprep.subr.mxu0 0.0
        %601 = vmatpush1.msra.mxu0 0.0
        %602 = vmatprep.subr.mxu0 0.0
        %603 = vmatpush1.msra.mxu0 0.0
        %604 = vmatprep.subr.mxu0 0.0
        %605 = vmatpush1.msra.mxu0 0.0
        %606 = vmatprep.subr.mxu0 0.0
        %607 = vmatpush1.msra.mxu0 0.0
        %608 = vmatprep.subr.mxu0 0.0
        %609 = vmatpush1.msra.mxu0 0.0
        %610 = vmatprep.subr.mxu0 0.0
        %611 = vmatpush1.msra.mxu0 %v573
        %612 = vmatprep.subr.mxu0 0.0
        %613 = vmatpush2.msra.mxu0 0.0
        %614 = vmatprep.subr.mxu0 0.0
        %615 = vmatpush2.msra.mxu0 0.0
        %616 = vmatprep.subr.mxu0 0.0
        %617 = vmatpush2.msra.mxu0 0.0
        %618 = vmatprep.subr.mxu0 0.0
        %619 = vmatpush2.msra.mxu0 0.0
        %620 = vmatprep.subr.mxu0 0.0
        %621 = vmatpush2.msra.mxu0 0.0
        %622 = vmatprep.subr.mxu0 0.0
        %623 = vmatpush2.msra.mxu0 0.0
        %624 = vmatprep.subr.mxu0 0.0
        %625 = vmatpush2.msra.mxu0 0.0
        %626 = vmatprep.subr.mxu0 0.0
        %627 = vmatpush2.msra.mxu0 0.0
        %628 = vmatprep.subr.mxu0 0.0
        %629 = vmatpush2.msra.mxu0 0.0
        %630 = vmatprep.subr.mxu0 0.0
        %631 = vmatpush2.msra.mxu0 0.0
        %632 = vmatprep.subr.mxu0 0.0
        %633 = vmatpush2.msra.mxu0 0.0
        %634 = vmatprep.subr.mxu0 0.0
        %635 = vmatpush2.msra.mxu0 0.0
        %636 = vmatprep.subr.mxu0 0.0
        %637 = vmatpush2.msra.mxu0 0.0
        %638 = vmatprep.subr.mxu0 0.0
        %639 = vmatpush2.msra.mxu0 0.0
        %640 = vmatprep.subr.mxu0 0.0
        %641 = vmatpush2.msra.mxu0 0.0
        %642 = vmatprep.subr.mxu0 0.0
        %643 = vmatpush2.msra.mxu0 0.0
        %644 = vmatprep.mubr.f32.mxu0 0.0
        %645 = vmatmul.mubr.f32.gmra.mxu0 %v575
        %v646 = vpop.f32.mrf.mxu0
        %v647 = vadd.f32 0.0, %v646
        %v648 = vpop.f32.mrf.mxu0
        %649 = vmatprep.mubr.f32.mxu0 0.0
        %650 = vmatmul.mubr.f32.gmra.mxu0 %v578
        %v651 = vpop.f32.mrf.mxu0
        %v652 = vadd.f32 0.0, %v651
        %v653 = vpop.f32.mrf.mxu0
        %654 = vdwg.mxu0
        %655 = vrot.lane.b32.xlu0 %v565, 120
        %v656 = vpop.permute.xlu0 %655
        %657 = vrot.lane.b32.xlu0 %v570, 120
        %v658 = vpop.permute.xlu0 %657
        %v659 = vsel %vm491, %v656, 0
        %v661 = vsel %vm491, %v658, 0
        %663 = vmatprep.subr.mxu0 0.0
        %664 = vmatpush1.msra.mxu0 0.0
        %665 = vmatprep.subr.mxu0 0.0
        %666 = vmatpush1.msra.mxu0 0.0
        %667 = vmatprep.subr.mxu0 0.0
        %668 = vmatpush1.msra.mxu0 0.0
        %669 = vmatprep.subr.mxu0 0.0
        %670 = vmatpush1.msra.mxu0 0.0
        %671 = vmatprep.subr.mxu0 0.0
        %672 = vmatpush1.msra.mxu0 0.0
        %673 = vmatprep.subr.mxu0 0.0
        %674 = vmatpush1.msra.mxu0 0.0
        %675 = vmatprep.subr.mxu0 0.0
        %676 = vmatpush1.msra.mxu0 0.0
        %677 = vmatprep.subr.mxu0 0.0
        %678 = vmatpush1.msra.mxu0 0.0
        %679 = vmatprep.subr.mxu0 0.0
        %680 = vmatpush1.msra.mxu0 0.0
        %681 = vmatprep.subr.mxu0 0.0
        %682 = vmatpush1.msra.mxu0 0.0
        %683 = vmatprep.subr.mxu0 0.0
        %684 = vmatpush1.msra.mxu0 0.0
        %685 = vmatprep.subr.mxu0 0.0
        %686 = vmatpush1.msra.mxu0 0.0
        %687 = vmatprep.subr.mxu0 0.0
        %688 = vmatpush1.msra.mxu0 0.0
        %689 = vmatprep.subr.mxu0 0.0
        %690 = vmatpush1.msra.mxu0 0.0
        %691 = vmatprep.subr.mxu0 0.0
        %692 = vmatpush1.msra.mxu0 0.0
        %693 = vmatprep.subr.mxu0 0.0
        %694 = vmatpush1.msra.mxu0 %v573
        %695 = vmatprep.subr.mxu0 0.0
        %696 = vmatpush2.msra.mxu0 0.0
        %697 = vmatprep.subr.mxu0 0.0
        %698 = vmatpush2.msra.mxu0 0.0
        %699 = vmatprep.subr.mxu0 0.0
        %700 = vmatpush2.msra.mxu0 0.0
        %701 = vmatprep.subr.mxu0 0.0
        %702 = vmatpush2.msra.mxu0 0.0
        %703 = vmatprep.subr.mxu0 0.0
        %704 = vmatpush2.msra.mxu0 0.0
        %705 = vmatprep.subr.mxu0 0.0
        %706 = vmatpush2.msra.mxu0 0.0
        %707 = vmatprep.subr.mxu0 0.0
        %708 = vmatpush2.msra.mxu0 0.0
        %709 = vmatprep.subr.mxu0 0.0
        %710 = vmatpush2.msra.mxu0 0.0
        %711 = vmatprep.subr.mxu0 0.0
        %712 = vmatpush2.msra.mxu0 0.0
        %713 = vmatprep.subr.mxu0 0.0
        %714 = vmatpush2.msra.mxu0 0.0
        %715 = vmatprep.subr.mxu0 0.0
        %716 = vmatpush2.msra.mxu0 0.0
        %717 = vmatprep.subr.mxu0 0.0
        %718 = vmatpush2.msra.mxu0 0.0
        %719 = vmatprep.subr.mxu0 0.0
        %720 = vmatpush2.msra.mxu0 0.0
        %721 = vmatprep.subr.mxu0 0.0
        %722 = vmatpush2.msra.mxu0 0.0
        %723 = vmatprep.subr.mxu0 0.0
        %724 = vmatpush2.msra.mxu0 0.0
        %725 = vmatprep.subr.mxu0 0.0
        %726 = vmatpush2.msra.mxu0 0.0
        %727 = vmatprep.mubr.f32.mxu0 0.0
        %728 = vmatmul.mubr.f32.gmra.mxu0 %v659
        %v729 = vpop.f32.mrf.mxu0
        %v730 = vadd.f32 0.0, %v729
        %v731 = vpop.f32.mrf.mxu0
        %732 = vmatprep.mubr.f32.mxu0 0.0
        %733 = vmatmul.mubr.f32.gmra.mxu0 %v661
        %v734 = vpop.f32.mrf.mxu0
        %v735 = vadd.f32 0.0, %v734
        %v736 = vpop.f32.mrf.mxu0
        %737 = vdwg.mxu0
        %738 = vrot.lane.b32.xlu0 %v565, 112
        %v739 = vpop.permute.xlu0 %738
        %740 = vrot.lane.b32.xlu0 %v570, 112
        %v741 = vpop.permute.xlu0 %740
        %v742 = vsel %vm491, %v739, 0
        %v744 = vsel %vm491, %v741, 0
        %746 = vmatprep.subr.mxu0 0.0
        %747 = vmatpush1.msra.mxu0 0.0
        %748 = vmatprep.subr.mxu0 0.0
        %749 = vmatpush1.msra.mxu0 0.0
        %750 = vmatprep.subr.mxu0 0.0
        %751 = vmatpush1.msra.mxu0 0.0
        %752 = vmatprep.subr.mxu0 0.0
        %753 = vmatpush1.msra.mxu0 0.0
        %754 = vmatprep.subr.mxu0 0.0
        %755 = vmatpush1.msra.mxu0 0.0
        %756 = vmatprep.subr.mxu0 0.0
        %757 = vmatpush1.msra.mxu0 0.0
        %758 = vmatprep.subr.mxu0 0.0
        %759 = vmatpush1.msra.mxu0 0.0
        %760 = vmatprep.subr.mxu0 0.0
        %761 = vmatpush1.msra.mxu0 0.0
        %762 = vmatprep.subr.mxu0 0.0
        %763 = vmatpush1.msra.mxu0 0.0
        %764 = vmatprep.subr.mxu0 0.0
        %765 = vmatpush1.msra.mxu0 0.0
        %766 = vmatprep.subr.mxu0 0.0
        %767 = vmatpush1.msra.mxu0 0.0
        %768 = vmatprep.subr.mxu0 0.0
        %769 = vmatpush1.msra.mxu0 0.0
        %770 = vmatprep.subr.mxu0 0.0
        %771 = vmatpush1.msra.mxu0 0.0
        %772 = vmatprep.subr.mxu0 0.0
        %773 = vmatpush1.msra.mxu0 0.0
        %774 = vmatprep.subr.mxu0 0.0
        %775 = vmatpush1.msra.mxu0 0.0
        %776 = vmatprep.subr.mxu0 0.0
        %777 = vmatpush1.msra.mxu0 %v573
        %778 = vmatprep.subr.mxu0 0.0
        %779 = vmatpush2.msra.mxu0 0.0
        %780 = vmatprep.subr.mxu0 0.0
        %781 = vmatpush2.msra.mxu0 0.0
        %782 = vmatprep.subr.mxu0 0.0
        %783 = vmatpush2.msra.mxu0 0.0
        %784 = vmatprep.subr.mxu0 0.0
        %785 = vmatpush2.msra.mxu0 0.0
        %786 = vmatprep.subr.mxu0 0.0
        %787 = vmatpush2.msra.mxu0 0.0
        %788 = vmatprep.subr.mxu0 0.0
        %789 = vmatpush2.msra.mxu0 0.0
        %790 = vmatprep.subr.mxu0 0.0
        %791 = vmatpush2.msra.mxu0 0.0
        %792 = vmatprep.subr.mxu0 0.0
        %793 = vmatpush2.msra.mxu0 0.0
        %794 = vmatprep.subr.mxu0 0.0
        %795 = vmatpush2.msra.mxu0 0.0
        %796 = vmatprep.subr.mxu0 0.0
        %797 = vmatpush2.msra.mxu0 0.0
        %798 = vmatprep.subr.mxu0 0.0
        %799 = vmatpush2.msra.mxu0 0.0
        %800 = vmatprep.subr.mxu0 0.0
        %801 = vmatpush2.msra.mxu0 0.0
        %802 = vmatprep.subr.mxu0 0.0
        %803 = vmatpush2.msra.mxu0 0.0
        %804 = vmatprep.subr.mxu0 0.0
        %805 = vmatpush2.msra.mxu0 0.0
        %806 = vmatprep.subr.mxu0 0.0
        %807 = vmatpush2.msra.mxu0 0.0
        %808 = vmatprep.subr.mxu0 0.0
        %809 = vmatpush2.msra.mxu0 0.0
        %810 = vmatprep.mubr.f32.mxu0 0.0
        %811 = vmatmul.mubr.f32.gmra.mxu0 %v742
        %v812 = vpop.f32.mrf.mxu0
        %v813 = vadd.f32 0.0, %v812
        %v814 = vpop.f32.mrf.mxu0
        %815 = vmatprep.mubr.f32.mxu0 0.0
        %816 = vmatmul.mubr.f32.gmra.mxu0 %v744
        %v817 = vpop.f32.mrf.mxu0
        %v818 = vadd.f32 0.0, %v817
        %v819 = vpop.f32.mrf.mxu0
        %820 = vdwg.mxu0
        %821 = vrot.lane.b32.xlu0 %v565, 104
        %v822 = vpop.permute.xlu0 %821
        %823 = vrot.lane.b32.xlu0 %v570, 104
        %v824 = vpop.permute.xlu0 %823
        %v825 = vsel %vm491, %v822, 0
        %v827 = vsel %vm491, %v824, 0
        %829 = vmatprep.subr.mxu0 0.0
        %830 = vmatpush1.msra.mxu0 0.0
        %831 = vmatprep.subr.mxu0 0.0
        %832 = vmatpush1.msra.mxu0 0.0
        %833 = vmatprep.subr.mxu0 0.0
        %834 = vmatpush1.msra.mxu0 0.0
        %835 = vmatprep.subr.mxu0 0.0
        %836 = vmatpush1.msra.mxu0 0.0
        %837 = vmatprep.subr.mxu0 0.0
        %838 = vmatpush1.msra.mxu0 0.0
        %839 = vmatprep.subr.mxu0 0.0
        %840 = vmatpush1.msra.mxu0 0.0
        %841 = vmatprep.subr.mxu0 0.0
        %842 = vmatpush1.msra.mxu0 0.0
        %843 = vmatprep.subr.mxu0 0.0
        %844 = vmatpush1.msra.mxu0 0.0
        %845 = vmatprep.subr.mxu0 0.0
        %846 = vmatpush1.msra.mxu0 0.0
        %847 = vmatprep.subr.mxu0 0.0
        %848 = vmatpush1.msra.mxu0 0.0
        %849 = vmatprep.subr.mxu0 0.0
        %850 = vmatpush1.msra.mxu0 0.0
        %851 = vmatprep.subr.mxu0 0.0
        %852 = vmatpush1.msra.mxu0 0.0
        %853 = vmatprep.subr.mxu0 0.0
        %854 = vmatpush1.msra.mxu0 0.0
        %855 = vmatprep.subr.mxu0 0.0
        %856 = vmatpush1.msra.mxu0 0.0
        %857 = vmatprep.subr.mxu0 0.0
        %858 = vmatpush1.msra.mxu0 0.0
        %859 = vmatprep.subr.mxu0 0.0
        %860 = vmatpush1.msra.mxu0 %v573
        %861 = vmatprep.subr.mxu0 0.0
        %862 = vmatpush2.msra.mxu0 0.0
        %863 = vmatprep.subr.mxu0 0.0
        %864 = vmatpush2.msra.mxu0 0.0
        %865 = vmatprep.subr.mxu0 0.0
        %866 = vmatpush2.msra.mxu0 0.0
        %867 = vmatprep.subr.mxu0 0.0
        %868 = vmatpush2.msra.mxu0 0.0
        %869 = vmatprep.subr.mxu0 0.0
        %870 = vmatpush2.msra.mxu0 0.0
        %871 = vmatprep.subr.mxu0 0.0
        %872 = vmatpush2.msra.mxu0 0.0
        %873 = vmatprep.subr.mxu0 0.0
        %874 = vmatpush2.msra.mxu0 0.0
        %875 = vmatprep.subr.mxu0 0.0
        %876 = vmatpush2.msra.mxu0 0.0
        %877 = vmatprep.subr.mxu0 0.0
        %878 = vmatpush2.msra.mxu0 0.0
        %879 = vmatprep.subr.mxu0 0.0
        %880 = vmatpush2.msra.mxu0 0.0
        %881 = vmatprep.subr.mxu0 0.0
        %882 = vmatpush2.msra.mxu0 0.0
        %883 = vmatprep.subr.mxu0 0.0
        %884 = vmatpush2.msra.mxu0 0.0
        %885 = vmatprep.subr.mxu0 0.0
        %886 = vmatpush2.msra.mxu0 0.0
        %887 = vmatprep.subr.mxu0 0.0
        %888 = vmatpush2.msra.mxu0 0.0
        %889 = vmatprep.subr.mxu0 0.0
        %890 = vmatpush2.msra.mxu0 0.0
        %891 = vmatprep.subr.mxu0 0.0
        %892 = vmatpush2.msra.mxu0 0.0
        %893 = vmatprep.mubr.f32.mxu0 0.0
        %894 = vmatmul.mubr.f32.gmra.mxu0 %v825
        %v895 = vpop.f32.mrf.mxu0
        %v896 = vadd.f32 0.0, %v895
        %v897 = vpop.f32.mrf.mxu0
        %898 = vmatprep.mubr.f32.mxu0 0.0
        %899 = vmatmul.mubr.f32.gmra.mxu0 %v827
        %v900 = vpop.f32.mrf.mxu0
        %v901 = vadd.f32 0.0, %v900
        %v902 = vpop.f32.mrf.mxu0
        %903 = vdwg.mxu0
        %904 = vrot.lane.b32.xlu0 %v565, 96
        %v905 = vpop.permute.xlu0 %904
        %906 = vrot.lane.b32.xlu0 %v570, 96
        %v907 = vpop.permute.xlu0 %906
        %v908 = vsel %vm491, %v905, 0
        %v910 = vsel %vm491, %v907, 0
        %912 = vmatprep.subr.mxu0 0.0
        %913 = vmatpush1.msra.mxu0 0.0
        %914 = vmatprep.subr.mxu0 0.0
        %915 = vmatpush1.msra.mxu0 0.0
        %916 = vmatprep.subr.mxu0 0.0
        %917 = vmatpush1.msra.mxu0 0.0
        %918 = vmatprep.subr.mxu0 0.0
        %919 = vmatpush1.msra.mxu0 0.0
        %920 = vmatprep.subr.mxu0 0.0
        %921 = vmatpush1.msra.mxu0 0.0
        %922 = vmatprep.subr.mxu0 0.0
        %923 = vmatpush1.msra.mxu0 0.0
        %924 = vmatprep.subr.mxu0 0.0
        %925 = vmatpush1.msra.mxu0 0.0
        %926 = vmatprep.subr.mxu0 0.0
        %927 = vmatpush1.msra.mxu0 0.0
        %928 = vmatprep.subr.mxu0 0.0
        %929 = vmatpush1.msra.mxu0 0.0
        %930 = vmatprep.subr.mxu0 0.0
        %931 = vmatpush1.msra.mxu0 0.0
        %932 = vmatprep.subr.mxu0 0.0
        %933 = vmatpush1.msra.mxu0 0.0
        %934 = vmatprep.subr.mxu0 0.0
        %935 = vmatpush1.msra.mxu0 0.0
        %936 = vmatprep.subr.mxu0 0.0
        %937 = vmatpush1.msra.mxu0 0.0
        %938 = vmatprep.subr.mxu0 0.0
        %939 = vmatpush1.msra.mxu0 0.0
        %940 = vmatprep.subr.mxu0 0.0
        %941 = vmatpush1.msra.mxu0 0.0
        %942 = vmatprep.subr.mxu0 0.0
        %943 = vmatpush1.msra.mxu0 %v573
        %944 = vmatprep.subr.mxu0 0.0
        %945 = vmatpush2.msra.mxu0 0.0
        %946 = vmatprep.subr.mxu0 0.0
        %947 = vmatpush2.msra.mxu0 0.0
        %948 = vmatprep.subr.mxu0 0.0
        %949 = vmatpush2.msra.mxu0 0.0
        %950 = vmatprep.subr.mxu0 0.0
        %951 = vmatpush2.msra.mxu0 0.0
        %952 = vmatprep.subr.mxu0 0.0
        %953 = vmatpush2.msra.mxu0 0.0
        %954 = vmatprep.subr.mxu0 0.0
        %955 = vmatpush2.msra.mxu0 0.0
        %956 = vmatprep.subr.mxu0 0.0
        %957 = vmatpush2.msra.mxu0 0.0
        %958 = vmatprep.subr.mxu0 0.0
        %959 = vmatpush2.msra.mxu0 0.0
        %960 = vmatprep.subr.mxu0 0.0
        %961 = vmatpush2.msra.mxu0 0.0
        %962 = vmatprep.subr.mxu0 0.0
        %963 = vmatpush2.msra.mxu0 0.0
        %964 = vmatprep.subr.mxu0 0.0
        %965 = vmatpush2.msra.mxu0 0.0
        %966 = vmatprep.subr.mxu0 0.0
        %967 = vmatpush2.msra.mxu0 0.0
        %968 = vmatprep.subr.mxu0 0.0
        %969 = vmatpush2.msra.mxu0 0.0
        %970 = vmatprep.subr.mxu0 0.0
        %971 = vmatpush2.msra.mxu0 0.0
        %972 = vmatprep.subr.mxu0 0.0
        %973 = vmatpush2.msra.mxu0 0.0
        %974 = vmatprep.subr.mxu0 0.0
        %975 = vmatpush2.msra.mxu0 0.0
        %976 = vmatprep.mubr.f32.mxu0 0.0
        %977 = vmatmul.mubr.f32.gmra.mxu0 %v908
        %v978 = vpop.f32.mrf.mxu0
        %v979 = vadd.f32 0.0, %v978
        %v980 = vpop.f32.mrf.mxu0
        %981 = vmatprep.mubr.f32.mxu0 0.0
        %982 = vmatmul.mubr.f32.gmra.mxu0 %v910
        %v983 = vpop.f32.mrf.mxu0
        %v984 = vadd.f32 0.0, %v983
        %v985 = vpop.f32.mrf.mxu0
        %986 = vdwg.mxu0
        %987 = vrot.lane.b32.xlu0 %v565, 88
        %v988 = vpop.permute.xlu0 %987
        %989 = vrot.lane.b32.xlu0 %v570, 88
        %v990 = vpop.permute.xlu0 %989
        %v991 = vsel %vm491, %v988, 0
        %v993 = vsel %vm491, %v990, 0
        %995 = vmatprep.subr.mxu0 0.0
        %996 = vmatpush1.msra.mxu0 0.0
        %997 = vmatprep.subr.mxu0 0.0
        %998 = vmatpush1.msra.mxu0 0.0
        %999 = vmatprep.subr.mxu0 0.0
        %1000 = vmatpush1.msra.mxu0 0.0
        %1001 = vmatprep.subr.mxu0 0.0
        %1002 = vmatpush1.msra.mxu0 0.0
        %1003 = vmatprep.subr.mxu0 0.0
        %1004 = vmatpush1.msra.mxu0 0.0
        %1005 = vmatprep.subr.mxu0 0.0
        %1006 = vmatpush1.msra.mxu0 0.0
        %1007 = vmatprep.subr.mxu0 0.0
        %1008 = vmatpush1.msra.mxu0 0.0
        %1009 = vmatprep.subr.mxu0 0.0
        %1010 = vmatpush1.msra.mxu0 0.0
        %1011 = vmatprep.subr.mxu0 0.0
        %1012 = vmatpush1.msra.mxu0 0.0
        %1013 = vmatprep.subr.mxu0 0.0
        %1014 = vmatpush1.msra.mxu0 0.0
        %1015 = vmatprep.subr.mxu0 0.0
        %1016 = vmatpush1.msra.mxu0 0.0
        %1017 = vmatprep.subr.mxu0 0.0
        %1018 = vmatpush1.msra.mxu0 0.0
        %1019 = vmatprep.subr.mxu0 0.0
        %1020 = vmatpush1.msra.mxu0 0.0
        %1021 = vmatprep.subr.mxu0 0.0
        %1022 = vmatpush1.msra.mxu0 0.0
        %1023 = vmatprep.subr.mxu0 0.0
        %1024 = vmatpush1.msra.mxu0 0.0
        %1025 = vmatprep.subr.mxu0 0.0
        %1026 = vmatpush1.msra.mxu0 %v573
        %1027 = vmatprep.subr.mxu0 0.0
        %1028 = vmatpush2.msra.mxu0 0.0
        %1029 = vmatprep.subr.mxu0 0.0
        %1030 = vmatpush2.msra.mxu0 0.0
        %1031 = vmatprep.subr.mxu0 0.0
        %1032 = vmatpush2.msra.mxu0 0.0
        %1033 = vmatprep.subr.mxu0 0.0
        %1034 = vmatpush2.msra.mxu0 0.0
        %1035 = vmatprep.subr.mxu0 0.0
        %1036 = vmatpush2.msra.mxu0 0.0
        %1037 = vmatprep.subr.mxu0 0.0
        %1038 = vmatpush2.msra.mxu0 0.0
        %1039 = vmatprep.subr.mxu0 0.0
        %1040 = vmatpush2.msra.mxu0 0.0
        %1041 = vmatprep.subr.mxu0 0.0
        %1042 = vmatpush2.msra.mxu0 0.0
        %1043 = vmatprep.subr.mxu0 0.0
        %1044 = vmatpush2.msra.mxu0 0.0
        %1045 = vmatprep.subr.mxu0 0.0
        %1046 = vmatpush2.msra.mxu0 0.0
        %1047 = vmatprep.subr.mxu0 0.0
        %1048 = vmatpush2.msra.mxu0 0.0
        %1049 = vmatprep.subr.mxu0 0.0
        %1050 = vmatpush2.msra.mxu0 0.0
        %1051 = vmatprep.subr.mxu0 0.0
        %1052 = vmatpush2.msra.mxu0 0.0
        %1053 = vmatprep.subr.mxu0 0.0
        %1054 = vmatpush2.msra.mxu0 0.0
        %1055 = vmatprep.subr.mxu0 0.0
        %1056 = vmatpush2.msra.mxu0 0.0
        %1057 = vmatprep.subr.mxu0 0.0
        %1058 = vmatpush2.msra.mxu0 0.0
        %1059 = vmatprep.mubr.f32.mxu0 0.0
        %1060 = vmatmul.mubr.f32.gmra.mxu0 %v991
        %v1061 = vpop.f32.mrf.mxu0
        %v1062 = vadd.f32 0.0, %v1061
        %v1063 = vpop.f32.mrf.mxu0
        %1064 = vmatprep.mubr.f32.mxu0 0.0
        %1065 = vmatmul.mubr.f32.gmra.mxu0 %v993
        %v1066 = vpop.f32.mrf.mxu0
        %v1067 = vadd.f32 0.0, %v1066
        %v1068 = vpop.f32.mrf.mxu0
        %1069 = vdwg.mxu0
        %1070 = vrot.lane.b32.xlu0 %v565, 80
        %v1071 = vpop.permute.xlu0 %1070
        %1072 = vrot.lane.b32.xlu0 %v570, 80
        %v1073 = vpop.permute.xlu0 %1072
        %v1074 = vsel %vm491, %v1071, 0
        %v1076 = vsel %vm491, %v1073, 0
        %1078 = vmatprep.subr.mxu0 0.0
        %1079 = vmatpush1.msra.mxu0 0.0
        %1080 = vmatprep.subr.mxu0 0.0
        %1081 = vmatpush1.msra.mxu0 0.0
        %1082 = vmatprep.subr.mxu0 0.0
        %1083 = vmatpush1.msra.mxu0 0.0
        %1084 = vmatprep.subr.mxu0 0.0
        %1085 = vmatpush1.msra.mxu0 0.0
        %1086 = vmatprep.subr.mxu0 0.0
        %1087 = vmatpush1.msra.mxu0 0.0
        %1088 = vmatprep.subr.mxu0 0.0
        %1089 = vmatpush1.msra.mxu0 0.0
        %1090 = vmatprep.subr.mxu0 0.0
        %1091 = vmatpush1.msra.mxu0 0.0
        %1092 = vmatprep.subr.mxu0 0.0
        %1093 = vmatpush1.msra.mxu0 0.0
        %1094 = vmatprep.subr.mxu0 0.0
        %1095 = vmatpush1.msra.mxu0 0.0
        %1096 = vmatprep.subr.mxu0 0.0
        %1097 = vmatpush1.msra.mxu0 0.0
        %1098 = vmatprep.subr.mxu0 0.0
        %1099 = vmatpush1.msra.mxu0 0.0
        %1100 = vmatprep.subr.mxu0 0.0
        %1101 = vmatpush1.msra.mxu0 0.0
        %1102 = vmatprep.subr.mxu0 0.0
        %1103 = vmatpush1.msra.mxu0 0.0
        %1104 = vmatprep.subr.mxu0 0.0
        %1105 = vmatpush1.msra.mxu0 0.0
        %1106 = vmatprep.subr.mxu0 0.0
        %1107 = vmatpush1.msra.mxu0 0.0
        %1108 = vmatprep.subr.mxu0 0.0
        %1109 = vmatpush1.msra.mxu0 %v573
        %1110 = vmatprep.subr.mxu0 0.0
        %1111 = vmatpush2.msra.mxu0 0.0
        %1112 = vmatprep.subr.mxu0 0.0
        %1113 = vmatpush2.msra.mxu0 0.0
        %1114 = vmatprep.subr.mxu0 0.0
        %1115 = vmatpush2.msra.mxu0 0.0
        %1116 = vmatprep.subr.mxu0 0.0
        %1117 = vmatpush2.msra.mxu0 0.0
        %1118 = vmatprep.subr.mxu0 0.0
        %1119 = vmatpush2.msra.mxu0 0.0
        %1120 = vmatprep.subr.mxu0 0.0
        %1121 = vmatpush2.msra.mxu0 0.0
        %1122 = vmatprep.subr.mxu0 0.0
        %1123 = vmatpush2.msra.mxu0 0.0
        %1124 = vmatprep.subr.mxu0 0.0
        %1125 = vmatpush2.msra.mxu0 0.0
        %1126 = vmatprep.subr.mxu0 0.0
        %1127 = vmatpush2.msra.mxu0 0.0
        %1128 = vmatprep.subr.mxu0 0.0
        %1129 = vmatpush2.msra.mxu0 0.0
        %1130 = vmatprep.subr.mxu0 0.0
        %1131 = vmatpush2.msra.mxu0 0.0
        %1132 = vmatprep.subr.mxu0 0.0
        %1133 = vmatpush2.msra.mxu0 0.0
        %1134 = vmatprep.subr.mxu0 0.0
        %1135 = vmatpush2.msra.mxu0 0.0
        %1136 = vmatprep.subr.mxu0 0.0
        %1137 = vmatpush2.msra.mxu0 0.0
        %1138 = vmatprep.subr.mxu0 0.0
        %1139 = vmatpush2.msra.mxu0 0.0
        %1140 = vmatprep.subr.mxu0 0.0
        %1141 = vmatpush2.msra.mxu0 0.0
        %1142 = vmatprep.mubr.f32.mxu0 0.0
        %1143 = vmatmul.mubr.f32.gmra.mxu0 %v1074
        %v1144 = vpop.f32.mrf.mxu0
        %v1145 = vadd.f32 0.0, %v1144
        %v1146 = vpop.f32.mrf.mxu0
        %1147 = vmatprep.mubr.f32.mxu0 0.0
        %1148 = vmatmul.mubr.f32.gmra.mxu0 %v1076
        %v1149 = vpop.f32.mrf.mxu0
        %v1150 = vadd.f32 0.0, %v1149
        %v1151 = vpop.f32.mrf.mxu0
        %1152 = vdwg.mxu0
        %1153 = vrot.lane.b32.xlu0 %v565, 72
        %v1154 = vpop.permute.xlu0 %1153
        %1155 = vrot.lane.b32.xlu0 %v570, 72
        %v1156 = vpop.permute.xlu0 %1155
        %v1157 = vsel %vm491, %v1154, 0
        %v1159 = vsel %vm491, %v1156, 0
        %1161 = vmatprep.subr.mxu0 0.0
        %1162 = vmatpush1.msra.mxu0 0.0
        %1163 = vmatprep.subr.mxu0 0.0
        %1164 = vmatpush1.msra.mxu0 0.0
        %1165 = vmatprep.subr.mxu0 0.0
        %1166 = vmatpush1.msra.mxu0 0.0
        %1167 = vmatprep.subr.mxu0 0.0
        %1168 = vmatpush1.msra.mxu0 0.0
        %1169 = vmatprep.subr.mxu0 0.0
        %1170 = vmatpush1.msra.mxu0 0.0
        %1171 = vmatprep.subr.mxu0 0.0
        %1172 = vmatpush1.msra.mxu0 0.0
        %1173 = vmatprep.subr.mxu0 0.0
        %1174 = vmatpush1.msra.mxu0 0.0
        %1175 = vmatprep.subr.mxu0 0.0
        %1176 = vmatpush1.msra.mxu0 0.0
        %1177 = vmatprep.subr.mxu0 0.0
        %1178 = vmatpush1.msra.mxu0 0.0
        %1179 = vmatprep.subr.mxu0 0.0
        %1180 = vmatpush1.msra.mxu0 0.0
        %1181 = vmatprep.subr.mxu0 0.0
        %1182 = vmatpush1.msra.mxu0 0.0
        %1183 = vmatprep.subr.mxu0 0.0
        %1184 = vmatpush1.msra.mxu0 0.0
        %1185 = vmatprep.subr.mxu0 0.0
        %1186 = vmatpush1.msra.mxu0 0.0
        %1187 = vmatprep.subr.mxu0 0.0
        %1188 = vmatpush1.msra.mxu0 0.0
        %1189 = vmatprep.subr.mxu0 0.0
        %1190 = vmatpush1.msra.mxu0 0.0
        %1191 = vmatprep.subr.mxu0 0.0
        %1192 = vmatpush1.msra.mxu0 %v573
        %1193 = vmatprep.subr.mxu0 0.0
        %1194 = vmatpush2.msra.mxu0 0.0
        %1195 = vmatprep.subr.mxu0 0.0
        %1196 = vmatpush2.msra.mxu0 0.0
        %1197 = vmatprep.subr.mxu0 0.0
        %1198 = vmatpush2.msra.mxu0 0.0
        %1199 = vmatprep.subr.mxu0 0.0
        %1200 = vmatpush2.msra.mxu0 0.0
        %1201 = vmatprep.subr.mxu0 0.0
        %1202 = vmatpush2.msra.mxu0 0.0
        %1203 = vmatprep.subr.mxu0 0.0
        %1204 = vmatpush2.msra.mxu0 0.0
        %1205 = vmatprep.subr.mxu0 0.0
        %1206 = vmatpush2.msra.mxu0 0.0
        %1207 = vmatprep.subr.mxu0 0.0
        %1208 = vmatpush2.msra.mxu0 0.0
        %1209 = vmatprep.subr.mxu0 0.0
        %1210 = vmatpush2.msra.mxu0 0.0
        %1211 = vmatprep.subr.mxu0 0.0
        %1212 = vmatpush2.msra.mxu0 0.0
        %1213 = vmatprep.subr.mxu0 0.0
        %1214 = vmatpush2.msra.mxu0 0.0
        %1215 = vmatprep.subr.mxu0 0.0
        %1216 = vmatpush2.msra.mxu0 0.0
        %1217 = vmatprep.subr.mxu0 0.0
        %1218 = vmatpush2.msra.mxu0 0.0
        %1219 = vmatprep.subr.mxu0 0.0
        %1220 = vmatpush2.msra.mxu0 0.0
        %1221 = vmatprep.subr.mxu0 0.0
        %1222 = vmatpush2.msra.mxu0 0.0
        %1223 = vmatprep.subr.mxu0 0.0
        %1224 = vmatpush2.msra.mxu0 0.0
        %1225 = vmatprep.mubr.f32.mxu0 0.0
        %1226 = vmatmul.mubr.f32.gmra.mxu0 %v1157
        %v1227 = vpop.f32.mrf.mxu0
        %v1228 = vadd.f32 0.0, %v1227
        %v1229 = vpop.f32.mrf.mxu0
        %1230 = vmatprep.mubr.f32.mxu0 0.0
        %1231 = vmatmul.mubr.f32.gmra.mxu0 %v1159
        %v1232 = vpop.f32.mrf.mxu0
        %v1233 = vadd.f32 0.0, %v1232
        %v1234 = vpop.f32.mrf.mxu0
        %1235 = vdwg.mxu0
        %vm1236 = vcmask 130048
        %1237 = vst.msk [vmem:[#allocation2] sm:$0xff] %vm1236, %v647
        %vm1238 = vcmask 122880
        %1239 = vst.msk [vmem:[#allocation2 + $0x10] sm:$0x1] %vm1238, %v652
        %v1240 = vmul.f32 %v647, 0.53333336
        %v1241 = vmul.f32 %v652, 0.53333336
        %v1242 = vmul.f32 %v730, 0.46666667
        %v1243 = vmul.f32 %v735, 0.46666667
        %v1244 = vadd.f32 %v1240, %v1242
        %v1245 = vadd.f32 %v1241, %v1243
        %1248 = vrot.lane.b32.xlu0 %v1244, 16
        %v1249 = vpop.permute.xlu0 %1248
        %1250 = vrot.lane.b32.xlu0 %v1245, 16
        %v1251 = vpop.permute.xlu0 %1250
        %vm1254 = vcmask 261248
        %1255 = vst.msk [vmem:[#allocation2] sm:$0xff] %vm1254, %v1249
        %vm1256 = vcmask 254080
        %1257 = vst.msk [vmem:[#allocation2 + $0x10] sm:$0x1] %vm1256, %v1251
        %v1258 = vmul.f32 %v647, 0.06666667
        %v1259 = vmul.f32 %v652, 0.06666667
        %v1260 = vmul.f32 %v730, 0.93333334
        %v1261 = vmul.f32 %v735, 0.93333334
        %v1262 = vadd.f32 %v1258, %v1260
        %v1263 = vadd.f32 %v1259, %v1261
        %1266 = vrot.lane.b32.xlu0 %v1262, 32
        %v1267 = vpop.permute.xlu0 %1266
        %1268 = vrot.lane.b32.xlu0 %v1263, 32
        %v1269 = vpop.permute.xlu0 %1268
        %vm1272 = vcmask 392448
        %1273 = vst.msk [vmem:[#allocation2] sm:$0xff] %vm1272, %v1267
        %vm1274 = vcmask 385280
        %1275 = vst.msk [vmem:[#allocation2 + $0x10] sm:$0x1] %vm1274, %v1269
        %v1276 = vmul.f32 %v730, 0.6
        %v1277 = vmul.f32 %v735, 0.6
        %v1278 = vmul.f32 %v813, 0.4
        %v1279 = vmul.f32 %v818, 0.4
        %v1280 = vadd.f32 %v1276, %v1278
        %v1281 = vadd.f32 %v1277, %v1279
        %1284 = vrot.lane.b32.xlu0 %v1280, 48
        %v1285 = vpop.permute.xlu0 %1284
        %1286 = vrot.lane.b32.xlu0 %v1281, 48
        %v1287 = vpop.permute.xlu0 %1286
        %vm1290 = vcmask 523648
        %1291 = vst.msk [vmem:[#allocation2] sm:$0xff] %vm1290, %v1285
        %vm1292 = vcmask 516480
        %1293 = vst.msk [vmem:[#allocation2 + $0x10] sm:$0x1] %vm1292, %v1287
        %v1294 = vmul.f32 %v730, 0.13333334
        %v1295 = vmul.f32 %v735, 0.13333334
        %v1296 = vmul.f32 %v813, 0.8666667
        %v1297 = vmul.f32 %v818, 0.8666667
        %v1298 = vadd.f32 %v1294, %v1296
        %v1299 = vadd.f32 %v1295, %v1297
        %1302 = vrot.lane.b32.xlu0 %v1298, 64
        %v1303 = vpop.permute.xlu0 %1302
        %1304 = vrot.lane.b32.xlu0 %v1299, 64
        %v1305 = vpop.permute.xlu0 %1304
        %vm1308 = vcmask 654848
        %1309 = vst.msk [vmem:[#allocation2] sm:$0xff] %vm1308, %v1303
        %vm1310 = vcmask 647680
        %1311 = vst.msk [vmem:[#allocation2 + $0x10] sm:$0x1] %vm1310, %v1305
        %v1312 = vmul.f32 %v813, 0.6666667
        %v1313 = vmul.f32 %v818, 0.6666667
        %v1314 = vmul.f32 %v896, 0.33333334
        %v1315 = vmul.f32 %v901, 0.33333334
        %v1316 = vadd.f32 %v1312, %v1314
        %v1317 = vadd.f32 %v1313, %v1315
        %1320 = vrot.lane.b32.xlu0 %v1316, 80
        %v1321 = vpop.permute.xlu0 %1320
        %1322 = vrot.lane.b32.xlu0 %v1317, 80
        %v1323 = vpop.permute.xlu0 %1322
        %vm1326 = vcmask 786048
        %1327 = vst.msk [vmem:[#allocation2] sm:$0xff] %vm1326, %v1321
        %vm1328 = vcmask 778880
        %1329 = vst.msk [vmem:[#allocation2 + $0x10] sm:$0x1] %vm1328, %v1323
        %v1330 = vmul.f32 %v813, 0.2
        %v1331 = vmul.f32 %v818, 0.2
        %v1332 = vmul.f32 %v896, 0.8
        %v1333 = vmul.f32 %v901, 0.8
        %v1334 = vadd.f32 %v1330, %v1332
        %v1335 = vadd.f32 %v1331, %v1333
        %1338 = vrot.lane.b32.xlu0 %v1334, 96
        %v1339 = vpop.permute.xlu0 %1338
        %1340 = vrot.lane.b32.xlu0 %v1335, 96
        %v1341 = vpop.permute.xlu0 %1340
        %vm1344 = vcmask 917248
        %1345 = vst.msk [vmem:[#allocation2] sm:$0xff] %vm1344, %v1339
        %vm1346 = vcmask 910080
        %1347 = vst.msk [vmem:[#allocation2 + $0x10] sm:$0x1] %vm1346, %v1341
        %v1348 = vmul.f32 %v896, 0.73333335
        %v1349 = vmul.f32 %v901, 0.73333335
        %v1350 = vmul.f32 %v979, 0.26666668
        %v1351 = vmul.f32 %v984, 0.26666668
        %v1352 = vadd.f32 %v1348, %v1350
        %v1353 = vadd.f32 %v1349, %v1351
        %1356 = vrot.lane.b32.xlu0 %v1352, 112
        %v1357 = vpop.permute.xlu0 %1356
        %1358 = vrot.lane.b32.xlu0 %v1353, 112
        %v1359 = vpop.permute.xlu0 %1358
        %vm1362 = vcmask 1048448
        %1363 = vst.msk [vmem:[#allocation2] sm:$0xff] %vm1362, %v1357
        %vm1364 = vcmask 1041280
        %1365 = vst.msk [vmem:[#allocation2 + $0x10] sm:$0x1] %vm1364, %v1359
        %v1366 = vmul.f32 %v896, 0.26666668
        %v1367 = vmul.f32 %v901, 0.26666668
        %v1368 = vmul.f32 %v979, 0.73333335
        %v1369 = vmul.f32 %v984, 0.73333335
        %v1370 = vadd.f32 %v1366, %v1368
        %v1371 = vadd.f32 %v1367, %v1369
        %1372 = vst.msk [vmem:[#allocation2 + $0x8] sm:$0xff] %vm1236, %v1370
        %1373 = vst.msk [vmem:[#allocation2 + $0x18] sm:$0x1] %vm1238, %v1371
        %v1374 = vmul.f32 %v979, 0.8
        %v1375 = vmul.f32 %v984, 0.8
        %v1376 = vmul.f32 %v1062, 0.2
        %v1377 = vmul.f32 %v1067, 0.2
        %v1378 = vadd.f32 %v1374, %v1376
        %v1379 = vadd.f32 %v1375, %v1377
        %1382 = vrot.lane.b32.xlu0 %v1378, 16
        %v1383 = vpop.permute.xlu0 %1382
        %1384 = vrot.lane.b32.xlu0 %v1379, 16
        %v1385 = vpop.permute.xlu0 %1384
        %1388 = vst.msk [vmem:[#allocation2 + $0x8] sm:$0xff] %vm1254, %v1383
        %1389 = vst.msk [vmem:[#allocation2 + $0x18] sm:$0x1] %vm1256, %v1385
        %v1390 = vmul.f32 %v979, 0.33333334
        %v1391 = vmul.f32 %v984, 0.33333334
        %v1392 = vmul.f32 %v1062, 0.6666667
        %v1393 = vmul.f32 %v1067, 0.6666667
        %v1394 = vadd.f32 %v1390, %v1392
        %v1395 = vadd.f32 %v1391, %v1393
        %1398 = vrot.lane.b32.xlu0 %v1394, 32
        %v1399 = vpop.permute.xlu0 %1398
        %1400 = vrot.lane.b32.xlu0 %v1395, 32
        %v1401 = vpop.permute.xlu0 %1400
        %1404 = vst.msk [vmem:[#allocation2 + $0x8] sm:$0xff] %vm1272, %v1399
        %1405 = vst.msk [vmem:[#allocation2 + $0x18] sm:$0x1] %vm1274, %v1401
        %v1406 = vmul.f32 %v1062, 0.8666667
        %v1407 = vmul.f32 %v1067, 0.8666667
        %v1408 = vmul.f32 %v1145, 0.13333334
        %v1409 = vmul.f32 %v1150, 0.13333334
        %v1410 = vadd.f32 %v1406, %v1408
        %v1411 = vadd.f32 %v1407, %v1409
        %1414 = vrot.lane.b32.xlu0 %v1410, 48
        %v1415 = vpop.permute.xlu0 %1414
        %1416 = vrot.lane.b32.xlu0 %v1411, 48
        %v1417 = vpop.permute.xlu0 %1416
        %1420 = vst.msk [vmem:[#allocation2 + $0x8] sm:$0xff] %vm1290, %v1415
        %1421 = vst.msk [vmem:[#allocation2 + $0x18] sm:$0x1] %vm1292, %v1417
        %v1422 = vmul.f32 %v1062, 0.4
        %v1423 = vmul.f32 %v1067, 0.4
        %v1424 = vmul.f32 %v1145, 0.6
        %v1425 = vmul.f32 %v1150, 0.6
        %v1426 = vadd.f32 %v1422, %v1424
        %v1427 = vadd.f32 %v1423, %v1425
        %1430 = vrot.lane.b32.xlu0 %v1426, 64
        %v1431 = vpop.permute.xlu0 %1430
        %1432 = vrot.lane.b32.xlu0 %v1427, 64
        %v1433 = vpop.permute.xlu0 %1432
        %1436 = vst.msk [vmem:[#allocation2 + $0x8] sm:$0xff] %vm1308, %v1431
        %1437 = vst.msk [vmem:[#allocation2 + $0x18] sm:$0x1] %vm1310, %v1433
        %v1438 = vmul.f32 %v1145, 0.93333334
        %v1439 = vmul.f32 %v1150, 0.93333334
        %v1440 = vmul.f32 %v1228, 0.06666667
        %v1441 = vmul.f32 %v1233, 0.06666667
        %v1442 = vadd.f32 %v1438, %v1440
        %v1443 = vadd.f32 %v1439, %v1441
        %1446 = vrot.lane.b32.xlu0 %v1442, 80
        %v1447 = vpop.permute.xlu0 %1446
        %1448 = vrot.lane.b32.xlu0 %v1443, 80
        %v1449 = vpop.permute.xlu0 %1448
        %1452 = vst.msk [vmem:[#allocation2 + $0x8] sm:$0xff] %vm1326, %v1447
        %1453 = vst.msk [vmem:[#allocation2 + $0x18] sm:$0x1] %vm1328, %v1449
        %v1454 = vmul.f32 %v1145, 0.46666667
        %v1455 = vmul.f32 %v1150, 0.46666667
        %v1456 = vmul.f32 %v1228, 0.53333336
        %v1457 = vmul.f32 %v1233, 0.53333336
        %v1458 = vadd.f32 %v1454, %v1456
        %v1459 = vadd.f32 %v1455, %v1457
        %1462 = vrot.lane.b32.xlu0 %v1458, 96
        %v1463 = vpop.permute.xlu0 %1462
        %1464 = vrot.lane.b32.xlu0 %v1459, 96
        %v1465 = vpop.permute.xlu0 %1464
        %1468 = vst.msk [vmem:[#allocation2 + $0x8] sm:$0xff] %vm1344, %v1463
        %1469 = vst.msk [vmem:[#allocation2 + $0x18] sm:$0x1] %vm1346, %v1465
        %1472 = vrot.lane.b32.xlu0 %v1228, 112
        %v1473 = vpop.permute.xlu0 %1472
        %1474 = vrot.lane.b32.xlu0 %v1233, 112
        %v1475 = vpop.permute.xlu0 %1474
        %1478 = vst.msk [vmem:[#allocation2 + $0x8] sm:$0xff] %vm1362, %v1473
        %1479 = vst.msk [vmem:[#allocation2 + $0x18] sm:$0x1] %vm1364, %v1475
        %v1480 = vld [vmem:[#allocation2] sm:$0xff]
        %v1481 = vld [vmem:[#allocation2 + $0x8] sm:$0xff]
        %s1482 = scalar_lea.vmem [#allocation2], 16
        %v1483 = vld [vmem:[%s1482] ss:$8 sm:$0x3]
        %v1484 = vlaneseq
        %v1485 = vand.u32 %v1484, 127
        %v1486 = vadd.s32 %v1485, 128
        %vm1487 = vcmp.lt.s32.totalorder %v1485, 0
        %v1488 = vsub.s32 0, %v1485
        %v1489 = vsel %vm1487, %v1488, %v1485
        %v1490 = vshrl.u32 %v1489, 4
        %v1491 = vand.u32 %v1489, 15
        %v1492 = vsub.s32 0, %v1491
        %v1493 = vsel %vm1487, %v1492, %v1491
        %vm1494 = vcmp.lt.s32.totalorder %v1486, 0
        %v1495 = vsub.s32 0, %v1486
        %v1496 = vsel %vm1494, %v1495, %v1486
        %v1497 = vshrl.u32 %v1496, 4
        %v1498 = vand.u32 %v1496, 15
        %v1499 = vsub.s32 0, %v1498
        %v1500 = vsel %vm1494, %v1499, %v1498
        %vm1501 = vcmp.ne.s32.totalorder %v1493, 0
        %vm1502 = vcmp.ne.s32.totalorder %v1500, 0
        %vm1503 = vcmp.lt.s32.totalorder %v1493, 0
        %vm1504 = vcmp.lt.s32.totalorder %v1500, 0
        %vm1505 = vmand %vm1503, %vm1501
        %vm1506 = vmand %vm1504, %vm1502
        %v1507 = vadd.s32 %v1493, 16
        %v1508 = vadd.s32 %v1500, 16
        %v1509 = vsel %vm1505, %v1507, %v1493
        %v1510 = vsel %vm1506, %v1508, %v1500
        %vm1511 = vcmp.ge.s32.totalorder %v1509, 1
        %vm1512 = vcmp.ge.s32.totalorder %v1510, 1
        %vm1513 = vcmp.ge.s32.totalorder %v1509, 2
        %vm1514 = vcmp.ge.s32.totalorder %v1510, 2
        %vm1515 = vcmp.lt.s32.totalorder %v1509, 15
        %vm1516 = vcmp.lt.s32.totalorder %v1510, 15
        %vm1517 = vcmp.lt.s32.totalorder %v1509, 14
        %vm1518 = vcmp.lt.s32.totalorder %v1510, 14
        %vm1519 = vcmask 277504
        %1520 = vst.msk [vmem:[#allocation3] sm:$0xff] %vm1519, 0.0
        %vm1521 = vcmask 556304
        %1522 = vst.msk [vmem:[#allocation3 + $0x10] sm:$0xff] %vm1521, 0.0
        %1525 = vrot.lane.b32.xlu0 %v472, 34
        %v1526 = vpop.permute.xlu0 %1525
        %1527 = vrot.lane.b32.xlu0 %v474, 34
        %v1528 = vpop.permute.xlu0 %1527
        %v1529 = vsel %vm1519, %v1526, %v1528
        %vm1533 = vcmask 1047824
        %1534 = vst.msk [vmem:[#allocation3] sm:$0xff] %vm1533, %v1526
        %1535 = vst [vmem:[#allocation3 + $0x8] sm:$0xff] %v1529
        %1536 = vst.msk [vmem:[#allocation3 + $0x10] sm:$0xff] %vm1519, %v1528
        %v1537 = vld [vmem:[#allocation3] sm:$0xff]
        %v1538 = vld [vmem:[#allocation3 + $0x8] sm:$0xff]
        %v1539 = vld [vmem:[#allocation3 + $0x10] sm:$0xff]
        %v1540 = vsel %vm1513, 1, 0
        %v1541 = vsel %vm1514, 1, 0
        %vm1542 = vcmp.eq.s32.totalorder %v1540, 1
        %vm1543 = vcmp.eq.s32.totalorder %v1541, 1
        %1547 = vrot.lane.b32.xlu0 %v1537, 96
        %v1548 = vpop.permute.xlu0 %1547
        %1549 = vrot.lane.b32.xlu0 %v1538, 96
        %v1550 = vpop.permute.xlu0 %1549
        %1551 = vrot.lane.b32.xlu0 %v1539, 96
        %v1552 = vpop.permute.xlu0 %1551
        %vm1553 = vcmask 785408
        %v1554 = vsel %vm1553, %v1548, %v1550
        %v1555 = vsel %vm1553, %v1550, %v1552
        %v1558 = vsel %vm1542, %v1554, 0.0
        %v1559 = vsel %vm1543, %v1555, 0.0
        %v1560 = vadd.f32 %v472, %v1558
        %v1561 = vadd.f32 %v474, %v1559
        %v1562 = vsel %vm1511, 1, 0
        %v1563 = vsel %vm1512, 1, 0
        %vm1564 = vcmp.eq.s32.totalorder %v1562, 1
        %vm1565 = vcmp.eq.s32.totalorder %v1563, 1
        %1566 = vrot.lane.b32.xlu0 %v1537, 95
        %v1567 = vpop.permute.xlu0 %1566
        %1568 = vrot.lane.b32.xlu0 %v1538, 95
        %v1569 = vpop.permute.xlu0 %1568
        %1570 = vrot.lane.b32.xlu0 %v1539, 95
        %v1571 = vpop.permute.xlu0 %1570
        %vm1572 = vcmask 777216
        %v1573 = vsel %vm1572, %v1567, %v1569
        %v1574 = vsel %vm1572, %v1569, %v1571
        %v1577 = vsel %vm1564, %v1573, 0.0
        %v1578 = vsel %vm1565, %v1574, 0.0
        %v1579 = vadd.f32 %v1560, %v1577
        %v1580 = vadd.f32 %v1561, %v1578
        %v1581 = vsel %vm1515, 1, 0
        %v1582 = vsel %vm1516, 1, 0
        %vm1583 = vcmp.eq.s32.totalorder %v1581, 1
        %vm1584 = vcmp.eq.s32.totalorder %v1582, 1
        %1585 = vrot.lane.b32.xlu0 %v1537, 93
        %v1586 = vpop.permute.xlu0 %1585
        %1587 = vrot.lane.b32.xlu0 %v1538, 93
        %v1588 = vpop.permute.xlu0 %1587
        %1589 = vrot.lane.b32.xlu0 %v1539, 93
        %v1590 = vpop.permute.xlu0 %1589
        %vm1591 = vcmask 760832
        %v1592 = vsel %vm1591, %v1586, %v1588
        %v1593 = vsel %vm1591, %v1588, %v1590
        %v1596 = vsel %vm1583, %v1592, 0.0
        %v1597 = vsel %vm1584, %v1593, 0.0
        %v1598 = vadd.f32 %v1579, %v1596
        %v1599 = vadd.f32 %v1580, %v1597
        %v1600 = vsel %vm1517, 1, 0
        %v1601 = vsel %vm1518, 1, 0
        %vm1602 = vcmp.eq.s32.totalorder %v1600, 1
        %vm1603 = vcmp.eq.s32.totalorder %v1601, 1
        %1604 = vrot.lane.b32.xlu0 %v1537, 92
        %v1605 = vpop.permute.xlu0 %1604
        %1606 = vrot.lane.b32.xlu0 %v1538, 92
        %v1607 = vpop.permute.xlu0 %1606
        %1608 = vrot.lane.b32.xlu0 %v1539, 92
        %v1609 = vpop.permute.xlu0 %1608
        %vm1610 = vcmask 752640
        %v1611 = vsel %vm1610, %v1605, %v1607
        %v1612 = vsel %vm1610, %v1607, %v1609
        %v1615 = vsel %vm1602, %v1611, 0.0
        %v1616 = vsel %vm1603, %v1612, 0.0
        %v1617 = vadd.f32 %v1598, %v1615
        %v1618 = vadd.f32 %v1599, %v1616
        %1621 = vrot.lane.b32.xlu0 %v1617, 34
        %v1622 = vpop.permute.xlu0 %1621
        %1623 = vrot.lane.b32.xlu0 %v1618, 34
        %v1624 = vpop.permute.xlu0 %1623
        %v1625 = vsel %vm1519, %v1622, %v1624
        %1629 = vst.msk [vmem:[#allocation3] sm:$0xff] %vm1533, %v1622
        %1630 = vst [vmem:[#allocation3 + $0x8] sm:$0xff] %v1625
        %1631 = vst.msk [vmem:[#allocation3 + $0x10] sm:$0xff] %vm1519, %v1624
        %v1632 = vld [vmem:[#allocation3] sm:$0xff]
        %v1633 = vld [vmem:[#allocation3 + $0x8] sm:$0xff]
        %v1634 = vld [vmem:[#allocation3 + $0x10] sm:$0xff]
        %1638 = vrot.lane.b32.xlu0 %v1632, 126
        %v1639 = vpop.permute.xlu0 %1638
        %1640 = vrot.lane.b32.xlu0 %v1633, 126
        %v1641 = vpop.permute.xlu0 %1640
        %1642 = vrot.lane.b32.xlu0 %v1634, 126
        %v1643 = vpop.permute.xlu0 %1642
        %vm1644 = vcmask 1031168
        %v1645 = vsel %vm1644, %v1639, %v1641
        %v1646 = vsel %vm1644, %v1641, %v1643
        %v1649 = vadd.f32 %v1617, %v1645
        %v1650 = vadd.f32 %v1618, %v1646
        %1651 = vrot.lane.b32.xlu0 %v1632, 110
        %v1652 = vpop.permute.xlu0 %1651
        %1653 = vrot.lane.b32.xlu0 %v1633, 110
        %v1654 = vpop.permute.xlu0 %1653
        %1655 = vrot.lane.b32.xlu0 %v1634, 110
        %v1656 = vpop.permute.xlu0 %1655
        %vm1657 = vcmask 900096
        %v1658 = vsel %vm1657, %v1652, %v1654
        %v1659 = vsel %vm1657, %v1654, %v1656
        %v1662 = vadd.f32 %v1649, %v1658
        %v1663 = vadd.f32 %v1650, %v1659
        %1664 = vrot.lane.b32.xlu0 %v1632, 78
        %v1665 = vpop.permute.xlu0 %1664
        %1666 = vrot.lane.b32.xlu0 %v1633, 78
        %v1667 = vpop.permute.xlu0 %1666
        %1668 = vrot.lane.b32.xlu0 %v1634, 78
        %v1669 = vpop.permute.xlu0 %1668
        %vm1670 = vcmask 637952
        %v1671 = vsel %vm1670, %v1665, %v1667
        %v1672 = vsel %vm1670, %v1667, %v1669
        %v1675 = vadd.f32 %v1662, %v1671
        %v1676 = vadd.f32 %v1663, %v1672
        %1677 = vrot.lane.b32.xlu0 %v1632, 62
        %v1678 = vpop.permute.xlu0 %1677
        %1679 = vrot.lane.b32.xlu0 %v1633, 62
        %v1680 = vpop.permute.xlu0 %1679
        %1681 = vrot.lane.b32.xlu0 %v1634, 62
        %v1682 = vpop.permute.xlu0 %1681
        %vm1683 = vcmask 506880
        %v1684 = vsel %vm1683, %v1678, %v1680
        %v1685 = vsel %vm1683, %v1680, %v1682
        %v1688 = vadd.f32 %v1675, %v1684
        %v1689 = vadd.f32 %v1676, %v1685
        %v1690 = vmul.f32 %v472, 25.0
        %v1691 = vmul.f32 %v474, 25.0
        %v1692 = vsub.f32 %v1688, %v1690
        %v1693 = vsub.f32 %v1689, %v1691
        %v1695 = vlaneseq
        %v1696 = vshrl.u32 %v1695, 7
        %v1697 = vsub.s32 0, %v1696
        %v1698 = vrot.slane %v1483, %v1697
        %v1699 = vlaneseq
        %v1700 = vshrl.u32 %v1699, 7
        %v1701 = vsub.s32 1, %v1700
        %v1702 = vrot.slane %v1483, %v1701
        %v1705 = vmul.f32 %v1692, %v1698
        %v1706 = vmul.f32 %v1693, %v1702
        %v1707 = vadd.f32 %v1705, %v1480
        %v1708 = vadd.f32 %v1706, %v1481
        %vm1709 = vcmask 138240
        %1710 = vst.msk [vmem:[#allocation4] sm:$0xff] %vm1709, 0.0
        %1711 = vst.msk [vmem:[#allocation4 + $0x18] sm:$0xff] %vm1709, 0.0
        %1712 = vst.msk [vmem:[#allocation4 + $0x30] sm:$0xff] %vm1709, 0.0
        %vm1713 = vcmask 277640
        %1714 = vst.msk [vmem:[#allocation4 + $0x10] sm:$0xff] %vm1713, 0.0
        %1715 = vst.msk [vmem:[#allocation4 + $0x28] sm:$0xff] %vm1713, 0.0
        %1716 = vst.msk [vmem:[#allocation4 + $0x40] sm:$0xff] %vm1713, 0.0
        %1719 = vrot.lane.b32.xlu0 %v1707, 17
        %v1720 = vpop.permute.xlu0 %1719
        %1721 = vrot.lane.b32.xlu0 %v1708, 17
        %v1722 = vpop.permute.xlu0 %1721
        %v1723 = vsel %vm1709, %v1720, %v1722
        %vm1727 = vcmask 1047688
        %1728 = vst.msk [vmem:[#allocation4] sm:$0xff] %vm1727, %v1720
        %1729 = vst [vmem:[#allocation4 + $0x8] sm:$0xff] %v1723
        %1730 = vst.msk [vmem:[#allocation4 + $0x10] sm:$0xff] %vm1709, %v1722
        %1731 = vrot.lane.b32.xlu0 %v472, 17
        %v1732 = vpop.permute.xlu0 %1731
        %1733 = vrot.lane.b32.xlu0 %v474, 17
        %v1734 = vpop.permute.xlu0 %1733
        %v1735 = vsel %vm1709, %v1732, %v1734
        %1739 = vst.msk [vmem:[#allocation4 + $0x18] sm:$0xff] %vm1727, %v1732
        %1740 = vst [vmem:[#allocation4 + $0x20] sm:$0xff] %v1735
        %1741 = vst.msk [vmem:[#allocation4 + $0x28] sm:$0xff] %vm1709, %v1734
        %1744 = vrot.lane.b32.xlu0 %v1480, 17
        %v1745 = vpop.permute.xlu0 %1744
        %1746 = vrot.lane.b32.xlu0 %v1481, 17
        %v1747 = vpop.permute.xlu0 %1746
        %v1748 = vsel %vm1709, %v1745, %v1747
        %1752 = vst.msk [vmem:[#allocation4 + $0x30] sm:$0xff] %vm1727, %v1745
        %1753 = vst [vmem:[#allocation4 + $0x38] sm:$0xff] %v1748
        %1754 = vst.msk [vmem:[#allocation4 + $0x40] sm:$0xff] %vm1709, %v1747
        %v1755 = vld [vmem:[#allocation4] sm:$0xff]
        %v1756 = vld [vmem:[#allocation4 + $0x8] sm:$0xff]
        %v1757 = vld [vmem:[#allocation4 + $0x18] sm:$0xff]
        %v1758 = vld [vmem:[#allocation4 + $0x20] sm:$0xff]
        %v1759 = vld [vmem:[#allocation4 + $0x30] sm:$0xff]
        %v1760 = vld [vmem:[#allocation4 + $0x38] sm:$0xff]
        %v1761 = vsel %vm1564, %v1755, 0.0
        %v1762 = vsel %vm1565, %v1756, 0.0
        %v1763 = vsel %vm1564, %v1757, 0.0
        %v1764 = vsel %vm1565, %v1758, 0.0
        %v1765 = vsel %vm1564, %v1759, 0.0
        %v1766 = vsel %vm1565, %v1760, 0.0
        %v1767 = vld [vmem:[%s7] sm:$0xff]
        %v1768 = vld [vmem:[#allocation4 + $0x10] sm:$0xff]
        %v1769 = vld [vmem:[#allocation4 + $0x28] sm:$0xff]
        %v1770 = vld [vmem:[#allocation4 + $0x40] sm:$0xff]
        %s1771 = scalar_lea.vmem %s7, 8
        %v1772 = vld [vmem:[%s1771] sm:$0xff]
        %1782 = vrot.lane.b32.xlu0 %v1755, 127
        %v1783 = vpop.permute.xlu0 %1782
        %1784 = vrot.lane.b32.xlu0 %v1756, 127
        %v1785 = vpop.permute.xlu0 %1784
        %1786 = vrot.lane.b32.xlu0 %v1768, 127
        %v1787 = vpop.permute.xlu0 %1786
        %1788 = vrot.lane.b32.xlu0 %v1757, 127
        %v1789 = vpop.permute.xlu0 %1788
        %1790 = vrot.lane.b32.xlu0 %v1758, 127
        %v1791 = vpop.permute.xlu0 %1790
        %1792 = vrot.lane.b32.xlu0 %v1769, 127
        %v1793 = vpop.permute.xlu0 %1792
        %1794 = vrot.lane.b32.xlu0 %v1759, 127
        %v1795 = vpop.permute.xlu0 %1794
        %1796 = vrot.lane.b32.xlu0 %v1760, 127
        %v1797 = vpop.permute.xlu0 %1796
        %1798 = vrot.lane.b32.xlu0 %v1770, 127
        %v1799 = vpop.permute.xlu0 %1798
        %vm1800 = vcmask 1039360
        %v1801 = vsel %vm1800, %v1783, %v1785
        %v1802 = vsel %vm1800, %v1785, %v1787
        %v1803 = vsel %vm1800, %v1789, %v1791
        %v1804 = vsel %vm1800, %v1791, %v1793
        %v1805 = vsel %vm1800, %v1795, %v1797
        %v1806 = vsel %vm1800, %v1797, %v1799
        %vm1813 = vcmask 195584
        %v1815 = vsel %vm1813, %v1772, 0
        %1817 = vmatprep.subr.mxu0 0.0
        %1818 = vmatpush1.msra.mxu0 0.0
        %1819 = vmatprep.subr.mxu0 0.0
        %1820 = vmatpush1.msra.mxu0 0.0
        %1821 = vmatprep.subr.mxu0 0.0
        %1822 = vmatpush1.msra.mxu0 0.0
        %1823 = vmatprep.subr.mxu0 0.0
        %1824 = vmatpush1.msra.mxu0 0.0
        %1825 = vmatprep.subr.mxu0 0.0
        %1826 = vmatpush1.msra.mxu0 0.0
        %1827 = vmatprep.subr.mxu0 0.0
        %1828 = vmatpush1.msra.mxu0 0.0
        %1829 = vmatprep.subr.mxu0 0.0
        %1830 = vmatpush1.msra.mxu0 0.0
        %1831 = vmatprep.subr.mxu0 0.0
        %1832 = vmatpush1.msra.mxu0 0.0
        %1833 = vmatprep.subr.mxu0 0.0
        %1834 = vmatpush1.msra.mxu0 0.0
        %1835 = vmatprep.subr.mxu0 0.0
        %1836 = vmatpush1.msra.mxu0 0.0
        %1837 = vmatprep.subr.mxu0 0.0
        %1838 = vmatpush1.msra.mxu0 0.0
        %1839 = vmatprep.subr.mxu0 0.0
        %1840 = vmatpush1.msra.mxu0 0.0
        %1841 = vmatprep.subr.mxu0 0.0
        %1842 = vmatpush1.msra.mxu0 0.0
        %1843 = vmatprep.subr.mxu0 %v1806
        %1844 = vmatpush1.msra.mxu0 %v1805
        %1845 = vmatprep.subr.mxu0 %v1804
        %1846 = vmatpush1.msra.mxu0 %v1803
        %1847 = vmatprep.subr.mxu0 %v1802
        %1848 = vmatpush1.msra.mxu0 %v1801
        %1849 = vmatprep.subr.mxu0 0.0
        %1850 = vmatpush2.msra.mxu0 0.0
        %1851 = vmatprep.subr.mxu0 0.0
        %1852 = vmatpush2.msra.mxu0 0.0
        %1853 = vmatprep.subr.mxu0 0.0
        %1854 = vmatpush2.msra.mxu0 0.0
        %1855 = vmatprep.subr.mxu0 0.0
        %1856 = vmatpush2.msra.mxu0 0.0
        %1857 = vmatprep.subr.mxu0 0.0
        %1858 = vmatpush2.msra.mxu0 0.0
        %1859 = vmatprep.subr.mxu0 0.0
        %1860 = vmatpush2.msra.mxu0 0.0
        %1861 = vmatprep.subr.mxu0 0.0
        %1862 = vmatpush2.msra.mxu0 0.0
        %1863 = vmatprep.subr.mxu0 0.0
        %1864 = vmatpush2.msra.mxu0 0.0
        %1865 = vmatprep.subr.mxu0 0.0
        %1866 = vmatpush2.msra.mxu0 0.0
        %1867 = vmatprep.subr.mxu0 0.0
        %1868 = vmatpush2.msra.mxu0 0.0
        %1869 = vmatprep.subr.mxu0 0.0
        %1870 = vmatpush2.msra.mxu0 0.0
        %1871 = vmatprep.subr.mxu0 0.0
        %1872 = vmatpush2.msra.mxu0 0.0
        %1873 = vmatprep.subr.mxu0 0.0
        %1874 = vmatpush2.msra.mxu0 0.0
        %1875 = vmatprep.subr.mxu0 0.0
        %1876 = vmatpush2.msra.mxu0 0.0
        %1877 = vmatprep.subr.mxu0 0.0
        %1878 = vmatpush2.msra.mxu0 0.0
        %1879 = vmatprep.subr.mxu0 0.0
        %1880 = vmatpush2.msra.mxu0 0.0
        %1881 = vmatprep.mubr.f32.mxu0 0.0
        %1882 = vmatmul.mubr.f32.gmra.mxu0 %v1815
        %v1883 = vpop.f32.mrf.mxu0
        %v1884 = vadd.f32 0.0, %v1883
        %v1885 = vpop.f32.mrf.mxu0
        %v1886 = vadd.f32 0.0, %v1885
        %1887 = vdwg.mxu0
        %v1889 = vsel %vm1813, %v1767, 0
        %1891 = vmatprep.subr.mxu0 0.0
        %1892 = vmatpush1.msra.mxu0 0.0
        %1893 = vmatprep.subr.mxu0 0.0
        %1894 = vmatpush1.msra.mxu0 0.0
        %1895 = vmatprep.subr.mxu0 0.0
        %1896 = vmatpush1.msra.mxu0 0.0
        %1897 = vmatprep.subr.mxu0 0.0
        %1898 = vmatpush1.msra.mxu0 0.0
        %1899 = vmatprep.subr.mxu0 0.0
        %1900 = vmatpush1.msra.mxu0 0.0
        %1901 = vmatprep.subr.mxu0 0.0
        %1902 = vmatpush1.msra.mxu0 0.0
        %1903 = vmatprep.subr.mxu0 0.0
        %1904 = vmatpush1.msra.mxu0 0.0
        %1905 = vmatprep.subr.mxu0 0.0
        %1906 = vmatpush1.msra.mxu0 0.0
        %1907 = vmatprep.subr.mxu0 0.0
        %1908 = vmatpush1.msra.mxu0 0.0
        %1909 = vmatprep.subr.mxu0 0.0
        %1910 = vmatpush1.msra.mxu0 0.0
        %1911 = vmatprep.subr.mxu0 0.0
        %1912 = vmatpush1.msra.mxu0 0.0
        %1913 = vmatprep.subr.mxu0 0.0
        %1914 = vmatpush1.msra.mxu0 0.0
        %1915 = vmatprep.subr.mxu0 0.0
        %1916 = vmatpush1.msra.mxu0 0.0
        %1917 = vmatprep.subr.mxu0 %v1766
        %1918 = vmatpush1.msra.mxu0 %v1765
        %1919 = vmatprep.subr.mxu0 %v1764
        %1920 = vmatpush1.msra.mxu0 %v1763
        %1921 = vmatprep.subr.mxu0 %v1762
        %1922 = vmatpush1.msra.mxu0 %v1761
        %1923 = vmatprep.subr.mxu0 0.0
        %1924 = vmatpush2.msra.mxu0 0.0
        %1925 = vmatprep.subr.mxu0 0.0
        %1926 = vmatpush2.msra.mxu0 0.0
        %1927 = vmatprep.subr.mxu0 0.0
        %1928 = vmatpush2.msra.mxu0 0.0
        %1929 = vmatprep.subr.mxu0 0.0
        %1930 = vmatpush2.msra.mxu0 0.0
        %1931 = vmatprep.subr.mxu0 0.0
        %1932 = vmatpush2.msra.mxu0 0.0
        %1933 = vmatprep.subr.mxu0 0.0
        %1934 = vmatpush2.msra.mxu0 0.0
        %1935 = vmatprep.subr.mxu0 0.0
        %1936 = vmatpush2.msra.mxu0 0.0
        %1937 = vmatprep.subr.mxu0 0.0
        %1938 = vmatpush2.msra.mxu0 0.0
        %1939 = vmatprep.subr.mxu0 0.0
        %1940 = vmatpush2.msra.mxu0 0.0
        %1941 = vmatprep.subr.mxu0 0.0
        %1942 = vmatpush2.msra.mxu0 0.0
        %1943 = vmatprep.subr.mxu0 0.0
        %1944 = vmatpush2.msra.mxu0 0.0
        %1945 = vmatprep.subr.mxu0 0.0
        %1946 = vmatpush2.msra.mxu0 0.0
        %1947 = vmatprep.subr.mxu0 0.0
        %1948 = vmatpush2.msra.mxu0 0.0
        %1949 = vmatprep.subr.mxu0 0.0
        %1950 = vmatpush2.msra.mxu0 0.0
        %1951 = vmatprep.subr.mxu0 0.0
        %1952 = vmatpush2.msra.mxu0 0.0
        %1953 = vmatprep.subr.mxu0 0.0
        %1954 = vmatpush2.msra.mxu0 0.0
        %1955 = vmatprep.mubr.f32.mxu0 0.0
        %1956 = vmatmul.mubr.f32.gmra.mxu0 %v1889
        %v1957 = vpop.f32.mrf.mxu0
        %v1958 = vadd.f32 %v1884, %v1957
        %v1959 = vpop.f32.mrf.mxu0
        %v1960 = vadd.f32 %v1886, %v1959
        %1961 = vdwg.mxu0
        %1962 = vrot.lane.b32.xlu0 %v1755, 126
        %v1963 = vpop.permute.xlu0 %1962
        %1964 = vrot.lane.b32.xlu0 %v1756, 126
        %v1965 = vpop.permute.xlu0 %1964
        %1966 = vrot.lane.b32.xlu0 %v1768, 126
        %v1967 = vpop.permute.xlu0 %1966
        %1968 = vrot.lane.b32.xlu0 %v1757, 126
        %v1969 = vpop.permute.xlu0 %1968
        %1970 = vrot.lane.b32.xlu0 %v1758, 126
        %v1971 = vpop.permute.xlu0 %1970
        %1972 = vrot.lane.b32.xlu0 %v1769, 126
        %v1973 = vpop.permute.xlu0 %1972
        %1974 = vrot.lane.b32.xlu0 %v1759, 126
        %v1975 = vpop.permute.xlu0 %1974
        %1976 = vrot.lane.b32.xlu0 %v1760, 126
        %v1977 = vpop.permute.xlu0 %1976
        %1978 = vrot.lane.b32.xlu0 %v1770, 126
        %v1979 = vpop.permute.xlu0 %1978
        %v1980 = vsel %vm1644, %v1963, %v1965
        %v1981 = vsel %vm1644, %v1965, %v1967
        %v1982 = vsel %vm1644, %v1969, %v1971
        %v1983 = vsel %vm1644, %v1971, %v1973
        %v1984 = vsel %vm1644, %v1975, %v1977
        %v1985 = vsel %vm1644, %v1977, %v1979
        %v1992 = vsel %vm1583, %v1980, 0.0
        %v1993 = vsel %vm1584, %v1981, 0.0
        %v1994 = vsel %vm1583, %v1982, 0.0
        %v1995 = vsel %vm1584, %v1983, 0.0
        %v1996 = vsel %vm1583, %v1984, 0.0
        %v1997 = vsel %vm1584, %v1985, 0.0
        %s1998 = scalar_lea.vmem %s7, 16
        %v1999 = vld [vmem:[%s1998] sm:$0xff]
        %v2001 = vsel %vm1813, %v1999, 0
        %2003 = vmatprep.subr.mxu0 0.0
        %2004 = vmatpush1.msra.mxu0 0.0
        %2005 = vmatprep.subr.mxu0 0.0
        %2006 = vmatpush1.msra.mxu0 0.0
        %2007 = vmatprep.subr.mxu0 0.0
        %2008 = vmatpush1.msra.mxu0 0.0
        %2009 = vmatprep.subr.mxu0 0.0
        %2010 = vmatpush1.msra.mxu0 0.0
        %2011 = vmatprep.subr.mxu0 0.0
        %2012 = vmatpush1.msra.mxu0 0.0
        %2013 = vmatprep.subr.mxu0 0.0
        %2014 = vmatpush1.msra.mxu0 0.0
        %2015 = vmatprep.subr.mxu0 0.0
        %2016 = vmatpush1.msra.mxu0 0.0
        %2017 = vmatprep.subr.mxu0 0.0
        %2018 = vmatpush1.msra.mxu0 0.0
        %2019 = vmatprep.subr.mxu0 0.0
        %2020 = vmatpush1.msra.mxu0 0.0
        %2021 = vmatprep.subr.mxu0 0.0
        %2022 = vmatpush1.msra.mxu0 0.0
        %2023 = vmatprep.subr.mxu0 0.0
        %2024 = vmatpush1.msra.mxu0 0.0
        %2025 = vmatprep.subr.mxu0 0.0
        %2026 = vmatpush1.msra.mxu0 0.0
        %2027 = vmatprep.subr.mxu0 0.0
        %2028 = vmatpush1.msra.mxu0 0.0
        %2029 = vmatprep.subr.mxu0 %v1997
        %2030 = vmatpush1.msra.mxu0 %v1996
        %2031 = vmatprep.subr.mxu0 %v1995
        %2032 = vmatpush1.msra.mxu0 %v1994
        %2033 = vmatprep.subr.mxu0 %v1993
        %2034 = vmatpush1.msra.mxu0 %v1992
        %2035 = vmatprep.subr.mxu0 0.0
        %2036 = vmatpush2.msra.mxu0 0.0
        %2037 = vmatprep.subr.mxu0 0.0
        %2038 = vmatpush2.msra.mxu0 0.0
        %2039 = vmatprep.subr.mxu0 0.0
        %2040 = vmatpush2.msra.mxu0 0.0
        %2041 = vmatprep.subr.mxu0 0.0
        %2042 = vmatpush2.msra.mxu0 0.0
        %2043 = vmatprep.subr.mxu0 0.0
        %2044 = vmatpush2.msra.mxu0 0.0
        %2045 = vmatprep.subr.mxu0 0.0
        %2046 = vmatpush2.msra.mxu0 0.0
        %2047 = vmatprep.subr.mxu0 0.0
        %2048 = vmatpush2.msra.mxu0 0.0
        %2049 = vmatprep.subr.mxu0 0.0
        %2050 = vmatpush2.msra.mxu0 0.0
        %2051 = vmatprep.subr.mxu0 0.0
        %2052 = vmatpush2.msra.mxu0 0.0
        %2053 = vmatprep.subr.mxu0 0.0
        %2054 = vmatpush2.msra.mxu0 0.0
        %2055 = vmatprep.subr.mxu0 0.0
        %2056 = vmatpush2.msra.mxu0 0.0
        %2057 = vmatprep.subr.mxu0 0.0
        %2058 = vmatpush2.msra.mxu0 0.0
        %2059 = vmatprep.subr.mxu0 0.0
        %2060 = vmatpush2.msra.mxu0 0.0
        %2061 = vmatprep.subr.mxu0 0.0
        %2062 = vmatpush2.msra.mxu0 0.0
        %2063 = vmatprep.subr.mxu0 0.0
        %2064 = vmatpush2.msra.mxu0 0.0
        %2065 = vmatprep.subr.mxu0 0.0
        %2066 = vmatpush2.msra.mxu0 0.0
        %2067 = vmatprep.mubr.f32.mxu0 0.0
        %2068 = vmatmul.mubr.f32.gmra.mxu0 %v2001
        %v2069 = vpop.f32.mrf.mxu0
        %v2070 = vadd.f32 0.0, %v2069
        %v2071 = vpop.f32.mrf.mxu0
        %v2072 = vadd.f32 0.0, %v2071
        %2073 = vdwg.mxu0
        %v2074 = vadd.f32 %v1958, %v2070
        %v2075 = vadd.f32 %v1960, %v2072
        %2076 = vrot.lane.b32.xlu0 %v1755, 112
        %v2077 = vpop.permute.xlu0 %2076
        %2078 = vrot.lane.b32.xlu0 %v1756, 112
        %v2079 = vpop.permute.xlu0 %2078
        %2080 = vrot.lane.b32.xlu0 %v1768, 112
        %v2081 = vpop.permute.xlu0 %2080
        %2082 = vrot.lane.b32.xlu0 %v1757, 112
        %v2083 = vpop.permute.xlu0 %2082
        %2084 = vrot.lane.b32.xlu0 %v1758, 112
        %v2085 = vpop.permute.xlu0 %2084
        %2086 = vrot.lane.b32.xlu0 %v1769, 112
        %v2087 = vpop.permute.xlu0 %2086
        %2088 = vrot.lane.b32.xlu0 %v1759, 112
        %v2089 = vpop.permute.xlu0 %2088
        %2090 = vrot.lane.b32.xlu0 %v1760, 112
        %v2091 = vpop.permute.xlu0 %2090
        %2092 = vrot.lane.b32.xlu0 %v1770, 112
        %v2093 = vpop.permute.xlu0 %2092
        %vm2094 = vcmask 916480
        %v2095 = vsel %vm2094, %v2077, %v2079
        %v2096 = vsel %vm2094, %v2079, %v2081
        %v2097 = vsel %vm2094, %v2083, %v2085
        %v2098 = vsel %vm2094, %v2085, %v2087
        %v2099 = vsel %vm2094, %v2089, %v2091
        %v2100 = vsel %vm2094, %v2091, %v2093
        %v2107 = vsel %vm1564, %v2095, 0.0
        %v2108 = vsel %vm1565, %v2096, 0.0
        %v2109 = vsel %vm1564, %v2097, 0.0
        %v2110 = vsel %vm1565, %v2098, 0.0
        %v2111 = vsel %vm1564, %v2099, 0.0
        %v2112 = vsel %vm1565, %v2100, 0.0
        %s2113 = scalar_lea.vmem %s7, 24
        %v2114 = vld [vmem:[%s2113] sm:$0xff]
        %v2116 = vsel %vm1813, %v2114, 0
        %2118 = vmatprep.subr.mxu0 0.0
        %2119 = vmatpush1.msra.mxu0 0.0
        %2120 = vmatprep.subr.mxu0 0.0
        %2121 = vmatpush1.msra.mxu0 0.0
        %2122 = vmatprep.subr.mxu0 0.0
        %2123 = vmatpush1.msra.mxu0 0.0
        %2124 = vmatprep.subr.mxu0 0.0
        %2125 = vmatpush1.msra.mxu0 0.0
        %2126 = vmatprep.subr.mxu0 0.0
        %2127 = vmatpush1.msra.mxu0 0.0
        %2128 = vmatprep.subr.mxu0 0.0
        %2129 = vmatpush1.msra.mxu0 0.0
        %2130 = vmatprep.subr.mxu0 0.0
        %2131 = vmatpush1.msra.mxu0 0.0
        %2132 = vmatprep.subr.mxu0 0.0
        %2133 = vmatpush1.msra.mxu0 0.0
        %2134 = vmatprep.subr.mxu0 0.0
        %2135 = vmatpush1.msra.mxu0 0.0
        %2136 = vmatprep.subr.mxu0 0.0
        %2137 = vmatpush1.msra.mxu0 0.0
        %2138 = vmatprep.subr.mxu0 0.0
        %2139 = vmatpush1.msra.mxu0 0.0
        %2140 = vmatprep.subr.mxu0 0.0
        %2141 = vmatpush1.msra.mxu0 0.0
        %2142 = vmatprep.subr.mxu0 0.0
        %2143 = vmatpush1.msra.mxu0 0.0
        %2144 = vmatprep.subr.mxu0 %v2112
        %2145 = vmatpush1.msra.mxu0 %v2111
        %2146 = vmatprep.subr.mxu0 %v2110
        %2147 = vmatpush1.msra.mxu0 %v2109
        %2148 = vmatprep.subr.mxu0 %v2108
        %2149 = vmatpush1.msra.mxu0 %v2107
        %2150 = vmatprep.subr.mxu0 0.0
        %2151 = vmatpush2.msra.mxu0 0.0
        %2152 = vmatprep.subr.mxu0 0.0
        %2153 = vmatpush2.msra.mxu0 0.0
        %2154 = vmatprep.subr.mxu0 0.0
        %2155 = vmatpush2.msra.mxu0 0.0
        %2156 = vmatprep.subr.mxu0 0.0
        %2157 = vmatpush2.msra.mxu0 0.0
        %2158 = vmatprep.subr.mxu0 0.0
        %2159 = vmatpush2.msra.mxu0 0.0
        %2160 = vmatprep.subr.mxu0 0.0
        %2161 = vmatpush2.msra.mxu0 0.0
        %2162 = vmatprep.subr.mxu0 0.0
        %2163 = vmatpush2.msra.mxu0 0.0
        %2164 = vmatprep.subr.mxu0 0.0
        %2165 = vmatpush2.msra.mxu0 0.0
        %2166 = vmatprep.subr.mxu0 0.0
        %2167 = vmatpush2.msra.mxu0 0.0
        %2168 = vmatprep.subr.mxu0 0.0
        %2169 = vmatpush2.msra.mxu0 0.0
        %2170 = vmatprep.subr.mxu0 0.0
        %2171 = vmatpush2.msra.mxu0 0.0
        %2172 = vmatprep.subr.mxu0 0.0
        %2173 = vmatpush2.msra.mxu0 0.0
        %2174 = vmatprep.subr.mxu0 0.0
        %2175 = vmatpush2.msra.mxu0 0.0
        %2176 = vmatprep.subr.mxu0 0.0
        %2177 = vmatpush2.msra.mxu0 0.0
        %2178 = vmatprep.subr.mxu0 0.0
        %2179 = vmatpush2.msra.mxu0 0.0
        %2180 = vmatprep.subr.mxu0 0.0
        %2181 = vmatpush2.msra.mxu0 0.0
        %2182 = vmatprep.mubr.f32.mxu0 0.0
        %2183 = vmatmul.mubr.f32.gmra.mxu0 %v2116
        %v2184 = vpop.f32.mrf.mxu0
        %v2185 = vadd.f32 0.0, %v2184
        %v2186 = vpop.f32.mrf.mxu0
        %v2187 = vadd.f32 0.0, %v2186
        %2188 = vdwg.mxu0
        %v2189 = vadd.f32 %v2074, %v2185
        %v2190 = vadd.f32 %v2075, %v2187
        %s2191 = scalar_lea.vmem %s7, 32
        %v2192 = vld [vmem:[%s2191] sm:$0xff]
        %2193 = vrot.lane.b32.xlu0 %v1755, 111
        %v2194 = vpop.permute.xlu0 %2193
        %2195 = vrot.lane.b32.xlu0 %v1756, 111
        %v2196 = vpop.permute.xlu0 %2195
        %2197 = vrot.lane.b32.xlu0 %v1768, 111
        %v2198 = vpop.permute.xlu0 %2197
        %2199 = vrot.lane.b32.xlu0 %v1757, 111
        %v2200 = vpop.permute.xlu0 %2199
        %2201 = vrot.lane.b32.xlu0 %v1758, 111
        %v2202 = vpop.permute.xlu0 %2201
        %2203 = vrot.lane.b32.xlu0 %v1769, 111
        %v2204 = vpop.permute.xlu0 %2203
        %2205 = vrot.lane.b32.xlu0 %v1759, 111
        %v2206 = vpop.permute.xlu0 %2205
        %2207 = vrot.lane.b32.xlu0 %v1760, 111
        %v2208 = vpop.permute.xlu0 %2207
        %2209 = vrot.lane.b32.xlu0 %v1770, 111
        %v2210 = vpop.permute.xlu0 %2209
        %vm2211 = vcmask 908288
        %v2212 = vsel %vm2211, %v2194, %v2196
        %v2213 = vsel %vm2211, %v2196, %v2198
        %v2214 = vsel %vm2211, %v2200, %v2202
        %v2215 = vsel %vm2211, %v2202, %v2204
        %v2216 = vsel %vm2211, %v2206, %v2208
        %v2217 = vsel %vm2211, %v2208, %v2210
        %v2225 = vsel %vm1813, %v2192, 0
        %2227 = vmatprep.subr.mxu0 0.0
        %2228 = vmatpush1.msra.mxu0 0.0
        %2229 = vmatprep.subr.mxu0 0.0
        %2230 = vmatpush1.msra.mxu0 0.0
        %2231 = vmatprep.subr.mxu0 0.0
        %2232 = vmatpush1.msra.mxu0 0.0
        %2233 = vmatprep.subr.mxu0 0.0
        %2234 = vmatpush1.msra.mxu0 0.0
        %2235 = vmatprep.subr.mxu0 0.0
        %2236 = vmatpush1.msra.mxu0 0.0
        %2237 = vmatprep.subr.mxu0 0.0
        %2238 = vmatpush1.msra.mxu0 0.0
        %2239 = vmatprep.subr.mxu0 0.0
        %2240 = vmatpush1.msra.mxu0 0.0
        %2241 = vmatprep.subr.mxu0 0.0
        %2242 = vmatpush1.msra.mxu0 0.0
        %2243 = vmatprep.subr.mxu0 0.0
        %2244 = vmatpush1.msra.mxu0 0.0
        %2245 = vmatprep.subr.mxu0 0.0
        %2246 = vmatpush1.msra.mxu0 0.0
        %2247 = vmatprep.subr.mxu0 0.0
        %2248 = vmatpush1.msra.mxu0 0.0
        %2249 = vmatprep.subr.mxu0 0.0
        %2250 = vmatpush1.msra.mxu0 0.0
        %2251 = vmatprep.subr.mxu0 0.0
        %2252 = vmatpush1.msra.mxu0 0.0
        %2253 = vmatprep.subr.mxu0 %v2217
        %2254 = vmatpush1.msra.mxu0 %v2216
        %2255 = vmatprep.subr.mxu0 %v2215
        %2256 = vmatpush1.msra.mxu0 %v2214
        %2257 = vmatprep.subr.mxu0 %v2213
        %2258 = vmatpush1.msra.mxu0 %v2212
        %2259 = vmatprep.subr.mxu0 0.0
        %2260 = vmatpush2.msra.mxu0 0.0
        %2261 = vmatprep.subr.mxu0 0.0
        %2262 = vmatpush2.msra.mxu0 0.0
        %2263 = vmatprep.subr.mxu0 0.0
        %2264 = vmatpush2.msra.mxu0 0.0
        %2265 = vmatprep.subr.mxu0 0.0
        %2266 = vmatpush2.msra.mxu0 0.0
        %2267 = vmatprep.subr.mxu0 0.0
        %2268 = vmatpush2.msra.mxu0 0.0
        %2269 = vmatprep.subr.mxu0 0.0
        %2270 = vmatpush2.msra.mxu0 0.0
        %2271 = vmatprep.subr.mxu0 0.0
        %2272 = vmatpush2.msra.mxu0 0.0
        %2273 = vmatprep.subr.mxu0 0.0
        %2274 = vmatpush2.msra.mxu0 0.0
        %2275 = vmatprep.subr.mxu0 0.0
        %2276 = vmatpush2.msra.mxu0 0.0
        %2277 = vmatprep.subr.mxu0 0.0
        %2278 = vmatpush2.msra.mxu0 0.0
        %2279 = vmatprep.subr.mxu0 0.0
        %2280 = vmatpush2.msra.mxu0 0.0
        %2281 = vmatprep.subr.mxu0 0.0
        %2282 = vmatpush2.msra.mxu0 0.0
        %2283 = vmatprep.subr.mxu0 0.0
        %2284 = vmatpush2.msra.mxu0 0.0
        %2285 = vmatprep.subr.mxu0 0.0
        %2286 = vmatpush2.msra.mxu0 0.0
        %2287 = vmatprep.subr.mxu0 0.0
        %2288 = vmatpush2.msra.mxu0 0.0
        %2289 = vmatprep.subr.mxu0 0.0
        %2290 = vmatpush2.msra.mxu0 0.0
        %2291 = vmatprep.mubr.f32.mxu0 0.0
        %2292 = vmatmul.mubr.f32.gmra.mxu0 %v2225
        %v2293 = vpop.f32.mrf.mxu0
        %v2294 = vadd.f32 0.0, %v2293
        %v2295 = vpop.f32.mrf.mxu0
        %v2296 = vadd.f32 0.0, %v2295
        %2297 = vdwg.mxu0
        %v2298 = vadd.f32 %v2189, %v2294
        %v2299 = vadd.f32 %v2190, %v2296
        %2300 = vrot.lane.b32.xlu0 %v1755, 110
        %v2301 = vpop.permute.xlu0 %2300
        %2302 = vrot.lane.b32.xlu0 %v1756, 110
        %v2303 = vpop.permute.xlu0 %2302
        %2304 = vrot.lane.b32.xlu0 %v1768, 110
        %v2305 = vpop.permute.xlu0 %2304
        %2306 = vrot.lane.b32.xlu0 %v1757, 110
        %v2307 = vpop.permute.xlu0 %2306
        %2308 = vrot.lane.b32.xlu0 %v1758, 110
        %v2309 = vpop.permute.xlu0 %2308
        %2310 = vrot.lane.b32.xlu0 %v1769, 110
        %v2311 = vpop.permute.xlu0 %2310
        %2312 = vrot.lane.b32.xlu0 %v1759, 110
        %v2313 = vpop.permute.xlu0 %2312
        %2314 = vrot.lane.b32.xlu0 %v1760, 110
        %v2315 = vpop.permute.xlu0 %2314
        %2316 = vrot.lane.b32.xlu0 %v1770, 110
        %v2317 = vpop.permute.xlu0 %2316
        %v2318 = vsel %vm1657, %v2301, %v2303
        %v2319 = vsel %vm1657, %v2303, %v2305
        %v2320 = vsel %vm1657, %v2307, %v2309
        %v2321 = vsel %vm1657, %v2309, %v2311
        %v2322 = vsel %vm1657, %v2313, %v2315
        %v2323 = vsel %vm1657, %v2315, %v2317
        %v2330 = vsel %vm1583, %v2318, 0.0
        %v2331 = vsel %vm1584, %v2319, 0.0
        %v2332 = vsel %vm1583, %v2320, 0.0
        %v2333 = vsel %vm1584, %v2321, 0.0
        %v2334 = vsel %vm1583, %v2322, 0.0
        %v2335 = vsel %vm1584, %v2323, 0.0
        %s2336 = scalar_lea.vmem %s7, 40
        %v2337 = vld [vmem:[%s2336] sm:$0xff]
        %v2339 = vsel %vm1813, %v2337, 0
        %2341 = vmatprep.subr.mxu0 0.0
        %2342 = vmatpush1.msra.mxu0 0.0
        %2343 = vmatprep.subr.mxu0 0.0
        %2344 = vmatpush1.msra.mxu0 0.0
        %2345 = vmatprep.subr.mxu0 0.0
        %2346 = vmatpush1.msra.mxu0 0.0
        %2347 = vmatprep.subr.mxu0 0.0
        %2348 = vmatpush1.msra.mxu0 0.0
        %2349 = vmatprep.subr.mxu0 0.0
        %2350 = vmatpush1.msra.mxu0 0.0
        %2351 = vmatprep.subr.mxu0 0.0
        %2352 = vmatpush1.msra.mxu0 0.0
        %2353 = vmatprep.subr.mxu0 0.0
        %2354 = vmatpush1.msra.mxu0 0.0
        %2355 = vmatprep.subr.mxu0 0.0
        %2356 = vmatpush1.msra.mxu0 0.0
        %2357 = vmatprep.subr.mxu0 0.0
        %2358 = vmatpush1.msra.mxu0 0.0
        %2359 = vmatprep.subr.mxu0 0.0
        %2360 = vmatpush1.msra.mxu0 0.0
        %2361 = vmatprep.subr.mxu0 0.0
        %2362 = vmatpush1.msra.mxu0 0.0
        %2363 = vmatprep.subr.mxu0 0.0
        %2364 = vmatpush1.msra.mxu0 0.0
        %2365 = vmatprep.subr.mxu0 0.0
        %2366 = vmatpush1.msra.mxu0 0.0
        %2367 = vmatprep.subr.mxu0 %v2335
        %2368 = vmatpush1.msra.mxu0 %v2334
        %2369 = vmatprep.subr.mxu0 %v2333
        %2370 = vmatpush1.msra.mxu0 %v2332
        %2371 = vmatprep.subr.mxu0 %v2331
        %2372 = vmatpush1.msra.mxu0 %v2330
        %2373 = vmatprep.subr.mxu0 0.0
        %2374 = vmatpush2.msra.mxu0 0.0
        %2375 = vmatprep.subr.mxu0 0.0
        %2376 = vmatpush2.msra.mxu0 0.0
        %2377 = vmatprep.subr.mxu0 0.0
        %2378 = vmatpush2.msra.mxu0 0.0
        %2379 = vmatprep.subr.mxu0 0.0
        %2380 = vmatpush2.msra.mxu0 0.0
        %2381 = vmatprep.subr.mxu0 0.0
        %2382 = vmatpush2.msra.mxu0 0.0
        %2383 = vmatprep.subr.mxu0 0.0
        %2384 = vmatpush2.msra.mxu0 0.0
        %2385 = vmatprep.subr.mxu0 0.0
        %2386 = vmatpush2.msra.mxu0 0.0
        %2387 = vmatprep.subr.mxu0 0.0
        %2388 = vmatpush2.msra.mxu0 0.0
        %2389 = vmatprep.subr.mxu0 0.0
        %2390 = vmatpush2.msra.mxu0 0.0
        %2391 = vmatprep.subr.mxu0 0.0
        %2392 = vmatpush2.msra.mxu0 0.0
        %2393 = vmatprep.subr.mxu0 0.0
        %2394 = vmatpush2.msra.mxu0 0.0
        %2395 = vmatprep.subr.mxu0 0.0
        %2396 = vmatpush2.msra.mxu0 0.0
        %2397 = vmatprep.subr.mxu0 0.0
        %2398 = vmatpush2.msra.mxu0 0.0
        %2399 = vmatprep.subr.mxu0 0.0
        %2400 = vmatpush2.msra.mxu0 0.0
        %2401 = vmatprep.subr.mxu0 0.0
        %2402 = vmatpush2.msra.mxu0 0.0
        %2403 = vmatprep.subr.mxu0 0.0
        %2404 = vmatpush2.msra.mxu0 0.0
        %2405 = vmatprep.mubr.f32.mxu0 0.0
        %2406 = vmatmul.mubr.f32.gmra.mxu0 %v2339
        %v2407 = vpop.f32.mrf.mxu0
        %v2408 = vadd.f32 0.0, %v2407
        %v2409 = vpop.f32.mrf.mxu0
        %v2410 = vadd.f32 0.0, %v2409
        %2411 = vdwg.mxu0
        %v2412 = vadd.f32 %v2298, %v2408
        %v2413 = vadd.f32 %v2299, %v2410
        %2414 = vrot.lane.b32.xlu0 %v1755, 96
        %v2415 = vpop.permute.xlu0 %2414
        %2416 = vrot.lane.b32.xlu0 %v1756, 96
        %v2417 = vpop.permute.xlu0 %2416
        %2418 = vrot.lane.b32.xlu0 %v1768, 96
        %v2419 = vpop.permute.xlu0 %2418
        %2420 = vrot.lane.b32.xlu0 %v1757, 96
        %v2421 = vpop.permute.xlu0 %2420
        %2422 = vrot.lane.b32.xlu0 %v1758, 96
        %v2423 = vpop.permute.xlu0 %2422
        %2424 = vrot.lane.b32.xlu0 %v1769, 96
        %v2425 = vpop.permute.xlu0 %2424
        %2426 = vrot.lane.b32.xlu0 %v1759, 96
        %v2427 = vpop.permute.xlu0 %2426
        %2428 = vrot.lane.b32.xlu0 %v1760, 96
        %v2429 = vpop.permute.xlu0 %2428
        %2430 = vrot.lane.b32.xlu0 %v1770, 96
        %v2431 = vpop.permute.xlu0 %2430
        %v2432 = vsel %vm1553, %v2415, %v2417
        %v2433 = vsel %vm1553, %v2417, %v2419
        %v2434 = vsel %vm1553, %v2421, %v2423
        %v2435 = vsel %vm1553, %v2423, %v2425
        %v2436 = vsel %vm1553, %v2427, %v2429
        %v2437 = vsel %vm1553, %v2429, %v2431
        %v2444 = vsel %vm1564, %v2432, 0.0
        %v2445 = vsel %vm1565, %v2433, 0.0
        %v2446 = vsel %vm1564, %v2434, 0.0
        %v2447 = vsel %vm1565, %v2435, 0.0
        %v2448 = vsel %vm1564, %v2436, 0.0
        %v2449 = vsel %vm1565, %v2437, 0.0
        %s2450 = scalar_lea.vmem %s7, 48
        %v2451 = vld [vmem:[%s2450] sm:$0xff]
        %v2453 = vsel %vm1813, %v2451, 0
        %2455 = vmatprep.subr.mxu0 0.0
        %2456 = vmatpush1.msra.mxu0 0.0
        %2457 = vmatprep.subr.mxu0 0.0
        %2458 = vmatpush1.msra.mxu0 0.0
        %2459 = vmatprep.subr.mxu0 0.0
        %2460 = vmatpush1.msra.mxu0 0.0
        %2461 = vmatprep.subr.mxu0 0.0
        %2462 = vmatpush1.msra.mxu0 0.0
        %2463 = vmatprep.subr.mxu0 0.0
        %2464 = vmatpush1.msra.mxu0 0.0
        %2465 = vmatprep.subr.mxu0 0.0
        %2466 = vmatpush1.msra.mxu0 0.0
        %2467 = vmatprep.subr.mxu0 0.0
        %2468 = vmatpush1.msra.mxu0 0.0
        %2469 = vmatprep.subr.mxu0 0.0
        %2470 = vmatpush1.msra.mxu0 0.0
        %2471 = vmatprep.subr.mxu0 0.0
        %2472 = vmatpush1.msra.mxu0 0.0
        %2473 = vmatprep.subr.mxu0 0.0
        %2474 = vmatpush1.msra.mxu0 0.0
        %2475 = vmatprep.subr.mxu0 0.0
        %2476 = vmatpush1.msra.mxu0 0.0
        %2477 = vmatprep.subr.mxu0 0.0
        %2478 = vmatpush1.msra.mxu0 0.0
        %2479 = vmatprep.subr.mxu0 0.0
        %2480 = vmatpush1.msra.mxu0 0.0
        %2481 = vmatprep.subr.mxu0 %v2449
        %2482 = vmatpush1.msra.mxu0 %v2448
        %2483 = vmatprep.subr.mxu0 %v2447
        %2484 = vmatpush1.msra.mxu0 %v2446
        %2485 = vmatprep.subr.mxu0 %v2445
        %2486 = vmatpush1.msra.mxu0 %v2444
        %2487 = vmatprep.subr.mxu0 0.0
        %2488 = vmatpush2.msra.mxu0 0.0
        %2489 = vmatprep.subr.mxu0 0.0
        %2490 = vmatpush2.msra.mxu0 0.0
        %2491 = vmatprep.subr.mxu0 0.0
        %2492 = vmatpush2.msra.mxu0 0.0
        %2493 = vmatprep.subr.mxu0 0.0
        %2494 = vmatpush2.msra.mxu0 0.0
        %2495 = vmatprep.subr.mxu0 0.0
        %2496 = vmatpush2.msra.mxu0 0.0
        %2497 = vmatprep.subr.mxu0 0.0
        %2498 = vmatpush2.msra.mxu0 0.0
        %2499 = vmatprep.subr.mxu0 0.0
        %2500 = vmatpush2.msra.mxu0 0.0
        %2501 = vmatprep.subr.mxu0 0.0
        %2502 = vmatpush2.msra.mxu0 0.0
        %2503 = vmatprep.subr.mxu0 0.0
        %2504 = vmatpush2.msra.mxu0 0.0
        %2505 = vmatprep.subr.mxu0 0.0
        %2506 = vmatpush2.msra.mxu0 0.0
        %2507 = vmatprep.subr.mxu0 0.0
        %2508 = vmatpush2.msra.mxu0 0.0
        %2509 = vmatprep.subr.mxu0 0.0
        %2510 = vmatpush2.msra.mxu0 0.0
        %2511 = vmatprep.subr.mxu0 0.0
        %2512 = vmatpush2.msra.mxu0 0.0
        %2513 = vmatprep.subr.mxu0 0.0
        %2514 = vmatpush2.msra.mxu0 0.0
        %2515 = vmatprep.subr.mxu0 0.0
        %2516 = vmatpush2.msra.mxu0 0.0
        %2517 = vmatprep.subr.mxu0 0.0
        %2518 = vmatpush2.msra.mxu0 0.0
        %2519 = vmatprep.mubr.f32.mxu0 0.0
        %2520 = vmatmul.mubr.f32.gmra.mxu0 %v2453
        %v2521 = vpop.f32.mrf.mxu0
        %v2522 = vadd.f32 0.0, %v2521
        %v2523 = vpop.f32.mrf.mxu0
        %v2524 = vadd.f32 0.0, %v2523
        %2525 = vdwg.mxu0
        %v2526 = vadd.f32 %v2412, %v2522
        %v2527 = vadd.f32 %v2413, %v2524
        %s2528 = scalar_lea.vmem %s7, 56
        %v2529 = vld [vmem:[%s2528] sm:$0xff]
        %2530 = vrot.lane.b32.xlu0 %v1755, 95
        %v2531 = vpop.permute.xlu0 %2530
        %2532 = vrot.lane.b32.xlu0 %v1756, 95
        %v2533 = vpop.permute.xlu0 %2532
        %2534 = vrot.lane.b32.xlu0 %v1768, 95
        %v2535 = vpop.permute.xlu0 %2534
        %2536 = vrot.lane.b32.xlu0 %v1757, 95
        %v2537 = vpop.permute.xlu0 %2536
        %2538 = vrot.lane.b32.xlu0 %v1758, 95
        %v2539 = vpop.permute.xlu0 %2538
        %2540 = vrot.lane.b32.xlu0 %v1769, 95
        %v2541 = vpop.permute.xlu0 %2540
        %2542 = vrot.lane.b32.xlu0 %v1759, 95
        %v2543 = vpop.permute.xlu0 %2542
        %2544 = vrot.lane.b32.xlu0 %v1760, 95
        %v2545 = vpop.permute.xlu0 %2544
        %2546 = vrot.lane.b32.xlu0 %v1770, 95
        %v2547 = vpop.permute.xlu0 %2546
        %v2548 = vsel %vm1572, %v2531, %v2533
        %v2549 = vsel %vm1572, %v2533, %v2535
        %v2550 = vsel %vm1572, %v2537, %v2539
        %v2551 = vsel %vm1572, %v2539, %v2541
        %v2552 = vsel %vm1572, %v2543, %v2545
        %v2553 = vsel %vm1572, %v2545, %v2547
        %v2561 = vsel %vm1813, %v2529, 0
        %2563 = vmatprep.subr.mxu0 0.0
        %2564 = vmatpush1.msra.mxu0 0.0
        %2565 = vmatprep.subr.mxu0 0.0
        %2566 = vmatpush1.msra.mxu0 0.0
        %2567 = vmatprep.subr.mxu0 0.0
        %2568 = vmatpush1.msra.mxu0 0.0
        %2569 = vmatprep.subr.mxu0 0.0
        %2570 = vmatpush1.msra.mxu0 0.0
        %2571 = vmatprep.subr.mxu0 0.0
        %2572 = vmatpush1.msra.mxu0 0.0
        %2573 = vmatprep.subr.mxu0 0.0
        %2574 = vmatpush1.msra.mxu0 0.0
        %2575 = vmatprep.subr.mxu0 0.0
        %2576 = vmatpush1.msra.mxu0 0.0
        %2577 = vmatprep.subr.mxu0 0.0
        %2578 = vmatpush1.msra.mxu0 0.0
        %2579 = vmatprep.subr.mxu0 0.0
        %2580 = vmatpush1.msra.mxu0 0.0
        %2581 = vmatprep.subr.mxu0 0.0
        %2582 = vmatpush1.msra.mxu0 0.0
        %2583 = vmatprep.subr.mxu0 0.0
        %2584 = vmatpush1.msra.mxu0 0.0
        %2585 = vmatprep.subr.mxu0 0.0
        %2586 = vmatpush1.msra.mxu0 0.0
        %2587 = vmatprep.subr.mxu0 0.0
        %2588 = vmatpush1.msra.mxu0 0.0
        %2589 = vmatprep.subr.mxu0 %v2553
        %2590 = vmatpush1.msra.mxu0 %v2552
        %2591 = vmatprep.subr.mxu0 %v2551
        %2592 = vmatpush1.msra.mxu0 %v2550
        %2593 = vmatprep.subr.mxu0 %v2549
        %2594 = vmatpush1.msra.mxu0 %v2548
        %2595 = vmatprep.subr.mxu0 0.0
        %2596 = vmatpush2.msra.mxu0 0.0
        %2597 = vmatprep.subr.mxu0 0.0
        %2598 = vmatpush2.msra.mxu0 0.0
        %2599 = vmatprep.subr.mxu0 0.0
        %2600 = vmatpush2.msra.mxu0 0.0
        %2601 = vmatprep.subr.mxu0 0.0
        %2602 = vmatpush2.msra.mxu0 0.0
        %2603 = vmatprep.subr.mxu0 0.0
        %2604 = vmatpush2.msra.mxu0 0.0
        %2605 = vmatprep.subr.mxu0 0.0
        %2606 = vmatpush2.msra.mxu0 0.0
        %2607 = vmatprep.subr.mxu0 0.0
        %2608 = vmatpush2.msra.mxu0 0.0
        %2609 = vmatprep.subr.mxu0 0.0
        %2610 = vmatpush2.msra.mxu0 0.0
        %2611 = vmatprep.subr.mxu0 0.0
        %2612 = vmatpush2.msra.mxu0 0.0
        %2613 = vmatprep.subr.mxu0 0.0
        %2614 = vmatpush2.msra.mxu0 0.0
        %2615 = vmatprep.subr.mxu0 0.0
        %2616 = vmatpush2.msra.mxu0 0.0
        %2617 = vmatprep.subr.mxu0 0.0
        %2618 = vmatpush2.msra.mxu0 0.0
        %2619 = vmatprep.subr.mxu0 0.0
        %2620 = vmatpush2.msra.mxu0 0.0
        %2621 = vmatprep.subr.mxu0 0.0
        %2622 = vmatpush2.msra.mxu0 0.0
        %2623 = vmatprep.subr.mxu0 0.0
        %2624 = vmatpush2.msra.mxu0 0.0
        %2625 = vmatprep.subr.mxu0 0.0
        %2626 = vmatpush2.msra.mxu0 0.0
        %2627 = vmatprep.mubr.f32.mxu0 0.0
        %2628 = vmatmul.mubr.f32.gmra.mxu0 %v2561
        %v2629 = vpop.f32.mrf.mxu0
        %v2630 = vadd.f32 0.0, %v2629
        %v2631 = vpop.f32.mrf.mxu0
        %v2632 = vadd.f32 0.0, %v2631
        %2633 = vdwg.mxu0
        %v2634 = vadd.f32 %v2526, %v2630
        %v2635 = vadd.f32 %v2527, %v2632
        %2636 = vrot.lane.b32.xlu0 %v1755, 94
        %v2637 = vpop.permute.xlu0 %2636
        %2638 = vrot.lane.b32.xlu0 %v1756, 94
        %v2639 = vpop.permute.xlu0 %2638
        %2640 = vrot.lane.b32.xlu0 %v1768, 94
        %v2641 = vpop.permute.xlu0 %2640
        %2642 = vrot.lane.b32.xlu0 %v1757, 94
        %v2643 = vpop.permute.xlu0 %2642
        %2644 = vrot.lane.b32.xlu0 %v1758, 94
        %v2645 = vpop.permute.xlu0 %2644
        %2646 = vrot.lane.b32.xlu0 %v1769, 94
        %v2647 = vpop.permute.xlu0 %2646
        %2648 = vrot.lane.b32.xlu0 %v1759, 94
        %v2649 = vpop.permute.xlu0 %2648
        %2650 = vrot.lane.b32.xlu0 %v1760, 94
        %v2651 = vpop.permute.xlu0 %2650
        %2652 = vrot.lane.b32.xlu0 %v1770, 94
        %v2653 = vpop.permute.xlu0 %2652
        %vm2654 = vcmask 769024
        %v2655 = vsel %vm2654, %v2637, %v2639
        %v2656 = vsel %vm2654, %v2639, %v2641
        %v2657 = vsel %vm2654, %v2643, %v2645
        %v2658 = vsel %vm2654, %v2645, %v2647
        %v2659 = vsel %vm2654, %v2649, %v2651
        %v2660 = vsel %vm2654, %v2651, %v2653
        %v2667 = vsel %vm1583, %v2655, 0.0
        %v2668 = vsel %vm1584, %v2656, 0.0
        %v2669 = vsel %vm1583, %v2657, 0.0
        %v2670 = vsel %vm1584, %v2658, 0.0
        %v2671 = vsel %vm1583, %v2659, 0.0
        %v2672 = vsel %vm1584, %v2660, 0.0
        %s2673 = scalar_lea.vmem %s7, 64
        %v2674 = vld [vmem:[%s2673] sm:$0xff]
        %v2676 = vsel %vm1813, %v2674, 0
        %2678 = vmatprep.subr.mxu0 0.0
        %2679 = vmatpush1.msra.mxu0 0.0
        %2680 = vmatprep.subr.mxu0 0.0
        %2681 = vmatpush1.msra.mxu0 0.0
        %2682 = vmatprep.subr.mxu0 0.0
        %2683 = vmatpush1.msra.mxu0 0.0
        %2684 = vmatprep.subr.mxu0 0.0
        %2685 = vmatpush1.msra.mxu0 0.0
        %2686 = vmatprep.subr.mxu0 0.0
        %2687 = vmatpush1.msra.mxu0 0.0
        %2688 = vmatprep.subr.mxu0 0.0
        %2689 = vmatpush1.msra.mxu0 0.0
        %2690 = vmatprep.subr.mxu0 0.0
        %2691 = vmatpush1.msra.mxu0 0.0
        %2692 = vmatprep.subr.mxu0 0.0
        %2693 = vmatpush1.msra.mxu0 0.0
        %2694 = vmatprep.subr.mxu0 0.0
        %2695 = vmatpush1.msra.mxu0 0.0
        %2696 = vmatprep.subr.mxu0 0.0
        %2697 = vmatpush1.msra.mxu0 0.0
        %2698 = vmatprep.subr.mxu0 0.0
        %2699 = vmatpush1.msra.mxu0 0.0
        %2700 = vmatprep.subr.mxu0 0.0
        %2701 = vmatpush1.msra.mxu0 0.0
        %2702 = vmatprep.subr.mxu0 0.0
        %2703 = vmatpush1.msra.mxu0 0.0
        %2704 = vmatprep.subr.mxu0 %v2672
        %2705 = vmatpush1.msra.mxu0 %v2671
        %2706 = vmatprep.subr.mxu0 %v2670
        %2707 = vmatpush1.msra.mxu0 %v2669
        %2708 = vmatprep.subr.mxu0 %v2668
        %2709 = vmatpush1.msra.mxu0 %v2667
        %2710 = vmatprep.subr.mxu0 0.0
        %2711 = vmatpush2.msra.mxu0 0.0
        %2712 = vmatprep.subr.mxu0 0.0
        %2713 = vmatpush2.msra.mxu0 0.0
        %2714 = vmatprep.subr.mxu0 0.0
        %2715 = vmatpush2.msra.mxu0 0.0
        %2716 = vmatprep.subr.mxu0 0.0
        %2717 = vmatpush2.msra.mxu0 0.0
        %2718 = vmatprep.subr.mxu0 0.0
        %2719 = vmatpush2.msra.mxu0 0.0
        %2720 = vmatprep.subr.mxu0 0.0
        %2721 = vmatpush2.msra.mxu0 0.0
        %2722 = vmatprep.subr.mxu0 0.0
        %2723 = vmatpush2.msra.mxu0 0.0
        %2724 = vmatprep.subr.mxu0 0.0
        %2725 = vmatpush2.msra.mxu0 0.0
        %2726 = vmatprep.subr.mxu0 0.0
        %2727 = vmatpush2.msra.mxu0 0.0
        %2728 = vmatprep.subr.mxu0 0.0
        %2729 = vmatpush2.msra.mxu0 0.0
        %2730 = vmatprep.subr.mxu0 0.0
        %2731 = vmatpush2.msra.mxu0 0.0
        %2732 = vmatprep.subr.mxu0 0.0
        %2733 = vmatpush2.msra.mxu0 0.0
        %2734 = vmatprep.subr.mxu0 0.0
        %2735 = vmatpush2.msra.mxu0 0.0
        %2736 = vmatprep.subr.mxu0 0.0
        %2737 = vmatpush2.msra.mxu0 0.0
        %2738 = vmatprep.subr.mxu0 0.0
        %2739 = vmatpush2.msra.mxu0 0.0
        %2740 = vmatprep.subr.mxu0 0.0
        %2741 = vmatpush2.msra.mxu0 0.0
        %2742 = vmatprep.mubr.f32.mxu0 0.0
        %2743 = vmatmul.mubr.f32.gmra.mxu0 %v2676
        %v2744 = vpop.f32.mrf.mxu0
        %v2745 = vadd.f32 0.0, %v2744
        %v2746 = vpop.f32.mrf.mxu0
        %v2747 = vadd.f32 0.0, %v2746
        %2748 = vdwg.mxu0
        %v2749 = vadd.f32 %v2634, %v2745
        %v2750 = vadd.f32 %v2635, %v2747
        %v2751 = vld [vmem:[%s8] sm:$0xff]
        %2753 = vset.pattern.permute.xlu0 0
        %2754 = vperm.xlu0 %2753, %v2751
        %v2755 = vpop.permute.xlu0 %2754
        %v2757 = vadd.f32 %v2749, %v2755
        %v2758 = vadd.f32 %v2750, %v2755
        %vm2759 = vcmp.ge.f32.partialorder %v2757, 0.0
        %vm2760 = vcmp.ge.f32.partialorder %v2758, 0.0
        %v2761 = vmul.f32 %v2757, 0.01
        %v2762 = vmul.f32 %v2758, 0.01
        %v2763 = vsel %vm2759, %v2757, %v2761
        %v2764 = vsel %vm2760, %v2758, %v2762
        %2765 = vst [vmem:[%s385] sm:$0xff] %v2763
        %2766 = vst [vmem:[%s385 + $0x8] sm:$0xff] %v2764
        %s2767 = sand.u32 %s236, 1
        %s2768 = scalar_lea.sflag [#allocation7], %s2767
        %s2769 = sand.u32 %s236, 1
        %s2770 = smul.addr %s2769, 16
        %s2771 = scalar_lea.vmem [#allocation10], %s2770
        // Predicated region
        $region65: #{tpu_custom_call.1} parent=55 // pred_check
          %p2772 = pneg %p246
        $region66: #{tpu_custom_call.1} parent=55 // pred_check_branch
          %2774 = sbr.rel (%p2772) target = $region68
        $region67: #{tpu_custom_call.1} parent=55 // pred_region
          %s2776 = ssub.s32 256, 256
          %2777 = vsyncadd %s2768, %s2776
          %s2778 = smul.addr %s29, 2
          %s2779 = smul.addr %s2778, 128
          %s2780 = scalar_lea.hbm %s9, %s2779
          %s2782 = sshll.u32 %s2771, 4
          %s2783 = int_to_ptr.vmem [resolvable:$true] %s2782
          %2785 = dma.vmem_to_hbm [thread:$0]  %s2783, 256, %s2780, %s2768
        $region68: #{tpu_custom_call.1} parent=55 // pred_fallthru
          _
      $region56: #{tpu_custom_call.1} parent=5 // pred_fallthru
        _
      %p2786 = scmp.le.s32.totalorder 2, %s24
      // Predicated region
      $region69: #{tpu_custom_call.1} parent=5 // pred_check
        %p2787 = pneg %p2786
      $region70: #{tpu_custom_call.1} parent=5 // pred_check_branch
        %2789 = sbr.rel (%p2787) target = $region72
      $region71: #{tpu_custom_call.1} parent=5 // pred_region
        %s2790 = ssub.s32 %s24, 2
        // Predicated region
        $region73: #{tpu_custom_call.1} parent=71 // pred_check
          %p2791 = pneg %p252
        $region74: #{tpu_custom_call.1} parent=71 // pred_check_branch
          %2793 = sbr.rel (%p2791) target = $region76
        $region75: #{tpu_custom_call.1} parent=71 // pred_region
          %s2794 = sand.u32 %s237, 1
          %s2795 = scalar_lea.sflag [#allocation7], %s2794
          %s2796 = sand.u32 %s237, 1
          %s2797 = smul.addr %s2796, 16
          %s2798 = scalar_lea.vmem [#allocation10], %s2797
          %2799 = dma.done %s2795, 256
        $region76: #{tpu_custom_call.1} parent=71 // pred_fallthru
          _
      $region72: #{tpu_custom_call.1} parent=5 // pred_fallthru
        _
    $region6: #{tpu_custom_call.1} parent=1 // loop_footer
      %s28 = sadd.s32 1, %s24
    $region7: #{tpu_custom_call.1} parent=1 // loop_footer_branch
      %23 = sbr.rel target = $region3
    $region8: #{tpu_custom_call.1} parent=1 // loop_exit
      _
    %2800 = vsyncpa [#allocation6], 1
    %s2801 = scalar_lea.sflag [#allocation6], 1
    %2802 = vsyncpa %s2801, 1
    %2803 = vsyncpa [#allocation9], 1
    %s2804 = scalar_lea.sflag [#allocation9], 1
    %2805 = vsyncpa %s2804, 1
    %2806 = vsyncpa [#allocation7], 1
    %s2807 = scalar_lea.sflag [#allocation7], 1
    %2808 = vsyncpa %s2807, 1

</llo_original>
